<compile_context>
chip_gen: v6e
topology: v6e:2x2x1
jax: 0.10.0
libtpu: 0.0.40
codegen_flags: <defaults>
</compile_context>

<pallas_src>
import functools

import jax
import jax.numpy as jnp
from jax.experimental import pallas as pl
from jax.experimental.pallas import tpu as pltpu

EPS = 1e-5
LANE = 128   # channel padding target (lane width; matches v5e 4x128 MXU tiles)


def _round_up(x, m):
    return (x + m - 1) // m * m


# ---------------------------------------------------------------------------
# Kernels
# ---------------------------------------------------------------------------
def matmul_stats_kernel(p_ref, w_ref, y_ref, sum_ref, sumsq_ref):
    """y = p @ w (bf16 MXU inputs, f32 accumulate) + per-channel sum/sumsq.

    sum/sumsq output blocks are revisited on every grid step (accumulator
    pattern), so the M grid axis is 'arbitrary'.
    """
    @pl.when(pl.program_id(0) == 0)
    def _init():
        sum_ref[...] = jnp.zeros_like(sum_ref)
        sumsq_ref[...] = jnp.zeros_like(sumsq_ref)

    y = jnp.dot(p_ref[...], w_ref[...], preferred_element_type=jnp.float32)
    y_ref[...] = y.astype(y_ref.dtype)
    sum_ref[...] += jnp.sum(y, axis=0, keepdims=True)
    sumsq_ref[...] += jnp.sum(y * y, axis=0, keepdims=True)


def bn_relu_kernel(y_ref, scale_ref, shift_ref, h_ref):
    """h = relu(y * scale + shift); scale/shift precomputed per channel."""
    y = y_ref[...].astype(jnp.float32)
    h = jnp.maximum(y * scale_ref[...] + shift_ref[...], 0.0)
    h_ref[...] = h.astype(h_ref.dtype)


def bn_relu_skip_kernel(y_ref, x_ref, wskip_ref, scale_ref, shift_ref, out_ref):
    """out = relu(relu(y*scale+shift) + x @ wskip)."""
    y = y_ref[...].astype(jnp.float32)
    h = jnp.maximum(y * scale_ref[...] + shift_ref[...], 0.0)
    skip = jnp.dot(x_ref[...], wskip_ref[...], preferred_element_type=jnp.float32)
    out_ref[...] = jnp.maximum(h + skip, 0.0).astype(out_ref.dtype)


# ---------------------------------------------------------------------------
# pallas_call wrappers
# ---------------------------------------------------------------------------
def conv_matmul_stats(patches, w, *, tm):
    """patches (Mp, K) bf16, w (K, Cp) bf16 -> y (Mp, Cp) bf16, sum/sumsq (1, Cp) f32."""
    Mp, K = patches.shape
    Cp = w.shape[1]
    grid = (Mp // tm,)
    flops = 2 * Mp * K * Cp + 3 * Mp * Cp
    bytes_accessed = (Mp * K * 2) + (K * Cp * 2) + (Mp * Cp * 2) + 2 * (Cp * 4)
    return pl.pallas_call(
        matmul_stats_kernel,
        out_shape=(jax.ShapeDtypeStruct((Mp, Cp), jnp.bfloat16),
                   jax.ShapeDtypeStruct((1, Cp), jnp.float32),
                   jax.ShapeDtypeStruct((1, Cp), jnp.float32)),
        grid=grid,
        in_specs=[pl.BlockSpec((tm, K), lambda i: (i, 0)),
                  pl.BlockSpec((K, Cp), lambda i: (0, 0))],      # weight resident
        out_specs=(pl.BlockSpec((tm, Cp), lambda i: (i, 0)),
                   pl.BlockSpec((1, Cp), lambda i: (0, 0)),      # revisited (accum)
                   pl.BlockSpec((1, Cp), lambda i: (0, 0))),
        compiler_params=pltpu.CompilerParams(
            dimension_semantics=("arbitrary",)),
        cost_estimate=pl.CostEstimate(flops=flops, transcendentals=0,
                                      bytes_accessed=bytes_accessed),
    )(patches, w)


def bn_relu_apply(y, scale, shift, *, tm, out_dtype):
    Mp, Cp = y.shape
    flops = 3 * Mp * Cp
    bytes_accessed = Mp * Cp * (2 + jnp.dtype(out_dtype).itemsize) + 2 * Cp * 4
    return pl.pallas_call(
        bn_relu_kernel,
        out_shape=jax.ShapeDtypeStruct((Mp, Cp), out_dtype),
        grid=(Mp // tm,),
        in_specs=[pl.BlockSpec((tm, Cp), lambda i: (i, 0)),
                  pl.BlockSpec((1, Cp), lambda i: (0, 0)),
                  pl.BlockSpec((1, Cp), lambda i: (0, 0))],
        out_specs=pl.BlockSpec((tm, Cp), lambda i: (i, 0)),
        compiler_params=pltpu.CompilerParams(
            dimension_semantics=("parallel",)),
        cost_estimate=pl.CostEstimate(flops=flops, transcendentals=0,
                                      bytes_accessed=bytes_accessed),
    )(y, scale, shift)


def bn_relu_skip_apply(y, x_flat, wskip, scale, shift, *, tm):
    Mp, Cp = y.shape
    Cin = x_flat.shape[1]
    flops = 2 * Mp * Cin * Cp + 5 * Mp * Cp
    bytes_accessed = (Mp * Cp * 2) + (Mp * Cin * 2) + (Cin * Cp * 2) \
        + 2 * Cp * 4 + Mp * Cp * 4
    return pl.pallas_call(
        bn_relu_skip_kernel,
        out_shape=jax.ShapeDtypeStruct((Mp, Cp), jnp.float32),
        grid=(Mp // tm,),
        in_specs=[pl.BlockSpec((tm, Cp), lambda i: (i, 0)),
                  pl.BlockSpec((tm, Cin), lambda i: (i, 0)),
                  pl.BlockSpec((Cin, Cp), lambda i: (0, 0)),
                  pl.BlockSpec((1, Cp), lambda i: (0, 0)),
                  pl.BlockSpec((1, Cp), lambda i: (0, 0))],
        out_specs=pl.BlockSpec((tm, Cp), lambda i: (i, 0)),
        compiler_params=pltpu.CompilerParams(
            dimension_semantics=("parallel",)),
        cost_estimate=pl.CostEstimate(flops=flops, transcendentals=0,
                                      bytes_accessed=bytes_accessed),
    )(y, x_flat, wskip, scale, shift)


# ---------------------------------------------------------------------------
# JAX glue: layout conversion, im2col, weight packing, scale/shift
# ---------------------------------------------------------------------------
def im2col_3x3(x_nhwc):
    """3x3, stride 1, pad 1 patches; K axis ordering is (dh, dw, c)."""
    N, H, W, C = x_nhwc.shape
    xp = jnp.pad(x_nhwc, ((0, 0), (1, 1), (1, 1), (0, 0)))
    cols = [xp[:, dh:dh + H, dw:dw + W, :] for dh in range(3) for dw in range(3)]
    return jnp.concatenate(cols, axis=-1).reshape(N * H * W, 9 * C)


def pack_conv3x3_weight(w_oihw, cin_pad, cout_pad):
    """(Cout, Cin, 3, 3) -> (9*cin_pad, cout_pad), ordering (dh, dw, c), zero pad."""
    cout, cin, kh, kw = w_oihw.shape
    w = jnp.pad(w_oihw, ((0, cout_pad - cout), (0, cin_pad - cin), (0, 0), (0, 0)))
    return jnp.transpose(w, (2, 3, 1, 0)).reshape(kh * kw * cin_pad, cout_pad)


def bn_scale_shift(s, ss, count, gamma_p, beta_p):
    """Per-channel scale/shift from accumulated sum / sum-of-squares (O(C) work)."""
    mean = s / count
    var = jnp.maximum(ss / count - mean * mean, 0.0)   # biased var (training BN)
    scale = gamma_p * jax.lax.rsqrt(var + EPS)
    shift = beta_p - mean * scale
    return scale, shift


def basic_block_forward(x_nchw, params, *, tm=512):
    """Mirrors BasicBlock.forward (stride=1, padding=1, is_batch_norm=True)."""
    assert tm % 8 == 0
    N, Cin, H, W = x_nchw.shape
    Cout = params["w1"].shape[0]
    Cp = _round_up(Cout, LANE)
    M = N * H * W
    Mp = _round_up(M, tm)

    x_nhwc = jnp.transpose(x_nchw, (0, 2, 3, 1)).astype(jnp.bfloat16)
    x_flat = jnp.pad(x_nhwc.reshape(M, Cin), ((0, Mp - M), (0, 0)))

    gamma_p = jnp.pad(params["gamma"].astype(jnp.float32), (0, Cp - Cout)).reshape(1, Cp)
    beta_p = jnp.pad(params["beta"].astype(jnp.float32), (0, Cp - Cout)).reshape(1, Cp)

    w1m = pack_conv3x3_weight(params["w1"], Cin, Cp).astype(jnp.bfloat16)   # (9*Cin, Cp)
    w2m = pack_conv3x3_weight(params["w2"], Cp, Cp).astype(jnp.bfloat16)    # (9*Cp, Cp)
    wskipm = jnp.pad(params["wskip"][:, :, 0, 0].T,
                     ((0, 0), (0, Cp - Cout))).astype(jnp.bfloat16)         # (Cin, Cp)

    # ---- stage 1: conv1 (3x3) matmul + global BN statistics (two-phase BN) ----
    p1 = jnp.pad(im2col_3x3(x_nhwc), ((0, Mp - M), (0, 0)))      # (Mp, 9*Cin) bf16
    y1, s1, ss1 = conv_matmul_stats(p1, w1m, tm=tm)              # y1 (Mp, Cp) bf16
    scale1, shift1 = bn_scale_shift(s1, ss1, M, gamma_p, beta_p)

    # ---- stage 2: BN1 + ReLU apply (tile-parallel) ----
    h1 = bn_relu_apply(y1, scale1, shift1, tm=tm, out_dtype=jnp.bfloat16)

    # ---- stage 3: conv2 (3x3) matmul + global BN statistics ----
    # TODO(synk): replace this JAX im2col with 9 shifted on-chip matmuls over a
    # halo-padded tile to avoid the 9x HBM expansion of h1.
    h1_nhwc = h1[:M].reshape(N, H, W, Cp)
    p2 = jnp.pad(im2col_3x3(h1_nhwc), ((0, Mp - M), (0, 0)))     # (Mp, 9*Cp) bf16
    y2, s2, ss2 = conv_matmul_stats(p2, w2m, tm=tm)
    scale2, shift2 = bn_scale_shift(s2, ss2, M, gamma_p, beta_p)

    # ---- stage 4: BN2 + ReLU + skip (1x1 conv) + ReLU (tile-parallel) ----
    out_flat = bn_relu_skip_apply(y2, x_flat, wskipm, scale2, shift2, tm=tm)

    out = out_flat[:M, :Cout].reshape(N, H, W, Cout)
    return jnp.transpose(out, (0, 3, 1, 2)).astype(x_nchw.dtype)


# ---------------------------------------------------------------------------
# Pure-JAX f32 reference (nn.BatchNorm2d training-mode semantics)
# ---------------------------------------------------------------------------
def _ref_bn(y_nchw, gamma, beta):
    mean = jnp.mean(y_nchw, axis=(0, 2, 3), keepdims=True)
    var = jnp.mean((y_nchw - mean) ** 2, axis=(0, 2, 3), keepdims=True)
    g = gamma.reshape(1, -1, 1, 1)
    b = beta.reshape(1, -1, 1, 1)
    return (y_nchw - mean) * jax.lax.rsqrt(var + EPS) * g + b


def _ref_conv(x, w, pad):
    return jax.lax.conv_general_dilated(
        x, w, window_strides=(1, 1), padding=[(pad, pad), (pad, pad)],
        dimension_numbers=("NCHW", "OIHW", "NCHW"))


def basic_block_reference(x, params):
    out = _ref_conv(x, params["w1"], 1)
    out = jnp.maximum(_ref_bn(out, params["gamma"], params["beta"]), 0.0)
    out = _ref_conv(out, params["w2"], 1)
    out = jnp.maximum(_ref_bn(out, params["gamma"], params["beta"]), 0.0)
    out = out + _ref_conv(x, params["wskip"], 0)
    return jnp.maximum(out, 0.0)


# ---------------------------------------------------------------------------
if __name__ == "__main__":
    key = jax.random.PRNGKey(0)
    N, Cin, H, W = 2, 4, 16, 16
    Cout = 4

    k_x, k_x2, k_w1, k_w2, k_ws, k_g, k_b = jax.random.split(key, 7)
    params = {
        "w1": 0.1 * jax.random.normal(k_w1, (Cout, Cin, 3, 3), jnp.float32),
        "w2": 0.1 * jax.random.normal(k_w2, (Cout, Cout, 3, 3), jnp.float32),
        "wskip": 0.1 * jax.random.normal(k_ws, (Cout, Cin, 1, 1), jnp.float32),
        "gamma": 1.0 + 0.1 * jax.random.normal(k_g, (Cout,), jnp.float32),
        "beta": 0.1 * jax.random.normal(k_b, (Cout,), jnp.float32),
    }

    # Tolerances account for bf16 MXU inputs vs an all-f32 reference.
    MAX_TOL, MEAN_TOL = 1e-1, 2e-2

    # Case 1: M = 2*16*16 = 512 rows, tm=256 -> 2 tiles per kernel:
    # exercises the cross-tile BatchNorm statistics accumulation.
    x = jax.random.normal(k_x, (N, Cin, H, W), jnp.float32)
    fwd_two_tiles = jax.jit(functools.partial(basic_block_forward, tm=256))
    out = jax.block_until_ready(fwd_two_tiles(x, params))
    ref = jax.block_until_ready(basic_block_reference(x, params))
    assert out.shape == (N, Cout, H, W)
    err = jnp.abs(out - ref)
    assert float(jnp.max(err)) < MAX_TOL and float(jnp.mean(err)) < MEAN_TOL, (
        float(jnp.max(err)), float(jnp.mean(err)))

    # Case 2: M = 2*12*12 = 288 rows, default tm=512 -> rows zero-padded to 512:
    # exercises padded-row masking of the BN statistics.
    x2 = jax.random.normal(k_x2, (N, Cin, 12, 12), jnp.float32)
    fwd_default = jax.jit(basic_block_forward)
    out2 = jax.block_until_ready(fwd_default(x2, params))
    ref2 = jax.block_until_ready(basic_block_reference(x2, params))
    assert out2.shape == (N, Cout, 12, 12)
    err2 = jnp.abs(out2 - ref2)
    assert float(jnp.max(err2)) < MAX_TOL and float(jnp.mean(err2)) < MEAN_TOL, (
        float(jnp.max(err2)), float(jnp.mean(err2)))

    print("KERNEL_OK")
</pallas_src>

<mosaic_0001>
module attributes {stable_mosaic.version = 11 : i64} {
  func.func @matmul_stats_kernel(%arg0: i32, %arg1: memref<256x36xbf16, #tpu.memory_space<vmem>>, %arg2: memref<36x128xbf16, #tpu.memory_space<vmem>>, %arg3: memref<256x128xbf16, #tpu.memory_space<vmem>>, %arg4: memref<1x128xf32, #tpu.memory_space<vmem>>, %arg5: memref<1x128xf32, #tpu.memory_space<vmem>>) attributes {dimension_semantics = [#tpu.dimension_semantics<arbitrary>], iteration_bounds = array<i64: 2>, scalar_prefetch = 0 : i64, scratch_operands = 0 : i64, tpu.core_type = #tpu.core_type<tc>, window_params = [{transform_indices = @transform_0, window_bounds = array<i64: 256, 36>}, {pipeline_mode = #tpu.pipeline_mode<synchronous>, transform_indices = @transform_1, window_bounds = array<i64: 36, 128>}, {transform_indices = @transform_2, window_bounds = array<i64: 256, 128>}, {pipeline_mode = #tpu.pipeline_mode<synchronous>, transform_indices = @transform_3, window_bounds = array<i64: 1, 128>}, {pipeline_mode = #tpu.pipeline_mode<synchronous>, transform_indices = @transform_4, window_bounds = array<i64: 1, 128>}]} {
    %c0_i32 = arith.constant 0 : i32
    %0 = arith.cmpi eq, %arg0, %c0_i32 : i32
    %1 = arith.extui %0 : i1 to i32
    %c0_i32_0 = arith.constant 0 : i32
    %2 = arith.cmpi ne, %1, %c0_i32_0 : i32
    scf.if %2 {
      %cst_16 = arith.constant 0.000000e+00 : f32
      %19 = vector.broadcast %cst_16 : f32 to vector<1x128xf32>
      %c0_17 = arith.constant 0 : index
      %c0_18 = arith.constant 0 : index
      %20 = vector.load %arg4[%c0_17, %c0_18] : memref<1x128xf32, #tpu.memory_space<vmem>>, vector<1x128xf32>
      tpu.vector_store %arg4[%c0_17, %c0_18], %19 {strides = array<i32>} : memref<1x128xf32, #tpu.memory_space<vmem>>, vector<1x128xf32>,
      %cst_19 = arith.constant 0.000000e+00 : f32
      %21 = vector.broadcast %cst_19 : f32 to vector<1x128xf32>
      %c0_20 = arith.constant 0 : index
      %c0_21 = arith.constant 0 : index
      %22 = vector.load %arg5[%c0_20, %c0_21] : memref<1x128xf32, #tpu.memory_space<vmem>>, vector<1x128xf32>
      tpu.vector_store %arg5[%c0_20, %c0_21], %21 {strides = array<i32>} : memref<1x128xf32, #tpu.memory_space<vmem>>, vector<1x128xf32>,
    } else {
    }
    %c0 = arith.constant 0 : index
    %c0_1 = arith.constant 0 : index
    %3 = vector.load %arg1[%c0, %c0_1] : memref<256x36xbf16, #tpu.memory_space<vmem>>, vector<256x36xbf16>
    %c0_2 = arith.constant 0 : index
    %c0_3 = arith.constant 0 : index
    %4 = vector.load %arg2[%c0_2, %c0_3] : memref<36x128xbf16, #tpu.memory_space<vmem>>, vector<36x128xbf16>
    %cst = arith.constant dense<0.000000e+00> : vector<256x128xf32>
    %5 = tpu.matmul %3, %4, %cst {dimension_numbers = #tpu.dot_dimension_numbers<[1], [0], [0], [1], [0, 0, 1, 1], [], []>} : vector<256x36xbf16>, vector<36x128xbf16>, vector<256x128xf32> -> vector<256x128xf32>
    %6 = arith.truncf %5 : vector<256x128xf32> to vector<256x128xbf16>
    %c0_4 = arith.constant 0 : index
    %c0_5 = arith.constant 0 : index
    %7 = vector.load %arg3[%c0_4, %c0_5] : memref<256x128xbf16, #tpu.memory_space<vmem>>, vector<256x128xbf16>
    tpu.vector_store %arg3[%c0_4, %c0_5], %6 {strides = array<i32>} : memref<256x128xbf16, #tpu.memory_space<vmem>>, vector<256x128xbf16>,
    %c0_6 = arith.constant 0 : index
    %c0_7 = arith.constant 0 : index
    %8 = vector.load %arg4[%c0_6, %c0_7] : memref<1x128xf32, #tpu.memory_space<vmem>>, vector<1x128xf32>
    %cst_8 = arith.constant dense<0.000000e+00> : vector<128xf32>
    %9 = vector.multi_reduction <add>, %5, %cst_8 [0] : vector<256x128xf32> to vector<128xf32>
    %10 = vector.shape_cast %9 : vector<128xf32> to vector<1x128xf32>
    %11 = arith.addf %8, %10 : vector<1x128xf32>
    %c0_9 = arith.constant 0 : index
    %c0_10 = arith.constant 0 : index
    %12 = vector.load %arg4[%c0_9, %c0_10] : memref<1x128xf32, #tpu.memory_space<vmem>>, vector<1x128xf32>
    tpu.vector_store %arg4[%c0_9, %c0_10], %11 {strides = array<i32>} : memref<1x128xf32, #tpu.memory_space<vmem>>, vector<1x128xf32>,
    %c0_11 = arith.constant 0 : index
    %c0_12 = arith.constant 0 : index
    %13 = vector.load %arg5[%c0_11, %c0_12] : memref<1x128xf32, #tpu.memory_space<vmem>>, vector<1x128xf32>
    %14 = arith.mulf %5, %5 : vector<256x128xf32>
    %cst_13 = arith.constant dense<0.000000e+00> : vector<128xf32>
    %15 = vector.multi_reduction <add>, %14, %cst_13 [0] : vector<256x128xf32> to vector<128xf32>
    %16 = vector.shape_cast %15 : vector<128xf32> to vector<1x128xf32>
    %17 = arith.addf %13, %16 : vector<1x128xf32>
    %c0_14 = arith.constant 0 : index
    %c0_15 = arith.constant 0 : index
    %18 = vector.load %arg5[%c0_14, %c0_15] : memref<1x128xf32, #tpu.memory_space<vmem>>, vector<1x128xf32>
    tpu.vector_store %arg5[%c0_14, %c0_15], %17 {strides = array<i32>} : memref<1x128xf32, #tpu.memory_space<vmem>>, vector<1x128xf32>,
    return
  }
  func.func @transform_0(%arg0: i32) -> (i32, i32) {
    %c0_i32 = arith.constant 0 : i32
    %c0_i32_0 = arith.constant 0 : i32
    return %arg0, %c0_i32 : i32, i32
  }
  func.func @transform_1(%arg0: i32) -> (i32, i32) {
    %c0_i32 = arith.constant 0 : i32
    %c0_i32_0 = arith.constant 0 : i32
    %c0_i32_1 = arith.constant 0 : i32
    return %c0_i32, %c0_i32_0 : i32, i32
  }
  func.func @transform_2(%arg0: i32) -> (i32, i32) {
    %c0_i32 = arith.constant 0 : i32
    %c0_i32_0 = arith.constant 0 : i32
    return %arg0, %c0_i32 : i32, i32
  }
  func.func @transform_3(%arg0: i32) -> (i32, i32) {
    %c0_i32 = arith.constant 0 : i32
    %c0_i32_0 = arith.constant 0 : i32
    %c0_i32_1 = arith.constant 0 : i32
    return %c0_i32, %c0_i32_0 : i32, i32
  }
  func.func @transform_4(%arg0: i32) -> (i32, i32) {
    %c0_i32 = arith.constant 0 : i32
    %c0_i32_0 = arith.constant 0 : i32
    %c0_i32_1 = arith.constant 0 : i32
    return %c0_i32, %c0_i32_0 : i32, i32
  }
}

module attributes {stable_mosaic.version = 11 : i64} {
  func.func @bn_relu_kernel(%arg0: i32, %arg1: memref<256x128xbf16, #tpu.memory_space<vmem>>, %arg2: memref<1x128xf32, #tpu.memory_space<vmem>>, %arg3: memref<1x128xf32, #tpu.memory_space<vmem>>, %arg4: memref<256x128xbf16, #tpu.memory_space<vmem>>) attributes {dimension_semantics = [#tpu.dimension_semantics<parallel>], iteration_bounds = array<i64: 2>, scalar_prefetch = 0 : i64, scratch_operands = 0 : i64, tpu.core_type = #tpu.core_type<tc>, window_params = [{transform_indices = @transform_0, window_bounds = array<i64: 256, 128>}, {pipeline_mode = #tpu.pipeline_mode<synchronous>, transform_indices = @transform_1, window_bounds = array<i64: 1, 128>}, {pipeline_mode = #tpu.pipeline_mode<synchronous>, transform_indices = @transform_2, window_bounds = array<i64: 1, 128>}, {transform_indices = @transform_3, window_bounds = array<i64: 256, 128>}]} {
    %c0 = arith.constant 0 : index
    %c0_0 = arith.constant 0 : index
    %0 = vector.load %arg1[%c0, %c0_0] : memref<256x128xbf16, #tpu.memory_space<vmem>>, vector<256x128xbf16>
    %1 = arith.extf %0 : vector<256x128xbf16> to vector<256x128xf32>
    %c0_1 = arith.constant 0 : index
    %c0_2 = arith.constant 0 : index
    %2 = vector.load %arg2[%c0_1, %c0_2] : memref<1x128xf32, #tpu.memory_space<vmem>>, vector<1x128xf32>
    %3 = vector.broadcast %2 : vector<1x128xf32> to vector<256x128xf32>
    %4 = arith.mulf %1, %3 : vector<256x128xf32>
    %c0_3 = arith.constant 0 : index
    %c0_4 = arith.constant 0 : index
    %5 = vector.load %arg3[%c0_3, %c0_4] : memref<1x128xf32, #tpu.memory_space<vmem>>, vector<1x128xf32>
    %6 = vector.broadcast %5 : vector<1x128xf32> to vector<256x128xf32>
    %7 = arith.addf %4, %6 : vector<256x128xf32>
    %cst = arith.constant 0.000000e+00 : f32
    %8 = vector.broadcast %cst : f32 to vector<256x128xf32>
    %9 = arith.maximumf %7, %8 : vector<256x128xf32>
    %10 = arith.truncf %9 : vector<256x128xf32> to vector<256x128xbf16>
    %c0_5 = arith.constant 0 : index
    %c0_6 = arith.constant 0 : index
    %11 = vector.load %arg4[%c0_5, %c0_6] : memref<256x128xbf16, #tpu.memory_space<vmem>>, vector<256x128xbf16>
    tpu.vector_store %arg4[%c0_5, %c0_6], %10 {strides = array<i32>} : memref<256x128xbf16, #tpu.memory_space<vmem>>, vector<256x128xbf16>,
    return
  }
  func.func @transform_0(%arg0: i32) -> (i32, i32) {
    %c0_i32 = arith.constant 0 : i32
    %c0_i32_0 = arith.constant 0 : i32
    return %arg0, %c0_i32 : i32, i32
  }
  func.func @transform_1(%arg0: i32) -> (i32, i32) {
    %c0_i32 = arith.constant 0 : i32
    %c0_i32_0 = arith.constant 0 : i32
    %c0_i32_1 = arith.constant 0 : i32
    return %c0_i32, %c0_i32_0 : i32, i32
  }
  func.func @transform_2(%arg0: i32) -> (i32, i32) {
    %c0_i32 = arith.constant 0 : i32
    %c0_i32_0 = arith.constant 0 : i32
    %c0_i32_1 = arith.constant 0 : i32
    return %c0_i32, %c0_i32_0 : i32, i32
  }
  func.func @transform_3(%arg0: i32) -> (i32, i32) {
    %c0_i32 = arith.constant 0 : i32
    %c0_i32_0 = arith.constant 0 : i32
    return %arg0, %c0_i32 : i32, i32
  }
}

module attributes {stable_mosaic.version = 11 : i64} {
  func.func @matmul_stats_kernel(%arg0: i32, %arg1: memref<256x1152xbf16, #tpu.memory_space<vmem>>, %arg2: memref<1152x128xbf16, #tpu.memory_space<vmem>>, %arg3: memref<256x128xbf16, #tpu.memory_space<vmem>>, %arg4: memref<1x128xf32, #tpu.memory_space<vmem>>, %arg5: memref<1x128xf32, #tpu.memory_space<vmem>>) attributes {dimension_semantics = [#tpu.dimension_semantics<arbitrary>], iteration_bounds = array<i64: 2>, scalar_prefetch = 0 : i64, scratch_operands = 0 : i64, tpu.core_type = #tpu.core_type<tc>, window_params = [{transform_indices = @transform_0, window_bounds = array<i64: 256, 1152>}, {pipeline_mode = #tpu.pipeline_mode<synchronous>, transform_indices = @transform_1, window_bounds = array<i64: 1152, 128>}, {transform_indices = @transform_2, window_bounds = array<i64: 256, 128>}, {pipeline_mode = #tpu.pipeline_mode<synchronous>, transform_indices = @transform_3, window_bounds = array<i64: 1, 128>}, {pipeline_mode = #tpu.pipeline_mode<synchronous>, transform_indices = @transform_4, window_bounds = array<i64: 1, 128>}]} {
    %c0_i32 = arith.constant 0 : i32
    %0 = arith.cmpi eq, %arg0, %c0_i32 : i32
    %1 = arith.extui %0 : i1 to i32
    %c0_i32_0 = arith.constant 0 : i32
    %2 = arith.cmpi ne, %1, %c0_i32_0 : i32
    scf.if %2 {
      %cst_16 = arith.constant 0.000000e+00 : f32
      %19 = vector.broadcast %cst_16 : f32 to vector<1x128xf32>
      %c0_17 = arith.constant 0 : index
      %c0_18 = arith.constant 0 : index
      %20 = vector.load %arg4[%c0_17, %c0_18] : memref<1x128xf32, #tpu.memory_space<vmem>>, vector<1x128xf32>
      tpu.vector_store %arg4[%c0_17, %c0_18], %19 {strides = array<i32>} : memref<1x128xf32, #tpu.memory_space<vmem>>, vector<1x128xf32>,
      %cst_19 = arith.constant 0.000000e+00 : f32
      %21 = vector.broadcast %cst_19 : f32 to vector<1x128xf32>
      %c0_20 = arith.constant 0 : index
      %c0_21 = arith.constant 0 : index
      %22 = vector.load %arg5[%c0_20, %c0_21] : memref<1x128xf32, #tpu.memory_space<vmem>>, vector<1x128xf32>
      tpu.vector_store %arg5[%c0_20, %c0_21], %21 {strides = array<i32>} : memref<1x128xf32, #tpu.memory_space<vmem>>, vector<1x128xf32>,
    } else {
    }
    %c0 = arith.constant 0 : index
    %c0_1 = arith.constant 0 : index
    %3 = vector.load %arg1[%c0, %c0_1] : memref<256x1152xbf16, #tpu.memory_space<vmem>>, vector<256x1152xbf16>
    %c0_2 = arith.constant 0 : index
    %c0_3 = arith.constant 0 : index
    %4 = vector.load %arg2[%c0_2, %c0_3] : memref<1152x128xbf16, #tpu.memory_space<vmem>>, vector<1152x128xbf16>
    %cst = arith.constant dense<0.000000e+00> : vector<256x128xf32>
    %5 = tpu.matmul %3, %4, %cst {dimension_numbers = #tpu.dot_dimension_numbers<[1], [0], [0], [1], [0, 0, 1, 1], [], []>} : vector<256x1152xbf16>, vector<1152x128xbf16>, vector<256x128xf32> -> vector<256x128xf32>
    %6 = arith.truncf %5 : vector<256x128xf32> to vector<256x128xbf16>
    %c0_4 = arith.constant 0 : index
    %c0_5 = arith.constant 0 : index
    %7 = vector.load %arg3[%c0_4, %c0_5] : memref<256x128xbf16, #tpu.memory_space<vmem>>, vector<256x128xbf16>
    tpu.vector_store %arg3[%c0_4, %c0_5], %6 {strides = array<i32>} : memref<256x128xbf16, #tpu.memory_space<vmem>>, vector<256x128xbf16>,
    %c0_6 = arith.constant 0 : index
    %c0_7 = arith.constant 0 : index
    %8 = vector.load %arg4[%c0_6, %c0_7] : memref<1x128xf32, #tpu.memory_space<vmem>>, vector<1x128xf32>
    %cst_8 = arith.constant dense<0.000000e+00> : vector<128xf32>
    %9 = vector.multi_reduction <add>, %5, %cst_8 [0] : vector<256x128xf32> to vector<128xf32>
    %10 = vector.shape_cast %9 : vector<128xf32> to vector<1x128xf32>
    %11 = arith.addf %8, %10 : vector<1x128xf32>
    %c0_9 = arith.constant 0 : index
    %c0_10 = arith.constant 0 : index
    %12 = vector.load %arg4[%c0_9, %c0_10] : memref<1x128xf32, #tpu.memory_space<vmem>>, vector<1x128xf32>
    tpu.vector_store %arg4[%c0_9, %c0_10], %11 {strides = array<i32>} : memref<1x128xf32, #tpu.memory_space<vmem>>, vector<1x128xf32>,
    %c0_11 = arith.constant 0 : index
    %c0_12 = arith.constant 0 : index
    %13 = vector.load %arg5[%c0_11, %c0_12] : memref<1x128xf32, #tpu.memory_space<vmem>>, vector<1x128xf32>
    %14 = arith.mulf %5, %5 : vector<256x128xf32>
    %cst_13 = arith.constant dense<0.000000e+00> : vector<128xf32>
    %15 = vector.multi_reduction <add>, %14, %cst_13 [0] : vector<256x128xf32> to vector<128xf32>
    %16 = vector.shape_cast %15 : vector<128xf32> to vector<1x128xf32>
    %17 = arith.addf %13, %16 : vector<1x128xf32>
    %c0_14 = arith.constant 0 : index
    %c0_15 = arith.constant 0 : index
    %18 = vector.load %arg5[%c0_14, %c0_15] : memref<1x128xf32, #tpu.memory_space<vmem>>, vector<1x128xf32>
    tpu.vector_store %arg5[%c0_14, %c0_15], %17 {strides = array<i32>} : memref<1x128xf32, #tpu.memory_space<vmem>>, vector<1x128xf32>,
    return
  }
  func.func @transform_0(%arg0: i32) -> (i32, i32) {
    %c0_i32 = arith.constant 0 : i32
    %c0_i32_0 = arith.constant 0 : i32
    return %arg0, %c0_i32 : i32, i32
  }
  func.func @transform_1(%arg0: i32) -> (i32, i32) {
    %c0_i32 = arith.constant 0 : i32
    %c0_i32_0 = arith.constant 0 : i32
    %c0_i32_1 = arith.constant 0 : i32
    return %c0_i32, %c0_i32_0 : i32, i32
  }
  func.func @transform_2(%arg0: i32) -> (i32, i32) {
    %c0_i32 = arith.constant 0 : i32
    %c0_i32_0 = arith.constant 0 : i32
    return %arg0, %c0_i32 : i32, i32
  }
  func.func @transform_3(%arg0: i32) -> (i32, i32) {
    %c0_i32 = arith.constant 0 : i32
    %c0_i32_0 = arith.constant 0 : i32
    %c0_i32_1 = arith.constant 0 : i32
    return %c0_i32, %c0_i32_0 : i32, i32
  }
  func.func @transform_4(%arg0: i32) -> (i32, i32) {
    %c0_i32 = arith.constant 0 : i32
    %c0_i32_0 = arith.constant 0 : i32
    %c0_i32_1 = arith.constant 0 : i32
    return %c0_i32, %c0_i32_0 : i32, i32
  }
}

module attributes {stable_mosaic.version = 11 : i64} {
  func.func @bn_relu_skip_kernel(%arg0: i32, %arg1: memref<256x128xbf16, #tpu.memory_space<vmem>>, %arg2: memref<256x4xbf16, #tpu.memory_space<vmem>>, %arg3: memref<4x128xbf16, #tpu.memory_space<vmem>>, %arg4: memref<1x128xf32, #tpu.memory_space<vmem>>, %arg5: memref<1x128xf32, #tpu.memory_space<vmem>>, %arg6: memref<256x128xf32, #tpu.memory_space<vmem>>) attributes {dimension_semantics = [#tpu.dimension_semantics<parallel>], iteration_bounds = array<i64: 2>, scalar_prefetch = 0 : i64, scratch_operands = 0 : i64, tpu.core_type = #tpu.core_type<tc>, window_params = [{transform_indices = @transform_0, window_bounds = array<i64: 256, 128>}, {transform_indices = @transform_1, window_bounds = array<i64: 256, 4>}, {pipeline_mode = #tpu.pipeline_mode<synchronous>, transform_indices = @transform_2, window_bounds = array<i64: 4, 128>}, {pipeline_mode = #tpu.pipeline_mode<synchronous>, transform_indices = @transform_3, window_bounds = array<i64: 1, 128>}, {pipeline_mode = #tpu.pipeline_mode<synchronous>, transform_indices = @transform_4, window_bounds = array<i64: 1, 128>}, {transform_indices = @transform_5, window_bounds = array<i64: 256, 128>}]} {
    %c0 = arith.constant 0 : index
    %c0_0 = arith.constant 0 : index
    %0 = vector.load %arg1[%c0, %c0_0] : memref<256x128xbf16, #tpu.memory_space<vmem>>, vector<256x128xbf16>
    %1 = arith.extf %0 : vector<256x128xbf16> to vector<256x128xf32>
    %c0_1 = arith.constant 0 : index
    %c0_2 = arith.constant 0 : index
    %2 = vector.load %arg4[%c0_1, %c0_2] : memref<1x128xf32, #tpu.memory_space<vmem>>, vector<1x128xf32>
    %3 = vector.broadcast %2 : vector<1x128xf32> to vector<256x128xf32>
    %4 = arith.mulf %1, %3 : vector<256x128xf32>
    %c0_3 = arith.constant 0 : index
    %c0_4 = arith.constant 0 : index
    %5 = vector.load %arg5[%c0_3, %c0_4] : memref<1x128xf32, #tpu.memory_space<vmem>>, vector<1x128xf32>
    %6 = vector.broadcast %5 : vector<1x128xf32> to vector<256x128xf32>
    %7 = arith.addf %4, %6 : vector<256x128xf32>
    %cst = arith.constant 0.000000e+00 : f32
    %8 = vector.broadcast %cst : f32 to vector<256x128xf32>
    %9 = arith.maximumf %7, %8 : vector<256x128xf32>
    %c0_5 = arith.constant 0 : index
    %c0_6 = arith.constant 0 : index
    %10 = vector.load %arg2[%c0_5, %c0_6] : memref<256x4xbf16, #tpu.memory_space<vmem>>, vector<256x4xbf16>
    %c0_7 = arith.constant 0 : index
    %c0_8 = arith.constant 0 : index
    %11 = vector.load %arg3[%c0_7, %c0_8] : memref<4x128xbf16, #tpu.memory_space<vmem>>, vector<4x128xbf16>
    %cst_9 = arith.constant dense<0.000000e+00> : vector<256x128xf32>
    %12 = tpu.matmul %10, %11, %cst_9 {dimension_numbers = #tpu.dot_dimension_numbers<[1], [0], [0], [1], [0, 0, 1, 1], [], []>} : vector<256x4xbf16>, vector<4x128xbf16>, vector<256x128xf32> -> vector<256x128xf32>
    %13 = arith.addf %9, %12 : vector<256x128xf32>
    %cst_10 = arith.constant 0.000000e+00 : f32
    %14 = vector.broadcast %cst_10 : f32 to vector<256x128xf32>
    %15 = arith.maximumf %13, %14 : vector<256x128xf32>
    %c0_11 = arith.constant 0 : index
    %c0_12 = arith.constant 0 : index
    %16 = vector.load %arg6[%c0_11, %c0_12] : memref<256x128xf32, #tpu.memory_space<vmem>>, vector<256x128xf32>
    tpu.vector_store %arg6[%c0_11, %c0_12], %15 {strides = array<i32>} : memref<256x128xf32, #tpu.memory_space<vmem>>, vector<256x128xf32>,
    return
  }
  func.func @transform_0(%arg0: i32) -> (i32, i32) {
    %c0_i32 = arith.constant 0 : i32
    %c0_i32_0 = arith.constant 0 : i32
    return %arg0, %c0_i32 : i32, i32
  }
  func.func @transform_1(%arg0: i32) -> (i32, i32) {
    %c0_i32 = arith.constant 0 : i32
    %c0_i32_0 = arith.constant 0 : i32
    return %arg0, %c0_i32 : i32, i32
  }
  func.func @transform_2(%arg0: i32) -> (i32, i32) {
    %c0_i32 = arith.constant 0 : i32
    %c0_i32_0 = arith.constant 0 : i32
    %c0_i32_1 = arith.constant 0 : i32
    return %c0_i32, %c0_i32_0 : i32, i32
  }
  func.func @transform_3(%arg0: i32) -> (i32, i32) {
    %c0_i32 = arith.constant 0 : i32
    %c0_i32_0 = arith.constant 0 : i32
    %c0_i32_1 = arith.constant 0 : i32
    return %c0_i32, %c0_i32_0 : i32, i32
  }
  func.func @transform_4(%arg0: i32) -> (i32, i32) {
    %c0_i32 = arith.constant 0 : i32
    %c0_i32_0 = arith.constant 0 : i32
    %c0_i32_1 = arith.constant 0 : i32
    return %c0_i32, %c0_i32_0 : i32, i32
  }
  func.func @transform_5(%arg0: i32) -> (i32, i32) {
    %c0_i32 = arith.constant 0 : i32
    %c0_i32_0 = arith.constant 0 : i32
    return %arg0, %c0_i32 : i32, i32
  }
}

</mosaic_0001>

<llo_original>
// kernel: basic_block_forward.5
$region0: #{basic_block_forward.5}
  #allocation0 [shape = 'u32[]', space=smem, size = 0x4, offset = 0x4, fixed_abs, tag = 'smem constant byte address 0x4 - core index']
  #allocation1 [shape = 'u32[144,128]{1,0:T(1,128)}', space=vmem, size = 0x12000, scoped, tag = 'internal scratch']
  %s0 = inlined_call_operand.vmem [shape: bf16[512,128], index: 0, kind: input, shape index: {}]
  %s1 = inlined_call_operand.vmem [shape: f32[1,128], index: 1, kind: input, shape index: {}]
  %s2 = inlined_call_operand.vmem [shape: f32[1,128], index: 2, kind: input, shape index: {}]
  %s3 = inlined_call_operand.vmem [shape: bf16[512,128], index: 3, kind: output, shape index: {}]
  %s4 = sld [smem:[#allocation0]]
  $region45: #{basic_block_forward.5} parent=0
    _
  %s6 = ssub.s32 1, %s4
  %s7 = scalar_select 0, %s6, %s4
  loop: start=0, step=1, limit=4
  $region2: #{basic_block_forward.5} parent=0 // loop_pre_header
    _
  $region3: #{basic_block_forward.5} parent=0 // loop_header
    %s9 = sphi 0, %s13
    %p10 = scmp.ge.s32.totalorder %s9, 4
    %s19 = sphi 0, %s21
    %s22 = sphi 0, %s19
    %s23 = sphi 0, %s22
    %s39 = sphi 0, %s23
    %s43 = sphi 0, %s43
    %s45 = sphi 0, %s43
    %s46 = sphi 0, %s45
    %s60 = sphi 0, %s46
    %s64 = sphi 0, %s64
    %s66 = sphi 0, %s64
    %s67 = sphi 0, %s66
    %s81 = sphi 0, %s67
    %s87 = sphi 0, %s89
    %s90 = sphi 0, %s87
    %s91 = sphi 0, %s90
    %s107 = sphi 0, %s91
  $region4: #{basic_block_forward.5} parent=0 // loop_header_branch
    %12 = sbr.rel (%p10) target = $region8
  $region5: #{basic_block_forward.5} parent=0 // loop_body
    %s14 = ssub.s32 %s9, 1
    %s15 = ssub.s32 %s9, 2
    %s16 = sadd.s32 %s9, 1
    %s17 = ssub.s32 %s9, %s16
    %p18 = scmp.eq.s32.totalorder %s17, 0
    %s20 = sadd.s32 %s19, 1
    %s21 = scalar_select %p18, %s19, %s20
    %p24 = pneg %p18
    %p25 = scmp.eq.s32.totalorder %s9, 1
    %p26 = por %p24, %p25
    %p27 = scmp.ne.s32.totalorder %s19, %s22
    %p28 = scmp.eq.s32.totalorder %s9, 0
    %p29 = por %p27, %p28
    %p30 = scmp.ne.s32.totalorder %s19, %s22
    %p31 = scmp.eq.s32.totalorder %s14, 1
    %p32 = por %p30, %p31
    %p33 = scmp.ne.s32.totalorder %s22, %s23
    %p34 = scmp.eq.s32.totalorder %s14, 0
    %p35 = por %p33, %p34
    %p36 = scmp.ne.s32.totalorder %s22, %s23
    %p37 = scmp.eq.s32.totalorder %s15, 1
    %p38 = por %p36, %p37
    %p40 = scmp.ne.s32.totalorder %s23, %s39
    %p41 = scmp.eq.s32.totalorder %s15, 0
    %p42 = por %p40, %p41
    %s44 = sadd.s32 %s43, 1
    %p47 = scmp.eq.s32.totalorder %s9, 1
    %p48 = scmp.ne.s32.totalorder %s43, %s45
    %p49 = scmp.eq.s32.totalorder %s9, 0
    %p50 = por %p48, %p49
    %p51 = scmp.ne.s32.totalorder %s43, %s45
    %p52 = scmp.eq.s32.totalorder %s14, 1
    %p53 = por %p51, %p52
    %p54 = scmp.ne.s32.totalorder %s45, %s46
    %p55 = scmp.eq.s32.totalorder %s14, 0
    %p56 = por %p54, %p55
    %p57 = scmp.ne.s32.totalorder %s45, %s46
    %p58 = scmp.eq.s32.totalorder %s15, 1
    %p59 = por %p57, %p58
    %p61 = scmp.ne.s32.totalorder %s46, %s60
    %p62 = scmp.eq.s32.totalorder %s15, 0
    %p63 = por %p61, %p62
    %s65 = sadd.s32 %s64, 1
    %p68 = scmp.eq.s32.totalorder %s9, 1
    %p69 = scmp.ne.s32.totalorder %s64, %s66
    %p70 = scmp.eq.s32.totalorder %s9, 0
    %p71 = por %p69, %p70
    %p72 = scmp.ne.s32.totalorder %s64, %s66
    %p73 = scmp.eq.s32.totalorder %s14, 1
    %p74 = por %p72, %p73
    %p75 = scmp.ne.s32.totalorder %s66, %s67
    %p76 = scmp.eq.s32.totalorder %s14, 0
    %p77 = por %p75, %p76
    %p78 = scmp.ne.s32.totalorder %s66, %s67
    %p79 = scmp.eq.s32.totalorder %s15, 1
    %p80 = por %p78, %p79
    %p82 = scmp.ne.s32.totalorder %s67, %s81
    %p83 = scmp.eq.s32.totalorder %s15, 0
    %p84 = por %p82, %p83
    %s85 = ssub.s32 %s9, %s16
    %p86 = scmp.eq.s32.totalorder %s85, 0
    %s88 = sadd.s32 %s87, 1
    %s89 = scalar_select %p86, %s87, %s88
    %p92 = pneg %p86
    %p93 = scmp.eq.s32.totalorder %s9, 1
    %p94 = por %p92, %p93
    %p95 = scmp.ne.s32.totalorder %s87, %s90
    %p96 = scmp.eq.s32.totalorder %s9, 0
    %p97 = por %p95, %p96
    %p98 = scmp.ne.s32.totalorder %s87, %s90
    %p99 = scmp.eq.s32.totalorder %s14, 1
    %p100 = por %p98, %p99
    %p101 = scmp.ne.s32.totalorder %s90, %s91
    %p102 = scmp.eq.s32.totalorder %s14, 0
    %p103 = por %p101, %p102
    %p104 = scmp.ne.s32.totalorder %s90, %s91
    %p105 = scmp.eq.s32.totalorder %s15, 1
    %p106 = por %p104, %p105
    %p108 = scmp.ne.s32.totalorder %s91, %s107
    %p109 = scmp.eq.s32.totalorder %s15, 0
    %p110 = por %p108, %p109
    %p111 = scmp.le.s32.totalorder 1, %s9
    %p112 = scmp.lt.s32.totalorder %s9, 3
    %p113 = pnand %p111, %p112
    %p114 = pneg %p113
    // Predicated region
    $region9: #{basic_block_forward.5} parent=5 // pred_check
      _
    $region10: #{basic_block_forward.5} parent=5 // pred_check_branch
      %116 = sbr.rel (%p113) target = $region12
    $region11: #{basic_block_forward.5} parent=5 // pred_region
      %s117 = ssub.s32 %s9, 1
      // Predicated region
      $region13: #{basic_block_forward.5} parent=11 // pred_check
        %p118 = pneg %p56
      $region14: #{basic_block_forward.5} parent=11 // pred_check_branch
        %120 = sbr.rel (%p118) target = $region16
      $region15: #{basic_block_forward.5} parent=11 // pred_region
        _
      $region16: #{basic_block_forward.5} parent=11 // pred_fallthru
        _
      // Predicated region
      $region17: #{basic_block_forward.5} parent=11 // pred_check
        %p121 = pneg %p77
      $region18: #{basic_block_forward.5} parent=11 // pred_check_branch
        %123 = sbr.rel (%p121) target = $region20
      $region19: #{basic_block_forward.5} parent=11 // pred_region
        _
      $region20: #{basic_block_forward.5} parent=11 // pred_fallthru
        _
    $region12: #{basic_block_forward.5} parent=5 // pred_fallthru
      _
    %p124 = scmp.lt.s32.totalorder %s9, 2
    // Predicated region
    $region21: #{basic_block_forward.5} parent=5 // pred_check
      %p125 = pneg %p124
    $region22: #{basic_block_forward.5} parent=5 // pred_check_branch
      %127 = sbr.rel (%p125) target = $region24
    $region23: #{basic_block_forward.5} parent=5 // pred_region
      // Predicated region
      $region25: #{basic_block_forward.5} parent=23 // pred_check
        %p128 = pneg %p29
      $region26: #{basic_block_forward.5} parent=23 // pred_check_branch
        %130 = sbr.rel (%p128) target = $region28
      $region27: #{basic_block_forward.5} parent=23 // pred_region
        %s131 = smul.u32 32, %s9
        %p132 = scmp.lt.s32.totalorder %s131, 63
        %s133 = scalar_select %p132, %s131, 63
        %s134 = smul.addr %s133, 4
        %s135 = scalar_lea.vmem %s0, %s134
        %s136 = smul.u32 32, %s9
      $region28: #{basic_block_forward.5} parent=23 // pred_fallthru
        _
    $region24: #{basic_block_forward.5} parent=5 // pred_fallthru
      _
    %p137 = scmp.le.s32.totalorder 1, %s9
    %p138 = scmp.lt.s32.totalorder %s9, 3
    %p139 = pnand %p137, %p138
    %p140 = pneg %p139
    // Predicated region
    $region29: #{basic_block_forward.5} parent=5 // pred_check
      _
    $region30: #{basic_block_forward.5} parent=5 // pred_check_branch
      %142 = sbr.rel (%p139) target = $region32
    $region31: #{basic_block_forward.5} parent=5 // pred_region
      %s143 = ssub.s32 %s9, 1
      %s144 = smul.u32 32, %s14
      %p145 = scmp.lt.s32.totalorder %s144, 63
      %s146 = scalar_select %p145, %s144, 63
      %s147 = smul.addr %s146, 4
      %s148 = scalar_lea.vmem %s0, %s147
      %p149 = pneg %p35
      %p150 = pneg %p32
      %p151 = pneg %p56
      %p152 = pneg %p53
      %p153 = pneg %p77
      %p154 = pneg %p74
      %p155 = pneg %p103
      %p156 = pneg %p100
      %s157 = smul.u32 32, %s14
      %p158 = scmp.lt.s32.totalorder %s157, 63
      %s159 = scalar_select %p158, %s157, 63
      %s160 = smul.addr %s159, 4
      %s161 = scalar_lea.vmem %s3, %s160
      %s162 = smul.u32 32, %s14
      %p163 = scmp.lt.s32.totalorder %s162, 63
      %s164 = scalar_select %p163, %s162, 63
      %s165 = smul.addr %s164, 4
      %s166 = scalar_lea.vmem %s0, %s165
      %s167 = smul.u32 32, %s14
      %s168 = smul.u32 32, %s14
      %p169 = scmp.lt.s32.totalorder %s168, 63
      %s170 = scalar_select %p169, %s168, 63
      %s171 = smul.addr %s170, 4
      %s172 = scalar_lea.vmem %s3, %s171
      %s173 = smul.u32 32, %s14
      %v174 = vld [vmem:[%s166] sm:$0xf]
      %v175 = vld [vmem:[%s166 + $0x4] sm:$0xf]
      %v176 = vld [vmem:[%s166 + $0x8] sm:$0xf]
      %v177 = vld [vmem:[%s166 + $0xc] sm:$0xf]
      %v178 = vld [vmem:[%s166 + $0x10] sm:$0xf]
      %v179 = vld [vmem:[%s166 + $0x14] sm:$0xf]
      %v180 = vld [vmem:[%s166 + $0x18] sm:$0xf]
      %v181 = vld [vmem:[%s166 + $0x1c] sm:$0xf]
      %v182 = vld [vmem:[%s166 + $0x20] sm:$0xf]
      %v183 = vld [vmem:[%s166 + $0x24] sm:$0xf]
      %v184 = vld [vmem:[%s166 + $0x28] sm:$0xf]
      %v185 = vld [vmem:[%s166 + $0x2c] sm:$0xf]
      %v186 = vld [vmem:[%s166 + $0x30] sm:$0xf]
      %v187 = vld [vmem:[%s166 + $0x34] sm:$0xf]
      %v188 = vld [vmem:[%s166 + $0x38] sm:$0xf]
      %v189 = vld [vmem:[%s166 + $0x3c] sm:$0xf]
      %v190 = vld [vmem:[%s166 + $0x40] sm:$0xf]
      %v191 = vld [vmem:[%s166 + $0x44] sm:$0xf]
      %v192 = vld [vmem:[%s166 + $0x48] sm:$0xf]
      %v193 = vld [vmem:[%s166 + $0x4c] sm:$0xf]
      %v194 = vld [vmem:[%s166 + $0x50] sm:$0xf]
      %v195 = vld [vmem:[%s166 + $0x54] sm:$0xf]
      %v196 = vld [vmem:[%s166 + $0x58] sm:$0xf]
      %v197 = vld [vmem:[%s166 + $0x5c] sm:$0xf]
      %v198 = vld [vmem:[%s166 + $0x60] sm:$0xf]
      %v199 = vld [vmem:[%s166 + $0x64] sm:$0xf]
      %v200 = vld [vmem:[%s166 + $0x68] sm:$0xf]
      %v201 = vld [vmem:[%s166 + $0x6c] sm:$0xf]
      %v202 = vld [vmem:[%s166 + $0x70] sm:$0xf]
      %v203 = vld [vmem:[%s166 + $0x74] sm:$0xf]
      %v204 = vld [vmem:[%s166 + $0x78] sm:$0xf]
      %v205 = vld [vmem:[%s166 + $0x7c] sm:$0xf]
      %v206 = vunpack.c.l.bf16 %v174
      %v207 = vunpack.c.l.bf16 %v175
      %v208 = vunpack.c.l.bf16 %v176
      %v209 = vunpack.c.l.bf16 %v177
      %v210 = vunpack.c.l.bf16 %v178
      %v211 = vunpack.c.l.bf16 %v179
      %v212 = vunpack.c.l.bf16 %v180
      %v213 = vunpack.c.l.bf16 %v181
      %v214 = vunpack.c.l.bf16 %v182
      %v215 = vunpack.c.l.bf16 %v183
      %v216 = vunpack.c.l.bf16 %v184
      %v217 = vunpack.c.l.bf16 %v185
      %v218 = vunpack.c.l.bf16 %v186
      %v219 = vunpack.c.l.bf16 %v187
      %v220 = vunpack.c.l.bf16 %v188
      %v221 = vunpack.c.l.bf16 %v189
      %v222 = vunpack.c.l.bf16 %v190
      %v223 = vunpack.c.l.bf16 %v191
      %v224 = vunpack.c.l.bf16 %v192
      %v225 = vunpack.c.l.bf16 %v193
      %v226 = vunpack.c.l.bf16 %v194
      %v227 = vunpack.c.l.bf16 %v195
      %v228 = vunpack.c.l.bf16 %v196
      %v229 = vunpack.c.l.bf16 %v197
      %v230 = vunpack.c.l.bf16 %v198
      %v231 = vunpack.c.l.bf16 %v199
      %v232 = vunpack.c.l.bf16 %v200
      %v233 = vunpack.c.l.bf16 %v201
      %v234 = vunpack.c.l.bf16 %v202
      %v235 = vunpack.c.l.bf16 %v203
      %v236 = vunpack.c.l.bf16 %v204
      %v237 = vunpack.c.l.bf16 %v205
      %v238 = vld [vmem:[%s1] sm:$0x1]
      %v240 = vlaneseq
      %v241 = vshrl.u32 %v240, 7
      %v242 = vsub.s32 0, %v241
      %v243 = vrot.slane %v238, %v242
      %v245 = vmul.f32 %v206, %v243
      %v246 = vmul.f32 %v207, %v243
      %v247 = vmul.f32 %v208, %v243
      %v248 = vmul.f32 %v209, %v243
      %v249 = vmul.f32 %v210, %v243
      %v250 = vmul.f32 %v211, %v243
      %v251 = vmul.f32 %v212, %v243
      %v252 = vmul.f32 %v213, %v243
      %v253 = vmul.f32 %v214, %v243
      %v254 = vmul.f32 %v215, %v243
      %v255 = vmul.f32 %v216, %v243
      %v256 = vmul.f32 %v217, %v243
      %v257 = vmul.f32 %v218, %v243
      %v258 = vmul.f32 %v219, %v243
      %v259 = vmul.f32 %v220, %v243
      %v260 = vmul.f32 %v221, %v243
      %v261 = vmul.f32 %v222, %v243
      %v262 = vmul.f32 %v223, %v243
      %v263 = vmul.f32 %v224, %v243
      %v264 = vmul.f32 %v225, %v243
      %v265 = vmul.f32 %v226, %v243
      %v266 = vmul.f32 %v227, %v243
      %v267 = vmul.f32 %v228, %v243
      %v268 = vmul.f32 %v229, %v243
      %v269 = vmul.f32 %v230, %v243
      %v270 = vmul.f32 %v231, %v243
      %v271 = vmul.f32 %v232, %v243
      %v272 = vmul.f32 %v233, %v243
      %v273 = vmul.f32 %v234, %v243
      %v274 = vmul.f32 %v235, %v243
      %v275 = vmul.f32 %v236, %v243
      %v276 = vmul.f32 %v237, %v243
      %v277 = vld [vmem:[%s2] sm:$0x1]
      %v279 = vlaneseq
      %v280 = vshrl.u32 %v279, 7
      %v281 = vsub.s32 0, %v280
      %v282 = vrot.slane %v277, %v281
      %v284 = vadd.f32 %v245, %v282
      %v285 = vadd.f32 %v246, %v282
      %v286 = vadd.f32 %v247, %v282
      %v287 = vadd.f32 %v248, %v282
      %v288 = vadd.f32 %v249, %v282
      %v289 = vadd.f32 %v250, %v282
      %v290 = vadd.f32 %v251, %v282
      %v291 = vadd.f32 %v252, %v282
      %v292 = vadd.f32 %v253, %v282
      %v293 = vadd.f32 %v254, %v282
      %v294 = vadd.f32 %v255, %v282
      %v295 = vadd.f32 %v256, %v282
      %v296 = vadd.f32 %v257, %v282
      %v297 = vadd.f32 %v258, %v282
      %v298 = vadd.f32 %v259, %v282
      %v299 = vadd.f32 %v260, %v282
      %v300 = vadd.f32 %v261, %v282
      %v301 = vadd.f32 %v262, %v282
      %v302 = vadd.f32 %v263, %v282
      %v303 = vadd.f32 %v264, %v282
      %v304 = vadd.f32 %v265, %v282
      %v305 = vadd.f32 %v266, %v282
      %v306 = vadd.f32 %v267, %v282
      %v307 = vadd.f32 %v268, %v282
      %v308 = vadd.f32 %v269, %v282
      %v309 = vadd.f32 %v270, %v282
      %v310 = vadd.f32 %v271, %v282
      %v311 = vadd.f32 %v272, %v282
      %v312 = vadd.f32 %v273, %v282
      %v313 = vadd.f32 %v274, %v282
      %v314 = vadd.f32 %v275, %v282
      %v315 = vadd.f32 %v276, %v282
      %v316 = vmax.f32 %v284, 0.0
      %v317 = vmax.f32 %v285, 0.0
      %v318 = vmax.f32 %v286, 0.0
      %v319 = vmax.f32 %v287, 0.0
      %v320 = vmax.f32 %v288, 0.0
      %v321 = vmax.f32 %v289, 0.0
      %v322 = vmax.f32 %v290, 0.0
      %v323 = vmax.f32 %v291, 0.0
      %v324 = vmax.f32 %v292, 0.0
      %v325 = vmax.f32 %v293, 0.0
      %v326 = vmax.f32 %v294, 0.0
      %v327 = vmax.f32 %v295, 0.0
      %v328 = vmax.f32 %v296, 0.0
      %v329 = vmax.f32 %v297, 0.0
      %v330 = vmax.f32 %v298, 0.0
      %v331 = vmax.f32 %v299, 0.0
      %v332 = vmax.f32 %v300, 0.0
      %v333 = vmax.f32 %v301, 0.0
      %v334 = vmax.f32 %v302, 0.0
      %v335 = vmax.f32 %v303, 0.0
      %v336 = vmax.f32 %v304, 0.0
      %v337 = vmax.f32 %v305, 0.0
      %v338 = vmax.f32 %v306, 0.0
      %v339 = vmax.f32 %v307, 0.0
      %v340 = vmax.f32 %v308, 0.0
      %v341 = vmax.f32 %v309, 0.0
      %v342 = vmax.f32 %v310, 0.0
      %v343 = vmax.f32 %v311, 0.0
      %v344 = vmax.f32 %v312, 0.0
      %v345 = vmax.f32 %v313, 0.0
      %v346 = vmax.f32 %v314, 0.0
      %v347 = vmax.f32 %v315, 0.0
      %v348 = vpack.c.bf16 %v317, %v316
      %v349 = vpack.c.bf16 %v319, %v318
      %v350 = vpack.c.bf16 %v321, %v320
      %v351 = vpack.c.bf16 %v323, %v322
      %v352 = vpack.c.bf16 %v325, %v324
      %v353 = vpack.c.bf16 %v327, %v326
      %v354 = vpack.c.bf16 %v329, %v328
      %v355 = vpack.c.bf16 %v331, %v330
      %v356 = vpack.c.bf16 %v333, %v332
      %v357 = vpack.c.bf16 %v335, %v334
      %v358 = vpack.c.bf16 %v337, %v336
      %v359 = vpack.c.bf16 %v339, %v338
      %v360 = vpack.c.bf16 %v341, %v340
      %v361 = vpack.c.bf16 %v343, %v342
      %v362 = vpack.c.bf16 %v345, %v344
      %v363 = vpack.c.bf16 %v347, %v346
      %v380 = vunpack.c.l.b16 %v348
      %v381 = vunpack.c.h.b16 %v348
      %v382 = vunpack.c.l.b16 %v349
      %v383 = vunpack.c.h.b16 %v349
      %v384 = vunpack.c.l.b16 %v350
      %v385 = vunpack.c.h.b16 %v350
      %v386 = vunpack.c.l.b16 %v351
      %v387 = vunpack.c.h.b16 %v351
      %v388 = vunpack.c.l.b16 %v352
      %v389 = vunpack.c.h.b16 %v352
      %v390 = vunpack.c.l.b16 %v353
      %v391 = vunpack.c.h.b16 %v353
      %v392 = vunpack.c.l.b16 %v354
      %v393 = vunpack.c.h.b16 %v354
      %v394 = vunpack.c.l.b16 %v355
      %v395 = vunpack.c.h.b16 %v355
      %v396 = vunpack.c.l.b16 %v356
      %v397 = vunpack.c.h.b16 %v356
      %v398 = vunpack.c.l.b16 %v357
      %v399 = vunpack.c.h.b16 %v357
      %v400 = vunpack.c.l.b16 %v358
      %v401 = vunpack.c.h.b16 %v358
      %v402 = vunpack.c.l.b16 %v359
      %v403 = vunpack.c.h.b16 %v359
      %v404 = vunpack.c.l.b16 %v360
      %v405 = vunpack.c.h.b16 %v360
      %v406 = vunpack.c.l.b16 %v361
      %v407 = vunpack.c.h.b16 %v361
      %v408 = vunpack.c.l.b16 %v362
      %v409 = vunpack.c.h.b16 %v362
      %v410 = vunpack.c.l.b16 %v363
      %v411 = vunpack.c.h.b16 %v363
      %v412 = vpack.c.b16 %v380, %v380
      %v413 = vpack.c.b16 %v381, %v381
      %v414 = vpack.c.b16 %v382, %v382
      %v415 = vpack.c.b16 %v383, %v383
      %v416 = vpack.c.b16 %v384, %v384
      %v417 = vpack.c.b16 %v385, %v385
      %v418 = vpack.c.b16 %v386, %v386
      %v419 = vpack.c.b16 %v387, %v387
      %v420 = vpack.c.b16 %v388, %v388
      %v421 = vpack.c.b16 %v389, %v389
      %v422 = vpack.c.b16 %v390, %v390
      %v423 = vpack.c.b16 %v391, %v391
      %v424 = vpack.c.b16 %v392, %v392
      %v425 = vpack.c.b16 %v393, %v393
      %v426 = vpack.c.b16 %v394, %v394
      %v427 = vpack.c.b16 %v395, %v395
      %v428 = vpack.c.b16 %v396, %v396
      %v429 = vpack.c.b16 %v397, %v397
      %v430 = vpack.c.b16 %v398, %v398
      %v431 = vpack.c.b16 %v399, %v399
      %v432 = vpack.c.b16 %v400, %v400
      %v433 = vpack.c.b16 %v401, %v401
      %v434 = vpack.c.b16 %v402, %v402
      %v435 = vpack.c.b16 %v403, %v403
      %v436 = vpack.c.b16 %v404, %v404
      %v437 = vpack.c.b16 %v405, %v405
      %v438 = vpack.c.b16 %v406, %v406
      %v439 = vpack.c.b16 %v407, %v407
      %v440 = vpack.c.b16 %v408, %v408
      %v441 = vpack.c.b16 %v409, %v409
      %v442 = vpack.c.b16 %v410, %v410
      %v443 = vpack.c.b16 %v411, %v411
      %476 = vst [vmem:[%s172] sm:$0xf] %v412
      %477 = vst [vmem:[%s172 + $0x4] sm:$0xf] %v413
      %478 = vst [vmem:[%s172 + $0x8] sm:$0xf] %v414
      %479 = vst [vmem:[%s172 + $0xc] sm:$0xf] %v415
      %480 = vst [vmem:[%s172 + $0x10] sm:$0xf] %v416
      %481 = vst [vmem:[%s172 + $0x14] sm:$0xf] %v417
      %482 = vst [vmem:[%s172 + $0x18] sm:$0xf] %v418
      %483 = vst [vmem:[%s172 + $0x1c] sm:$0xf] %v419
      %484 = vst [vmem:[%s172 + $0x20] sm:$0xf] %v420
      %485 = vst [vmem:[%s172 + $0x24] sm:$0xf] %v421
      %486 = vst [vmem:[%s172 + $0x28] sm:$0xf] %v422
      %487 = vst [vmem:[%s172 + $0x2c] sm:$0xf] %v423
      %488 = vst [vmem:[%s172 + $0x30] sm:$0xf] %v424
      %489 = vst [vmem:[%s172 + $0x34] sm:$0xf] %v425
      %490 = vst [vmem:[%s172 + $0x38] sm:$0xf] %v426
      %491 = vst [vmem:[%s172 + $0x3c] sm:$0xf] %v427
      %492 = vst [vmem:[%s172 + $0x40] sm:$0xf] %v428
      %493 = vst [vmem:[%s172 + $0x44] sm:$0xf] %v429
      %494 = vst [vmem:[%s172 + $0x48] sm:$0xf] %v430
      %495 = vst [vmem:[%s172 + $0x4c] sm:$0xf] %v431
      %496 = vst [vmem:[%s172 + $0x50] sm:$0xf] %v432
      %497 = vst [vmem:[%s172 + $0x54] sm:$0xf] %v433
      %498 = vst [vmem:[%s172 + $0x58] sm:$0xf] %v434
      %499 = vst [vmem:[%s172 + $0x5c] sm:$0xf] %v435
      %500 = vst [vmem:[%s172 + $0x60] sm:$0xf] %v436
      %501 = vst [vmem:[%s172 + $0x64] sm:$0xf] %v437
      %502 = vst [vmem:[%s172 + $0x68] sm:$0xf] %v438
      %503 = vst [vmem:[%s172 + $0x6c] sm:$0xf] %v439
      %504 = vst [vmem:[%s172 + $0x70] sm:$0xf] %v440
      %505 = vst [vmem:[%s172 + $0x74] sm:$0xf] %v441
      %506 = vst [vmem:[%s172 + $0x78] sm:$0xf] %v442
      %507 = vst [vmem:[%s172 + $0x7c] sm:$0xf] %v443
      %s508 = smul.u32 32, %s14
      %p509 = scmp.lt.s32.totalorder %s508, 63
      %s510 = scalar_select %p509, %s508, 63
      %s511 = smul.addr %s510, 4
      %s512 = scalar_lea.vmem %s3, %s511
      // Predicated region
      $region33: #{basic_block_forward.5} parent=31 // pred_check
        %p513 = pneg %p100
      $region34: #{basic_block_forward.5} parent=31 // pred_check_branch
        %515 = sbr.rel (%p513) target = $region36
      $region35: #{basic_block_forward.5} parent=31 // pred_region
        %s516 = smul.u32 32, %s14
      $region36: #{basic_block_forward.5} parent=31 // pred_fallthru
        _
    $region32: #{basic_block_forward.5} parent=5 // pred_fallthru
      _
    %p517 = scmp.le.s32.totalorder 2, %s9
    // Predicated region
    $region37: #{basic_block_forward.5} parent=5 // pred_check
      %p518 = pneg %p517
    $region38: #{basic_block_forward.5} parent=5 // pred_check_branch
      %520 = sbr.rel (%p518) target = $region40
    $region39: #{basic_block_forward.5} parent=5 // pred_region
      %s521 = ssub.s32 %s9, 2
      // Predicated region
      $region41: #{basic_block_forward.5} parent=39 // pred_check
        %p522 = pneg %p106
      $region42: #{basic_block_forward.5} parent=39 // pred_check_branch
        %524 = sbr.rel (%p522) target = $region44
      $region43: #{basic_block_forward.5} parent=39 // pred_region
        %s525 = smul.u32 32, %s15
        %p526 = scmp.lt.s32.totalorder %s525, 63
        %s527 = scalar_select %p526, %s525, 63
        %s528 = smul.addr %s527, 4
        %s529 = scalar_lea.vmem %s3, %s528
      $region44: #{basic_block_forward.5} parent=39 // pred_fallthru
        _
    $region40: #{basic_block_forward.5} parent=5 // pred_fallthru
      _
  $region6: #{basic_block_forward.5} parent=0 // loop_footer
    %s13 = sadd.s32 1, %s9
  $region7: #{basic_block_forward.5} parent=0 // loop_footer_branch
    %8 = sbr.rel target = $region3
  $region8: #{basic_block_forward.5} parent=0 // loop_exit
    _

// kernel: basic_block_forward.4
$region0: #{basic_block_forward.4}
  #allocation0 [shape = 'u32[]', space=smem, size = 0x4, offset = 0x4, fixed_abs, tag = 'smem constant byte address 0x4 - core index']
  #allocation1 [shape = 'u32[144,128]{1,0:T(1,128)}', space=vmem, size = 0x12000, scoped, tag = 'internal scratch']
  %s0 = inlined_call_operand.vmem [shape: bf16[512,36], index: 0, kind: input, shape index: {}]
  %s1 = inlined_call_operand.vmem [shape: bf16[36,128], index: 1, kind: input, shape index: {}]
  %s2 = inlined_call_operand.vmem [shape: bf16[512,128], index: 2, kind: output, shape index: {0}]
  %s3 = inlined_call_operand.vmem [shape: f32[1,128], index: 3, kind: output, shape index: {1}]
  %s4 = inlined_call_operand.vmem [shape: f32[1,128], index: 4, kind: output, shape index: {2}]
  %5 = xla_tuple %s2, %s3, %s4
  %s6 = sld [smem:[#allocation0]]
  $region61: #{basic_block_forward.4} parent=0
    _
  %s8 = ssub.s32 1, %s6
  %s9 = scalar_select 0, %s8, %s6
  loop: start=0, step=1, limit=4
  $region2: #{basic_block_forward.4} parent=0 // loop_pre_header
    _
  $region3: #{basic_block_forward.4} parent=0 // loop_header
    %s11 = sphi 0, %s15
    %p12 = scmp.ge.s32.totalorder %s11, 4
    %s21 = sphi 0, %s23
    %s24 = sphi 0, %s21
    %s25 = sphi 0, %s24
    %s41 = sphi 0, %s25
    %s45 = sphi 0, %s45
    %s47 = sphi 0, %s45
    %s48 = sphi 0, %s47
    %s62 = sphi 0, %s48
    %s68 = sphi 0, %s70
    %s71 = sphi 0, %s68
    %s72 = sphi 0, %s71
    %s88 = sphi 0, %s72
    %s92 = sphi 0, %s92
    %s94 = sphi 0, %s92
    %s95 = sphi 0, %s94
    %s109 = sphi 0, %s95
    %s113 = sphi 0, %s113
    %s115 = sphi 0, %s113
    %s116 = sphi 0, %s115
    %s130 = sphi 0, %s116
  $region4: #{basic_block_forward.4} parent=0 // loop_header_branch
    %14 = sbr.rel (%p12) target = $region8
  $region5: #{basic_block_forward.4} parent=0 // loop_body
    %s16 = ssub.s32 %s11, 1
    %s17 = ssub.s32 %s11, 2
    %s18 = sadd.s32 %s11, 1
    %s19 = ssub.s32 %s11, %s18
    %p20 = scmp.eq.s32.totalorder %s19, 0
    %s22 = sadd.s32 %s21, 1
    %s23 = scalar_select %p20, %s21, %s22
    %p26 = pneg %p20
    %p27 = scmp.eq.s32.totalorder %s11, 1
    %p28 = por %p26, %p27
    %p29 = scmp.ne.s32.totalorder %s21, %s24
    %p30 = scmp.eq.s32.totalorder %s11, 0
    %p31 = por %p29, %p30
    %p32 = scmp.ne.s32.totalorder %s21, %s24
    %p33 = scmp.eq.s32.totalorder %s16, 1
    %p34 = por %p32, %p33
    %p35 = scmp.ne.s32.totalorder %s24, %s25
    %p36 = scmp.eq.s32.totalorder %s16, 0
    %p37 = por %p35, %p36
    %p38 = scmp.ne.s32.totalorder %s24, %s25
    %p39 = scmp.eq.s32.totalorder %s17, 1
    %p40 = por %p38, %p39
    %p42 = scmp.ne.s32.totalorder %s25, %s41
    %p43 = scmp.eq.s32.totalorder %s17, 0
    %p44 = por %p42, %p43
    %s46 = sadd.s32 %s45, 1
    %p49 = scmp.eq.s32.totalorder %s11, 1
    %p50 = scmp.ne.s32.totalorder %s45, %s47
    %p51 = scmp.eq.s32.totalorder %s11, 0
    %p52 = por %p50, %p51
    %p53 = scmp.ne.s32.totalorder %s45, %s47
    %p54 = scmp.eq.s32.totalorder %s16, 1
    %p55 = por %p53, %p54
    %p56 = scmp.ne.s32.totalorder %s47, %s48
    %p57 = scmp.eq.s32.totalorder %s16, 0
    %p58 = por %p56, %p57
    %p59 = scmp.ne.s32.totalorder %s47, %s48
    %p60 = scmp.eq.s32.totalorder %s17, 1
    %p61 = por %p59, %p60
    %p63 = scmp.ne.s32.totalorder %s48, %s62
    %p64 = scmp.eq.s32.totalorder %s17, 0
    %p65 = por %p63, %p64
    %s66 = ssub.s32 %s11, %s18
    %p67 = scmp.eq.s32.totalorder %s66, 0
    %s69 = sadd.s32 %s68, 1
    %s70 = scalar_select %p67, %s68, %s69
    %p73 = pneg %p67
    %p74 = scmp.eq.s32.totalorder %s11, 1
    %p75 = por %p73, %p74
    %p76 = scmp.ne.s32.totalorder %s68, %s71
    %p77 = scmp.eq.s32.totalorder %s11, 0
    %p78 = por %p76, %p77
    %p79 = scmp.ne.s32.totalorder %s68, %s71
    %p80 = scmp.eq.s32.totalorder %s16, 1
    %p81 = por %p79, %p80
    %p82 = scmp.ne.s32.totalorder %s71, %s72
    %p83 = scmp.eq.s32.totalorder %s16, 0
    %p84 = por %p82, %p83
    %p85 = scmp.ne.s32.totalorder %s71, %s72
    %p86 = scmp.eq.s32.totalorder %s17, 1
    %p87 = por %p85, %p86
    %p89 = scmp.ne.s32.totalorder %s72, %s88
    %p90 = scmp.eq.s32.totalorder %s17, 0
    %p91 = por %p89, %p90
    %s93 = sadd.s32 %s92, 1
    %p96 = scmp.eq.s32.totalorder %s11, 1
    %p97 = scmp.ne.s32.totalorder %s92, %s94
    %p98 = scmp.eq.s32.totalorder %s11, 0
    %p99 = por %p97, %p98
    %p100 = scmp.ne.s32.totalorder %s92, %s94
    %p101 = scmp.eq.s32.totalorder %s16, 1
    %p102 = por %p100, %p101
    %p103 = scmp.ne.s32.totalorder %s94, %s95
    %p104 = scmp.eq.s32.totalorder %s16, 0
    %p105 = por %p103, %p104
    %p106 = scmp.ne.s32.totalorder %s94, %s95
    %p107 = scmp.eq.s32.totalorder %s17, 1
    %p108 = por %p106, %p107
    %p110 = scmp.ne.s32.totalorder %s95, %s109
    %p111 = scmp.eq.s32.totalorder %s17, 0
    %p112 = por %p110, %p111
    %s114 = sadd.s32 %s113, 1
    %p117 = scmp.eq.s32.totalorder %s11, 1
    %p118 = scmp.ne.s32.totalorder %s113, %s115
    %p119 = scmp.eq.s32.totalorder %s11, 0
    %p120 = por %p118, %p119
    %p121 = scmp.ne.s32.totalorder %s113, %s115
    %p122 = scmp.eq.s32.totalorder %s16, 1
    %p123 = por %p121, %p122
    %p124 = scmp.ne.s32.totalorder %s115, %s116
    %p125 = scmp.eq.s32.totalorder %s16, 0
    %p126 = por %p124, %p125
    %p127 = scmp.ne.s32.totalorder %s115, %s116
    %p128 = scmp.eq.s32.totalorder %s17, 1
    %p129 = por %p127, %p128
    %p131 = scmp.ne.s32.totalorder %s116, %s130
    %p132 = scmp.eq.s32.totalorder %s17, 0
    %p133 = por %p131, %p132
    %p134 = scmp.le.s32.totalorder 1, %s11
    %p135 = scmp.lt.s32.totalorder %s11, 3
    %p136 = pnand %p134, %p135
    %p137 = pneg %p136
    // Predicated region
    $region9: #{basic_block_forward.4} parent=5 // pred_check
      _
    $region10: #{basic_block_forward.4} parent=5 // pred_check_branch
      %139 = sbr.rel (%p136) target = $region12
    $region11: #{basic_block_forward.4} parent=5 // pred_region
      %s140 = ssub.s32 %s11, 1
      // Predicated region
      $region13: #{basic_block_forward.4} parent=11 // pred_check
        %p141 = pneg %p58
      $region14: #{basic_block_forward.4} parent=11 // pred_check_branch
        %143 = sbr.rel (%p141) target = $region16
      $region15: #{basic_block_forward.4} parent=11 // pred_region
        _
      $region16: #{basic_block_forward.4} parent=11 // pred_fallthru
        _
    $region12: #{basic_block_forward.4} parent=5 // pred_fallthru
      _
    %p144 = scmp.lt.s32.totalorder %s11, 2
    // Predicated region
    $region17: #{basic_block_forward.4} parent=5 // pred_check
      %p145 = pneg %p144
    $region18: #{basic_block_forward.4} parent=5 // pred_check_branch
      %147 = sbr.rel (%p145) target = $region20
    $region19: #{basic_block_forward.4} parent=5 // pred_region
      // Predicated region
      $region21: #{basic_block_forward.4} parent=19 // pred_check
        %p148 = pneg %p31
      $region22: #{basic_block_forward.4} parent=19 // pred_check_branch
        %150 = sbr.rel (%p148) target = $region24
      $region23: #{basic_block_forward.4} parent=19 // pred_region
        %s151 = smul.u32 32, %s11
        %p152 = scmp.lt.s32.totalorder %s151, 63
        %s153 = scalar_select %p152, %s151, 63
        %s154 = smul.addr %s153, 4
        %s155 = scalar_lea.vmem %s0, %s154
        %s156 = smul.u32 32, %s11
      $region24: #{basic_block_forward.4} parent=19 // pred_fallthru
        _
    $region20: #{basic_block_forward.4} parent=5 // pred_fallthru
      _
    %p157 = scmp.le.s32.totalorder 1, %s11
    %p158 = scmp.lt.s32.totalorder %s11, 3
    %p159 = pnand %p157, %p158
    %p160 = pneg %p159
    // Predicated region
    $region25: #{basic_block_forward.4} parent=5 // pred_check
      _
    $region26: #{basic_block_forward.4} parent=5 // pred_check_branch
      %162 = sbr.rel (%p159) target = $region28
    $region27: #{basic_block_forward.4} parent=5 // pred_region
      %s163 = ssub.s32 %s11, 1
      %s164 = smul.u32 32, %s16
      %p165 = scmp.lt.s32.totalorder %s164, 63
      %s166 = scalar_select %p165, %s164, 63
      %s167 = smul.addr %s166, 4
      %s168 = scalar_lea.vmem %s0, %s167
      %p169 = pneg %p37
      %p170 = pneg %p34
      %p171 = pneg %p58
      %p172 = pneg %p55
      %p173 = pneg %p84
      %p174 = pneg %p81
      %s175 = smul.u32 32, %s16
      %p176 = scmp.lt.s32.totalorder %s175, 63
      %s177 = scalar_select %p176, %s175, 63
      %s178 = smul.addr %s177, 4
      %s179 = scalar_lea.vmem %s2, %s178
      %p180 = pneg %p105
      %p181 = pneg %p102
      %p182 = pneg %p126
      %p183 = pneg %p123
      %s184 = smul.u32 32, %s16
      %p185 = scmp.lt.s32.totalorder %s184, 63
      %s186 = scalar_select %p185, %s184, 63
      %s187 = smul.addr %s186, 4
      %s188 = scalar_lea.vmem %s0, %s187
      %s189 = smul.u32 32, %s16
      %s190 = smul.u32 32, %s16
      %p191 = scmp.lt.s32.totalorder %s190, 63
      %s192 = scalar_select %p191, %s190, 63
      %s193 = smul.addr %s192, 4
      %s194 = scalar_lea.vmem %s2, %s193
      %s195 = smul.u32 32, %s16
      %p197 = scmp.eq.s32.totalorder %s16, 0
      // Predicated region
      $region29: #{basic_block_forward.4} parent=27 // pred_check
        %p198 = pneg %p197
      $region30: #{basic_block_forward.4} parent=27 // pred_check_branch
        %200 = sbr.rel (%p198) target = $region32
      $region31: #{basic_block_forward.4} parent=27 // pred_region
        %201 = vst [vmem:[%s3] sm:$0x1] 0.0
        %202 = vst [vmem:[%s4] sm:$0x1] 0.0
      $region32: #{basic_block_forward.4} parent=27 // pred_fallthru
        _
      %v203 = vld [vmem:[%s188] sm:$0xf]
      %v204 = vld [vmem:[%s188 + $0x4] sm:$0xf]
      %v205 = vld [vmem:[%s188 + $0x8] sm:$0xf]
      %v206 = vld [vmem:[%s188 + $0xc] sm:$0xf]
      %v207 = vld [vmem:[%s188 + $0x10] sm:$0xf]
      %v208 = vld [vmem:[%s188 + $0x14] sm:$0xf]
      %v209 = vld [vmem:[%s188 + $0x18] sm:$0xf]
      %v210 = vld [vmem:[%s188 + $0x1c] sm:$0xf]
      %v211 = vld [vmem:[%s188 + $0x20] sm:$0xf]
      %v212 = vld [vmem:[%s188 + $0x24] sm:$0xf]
      %v213 = vld [vmem:[%s188 + $0x28] sm:$0xf]
      %v214 = vld [vmem:[%s188 + $0x2c] sm:$0xf]
      %v215 = vld [vmem:[%s188 + $0x30] sm:$0xf]
      %v216 = vld [vmem:[%s188 + $0x34] sm:$0xf]
      %v217 = vld [vmem:[%s188 + $0x38] sm:$0xf]
      %v218 = vld [vmem:[%s188 + $0x3c] sm:$0xf]
      %v219 = vld [vmem:[%s188 + $0x40] sm:$0xf]
      %v220 = vld [vmem:[%s188 + $0x44] sm:$0xf]
      %v221 = vld [vmem:[%s188 + $0x48] sm:$0xf]
      %v222 = vld [vmem:[%s188 + $0x4c] sm:$0xf]
      %v223 = vld [vmem:[%s188 + $0x50] sm:$0xf]
      %v224 = vld [vmem:[%s188 + $0x54] sm:$0xf]
      %v225 = vld [vmem:[%s188 + $0x58] sm:$0xf]
      %v226 = vld [vmem:[%s188 + $0x5c] sm:$0xf]
      %v227 = vld [vmem:[%s188 + $0x60] sm:$0xf]
      %v228 = vld [vmem:[%s188 + $0x64] sm:$0xf]
      %v229 = vld [vmem:[%s188 + $0x68] sm:$0xf]
      %v230 = vld [vmem:[%s188 + $0x6c] sm:$0xf]
      %v231 = vld [vmem:[%s188 + $0x70] sm:$0xf]
      %v232 = vld [vmem:[%s188 + $0x74] sm:$0xf]
      %v233 = vld [vmem:[%s188 + $0x78] sm:$0xf]
      %v234 = vld [vmem:[%s188 + $0x7c] sm:$0xf]
      %v235 = vld [vmem:[%s1] sm:$0xf]
      %v236 = vld [vmem:[%s1 + $0x4] sm:$0xf]
      %v237 = vld [vmem:[%s1 + $0x8] sm:$0xf]
      %v238 = vld [vmem:[%s1 + $0xc] sm:$0xf]
      %v239 = vld [vmem:[%s1 + $0x10] sm:$0x3]
      %v272 = vunpack.c.l.b16 %v203
      %v273 = vunpack.c.l.b16 %v204
      %v274 = vunpack.c.l.b16 %v205
      %v275 = vunpack.c.l.b16 %v206
      %v276 = vunpack.c.l.b16 %v207
      %v277 = vunpack.c.l.b16 %v208
      %v278 = vunpack.c.l.b16 %v209
      %v279 = vunpack.c.l.b16 %v210
      %v280 = vunpack.c.l.b16 %v211
      %v281 = vunpack.c.l.b16 %v212
      %v282 = vunpack.c.l.b16 %v213
      %v283 = vunpack.c.l.b16 %v214
      %v284 = vunpack.c.l.b16 %v215
      %v285 = vunpack.c.l.b16 %v216
      %v286 = vunpack.c.l.b16 %v217
      %v287 = vunpack.c.l.b16 %v218
      %v288 = vunpack.c.l.b16 %v219
      %v289 = vunpack.c.l.b16 %v220
      %v290 = vunpack.c.l.b16 %v221
      %v291 = vunpack.c.l.b16 %v222
      %v292 = vunpack.c.l.b16 %v223
      %v293 = vunpack.c.l.b16 %v224
      %v294 = vunpack.c.l.b16 %v225
      %v295 = vunpack.c.l.b16 %v226
      %v296 = vunpack.c.l.b16 %v227
      %v297 = vunpack.c.l.b16 %v228
      %v298 = vunpack.c.l.b16 %v229
      %v299 = vunpack.c.l.b16 %v230
      %v300 = vunpack.c.l.b16 %v231
      %v301 = vunpack.c.l.b16 %v232
      %v302 = vunpack.c.l.b16 %v233
      %v303 = vunpack.c.l.b16 %v234
      %v304 = vpack.c.b16 %v273, %v272
      %v305 = vpack.c.b16 %v275, %v274
      %v306 = vpack.c.b16 %v277, %v276
      %v307 = vpack.c.b16 %v279, %v278
      %v308 = vpack.c.b16 %v281, %v280
      %v309 = vpack.c.b16 %v283, %v282
      %v310 = vpack.c.b16 %v285, %v284
      %v311 = vpack.c.b16 %v287, %v286
      %v312 = vpack.c.b16 %v289, %v288
      %v313 = vpack.c.b16 %v291, %v290
      %v314 = vpack.c.b16 %v293, %v292
      %v315 = vpack.c.b16 %v295, %v294
      %v316 = vpack.c.b16 %v297, %v296
      %v317 = vpack.c.b16 %v299, %v298
      %v318 = vpack.c.b16 %v301, %v300
      %v319 = vpack.c.b16 %v303, %v302
      %v325 = vunpack.c.l.b16 %v235
      %v326 = vunpack.c.l.b16 %v236
      %v327 = vunpack.c.l.b16 %v237
      %v328 = vunpack.c.l.b16 %v238
      %v329 = vunpack.c.l.b16 %v239
      %v330 = vpack.c.b16 %v326, %v325
      %v331 = vpack.c.b16 %v328, %v327
      %v332 = vpack.c.b16 %v329, %v329
      %vm335 = vcmask 293888
      %v337 = vsel %vm335, %v304, 0
      %v340 = vsel %vm335, %v305, 0
      %v343 = vsel %vm335, %v306, 0
      %v346 = vsel %vm335, %v307, 0
      %v349 = vsel %vm335, %v308, 0
      %v352 = vsel %vm335, %v309, 0
      %v355 = vsel %vm335, %v310, 0
      %v358 = vsel %vm335, %v311, 0
      %v361 = vsel %vm335, %v312, 0
      %v364 = vsel %vm335, %v313, 0
      %v367 = vsel %vm335, %v314, 0
      %v370 = vsel %vm335, %v315, 0
      %v373 = vsel %vm335, %v316, 0
      %v376 = vsel %vm335, %v317, 0
      %v379 = vsel %vm335, %v318, 0
      %v382 = vsel %vm335, %v319, 0
      %vm384 = vcmask 1041408
      %v386 = vsel %vm384, %v332, 0
      %388 = vmatprep.subr.bf16.mxu0 0
      %389 = vmatpush1.bf16.msra.mxu0 0
      %390 = vmatprep.subr.bf16.mxu0 0
      %391 = vmatpush1.bf16.msra.mxu0 0
      %392 = vmatprep.subr.bf16.mxu0 0
      %393 = vmatpush1.bf16.msra.mxu0 0
      %394 = vmatprep.subr.bf16.mxu0 0
      %395 = vmatpush1.bf16.msra.mxu0 0
      %396 = vmatprep.subr.bf16.mxu0 0
      %397 = vmatpush1.bf16.msra.mxu0 0
      %398 = vmatprep.subr.bf16.mxu0 0
      %399 = vmatpush1.bf16.msra.mxu0 %v386
      %400 = vmatprep.subr.bf16.mxu0 0
      %401 = vmatpush1.bf16.msra.mxu0 %v331
      %402 = vmatprep.subr.bf16.mxu0 0
      %403 = vmatpush1.bf16.msra.mxu0 %v330
      %404 = vmatprep.subr.bf16.mxu0 0
      %405 = vmatpush2.bf16.msra.mxu0 0
      %406 = vmatprep.subr.bf16.mxu0 0
      %407 = vmatpush2.bf16.msra.mxu0 0
      %408 = vmatprep.subr.bf16.mxu0 0
      %409 = vmatpush2.bf16.msra.mxu0 0
      %410 = vmatprep.subr.bf16.mxu0 0
      %411 = vmatpush2.bf16.msra.mxu0 0
      %412 = vmatprep.subr.bf16.mxu0 0
      %413 = vmatpush2.bf16.msra.mxu0 0
      %414 = vmatprep.subr.bf16.mxu0 0
      %415 = vmatpush2.bf16.msra.mxu0 0
      %416 = vmatprep.subr.bf16.mxu0 0
      %417 = vmatpush2.bf16.msra.mxu0 0
      %418 = vmatprep.subr.bf16.mxu0 0
      %419 = vmatpush2.bf16.msra.mxu0 0
      %420 = vmatprep.mubr.bf16.mxu0 0
      %421 = vmatmul.mubr.bf16.gmra.mxu0 %v337
      %v422 = vpop.f32.mrf.mxu0
      %v423 = vadd.f32 0.0, %v422
      %v424 = vpop.f32.mrf.mxu0
      %v425 = vpop.f32.mrf.mxu0
      %v426 = vadd.f32 0.0, %v425
      %v427 = vpop.f32.mrf.mxu0
      %428 = vmatprep.mubr.bf16.mxu0 0
      %429 = vmatmul.mubr.bf16.gmra.mxu0 %v340
      %v430 = vpop.f32.mrf.mxu0
      %v431 = vadd.f32 0.0, %v430
      %v432 = vpop.f32.mrf.mxu0
      %v433 = vpop.f32.mrf.mxu0
      %v434 = vadd.f32 0.0, %v433
      %v435 = vpop.f32.mrf.mxu0
      %436 = vmatprep.mubr.bf16.mxu0 0
      %437 = vmatmul.mubr.bf16.gmra.mxu0 %v343
      %v438 = vpop.f32.mrf.mxu0
      %v439 = vadd.f32 0.0, %v438
      %v440 = vpop.f32.mrf.mxu0
      %v441 = vpop.f32.mrf.mxu0
      %v442 = vadd.f32 0.0, %v441
      %v443 = vpop.f32.mrf.mxu0
      %444 = vmatprep.mubr.bf16.mxu0 0
      %445 = vmatmul.mubr.bf16.gmra.mxu0 %v346
      %v446 = vpop.f32.mrf.mxu0
      %v447 = vadd.f32 0.0, %v446
      %v448 = vpop.f32.mrf.mxu0
      %v449 = vpop.f32.mrf.mxu0
      %v450 = vadd.f32 0.0, %v449
      %v451 = vpop.f32.mrf.mxu0
      %452 = vmatprep.mubr.bf16.mxu0 0
      %453 = vmatmul.mubr.bf16.gmra.mxu0 %v349
      %v454 = vpop.f32.mrf.mxu0
      %v455 = vadd.f32 0.0, %v454
      %v456 = vpop.f32.mrf.mxu0
      %v457 = vpop.f32.mrf.mxu0
      %v458 = vadd.f32 0.0, %v457
      %v459 = vpop.f32.mrf.mxu0
      %460 = vmatprep.mubr.bf16.mxu0 0
      %461 = vmatmul.mubr.bf16.gmra.mxu0 %v352
      %v462 = vpop.f32.mrf.mxu0
      %v463 = vadd.f32 0.0, %v462
      %v464 = vpop.f32.mrf.mxu0
      %v465 = vpop.f32.mrf.mxu0
      %v466 = vadd.f32 0.0, %v465
      %v467 = vpop.f32.mrf.mxu0
      %468 = vmatprep.mubr.bf16.mxu0 0
      %469 = vmatmul.mubr.bf16.gmra.mxu0 %v355
      %v470 = vpop.f32.mrf.mxu0
      %v471 = vadd.f32 0.0, %v470
      %v472 = vpop.f32.mrf.mxu0
      %v473 = vpop.f32.mrf.mxu0
      %v474 = vadd.f32 0.0, %v473
      %v475 = vpop.f32.mrf.mxu0
      %476 = vmatprep.mubr.bf16.mxu0 0
      %477 = vmatmul.mubr.bf16.gmra.mxu0 %v358
      %v478 = vpop.f32.mrf.mxu0
      %v479 = vadd.f32 0.0, %v478
      %v480 = vpop.f32.mrf.mxu0
      %v481 = vpop.f32.mrf.mxu0
      %v482 = vadd.f32 0.0, %v481
      %v483 = vpop.f32.mrf.mxu0
      %484 = vmatprep.mubr.bf16.mxu0 0
      %485 = vmatmul.mubr.bf16.gmra.mxu0 %v361
      %v486 = vpop.f32.mrf.mxu0
      %v487 = vadd.f32 0.0, %v486
      %v488 = vpop.f32.mrf.mxu0
      %v489 = vpop.f32.mrf.mxu0
      %v490 = vadd.f32 0.0, %v489
      %v491 = vpop.f32.mrf.mxu0
      %492 = vmatprep.mubr.bf16.mxu0 0
      %493 = vmatmul.mubr.bf16.gmra.mxu0 %v364
      %v494 = vpop.f32.mrf.mxu0
      %v495 = vadd.f32 0.0, %v494
      %v496 = vpop.f32.mrf.mxu0
      %v497 = vpop.f32.mrf.mxu0
      %v498 = vadd.f32 0.0, %v497
      %v499 = vpop.f32.mrf.mxu0
      %500 = vmatprep.mubr.bf16.mxu0 0
      %501 = vmatmul.mubr.bf16.gmra.mxu0 %v367
      %v502 = vpop.f32.mrf.mxu0
      %v503 = vadd.f32 0.0, %v502
      %v504 = vpop.f32.mrf.mxu0
      %v505 = vpop.f32.mrf.mxu0
      %v506 = vadd.f32 0.0, %v505
      %v507 = vpop.f32.mrf.mxu0
      %508 = vmatprep.mubr.bf16.mxu0 0
      %509 = vmatmul.mubr.bf16.gmra.mxu0 %v370
      %v510 = vpop.f32.mrf.mxu0
      %v511 = vadd.f32 0.0, %v510
      %v512 = vpop.f32.mrf.mxu0
      %v513 = vpop.f32.mrf.mxu0
      %v514 = vadd.f32 0.0, %v513
      %v515 = vpop.f32.mrf.mxu0
      %516 = vmatprep.mubr.bf16.mxu0 0
      %517 = vmatmul.mubr.bf16.gmra.mxu0 %v373
      %v518 = vpop.f32.mrf.mxu0
      %v519 = vadd.f32 0.0, %v518
      %v520 = vpop.f32.mrf.mxu0
      %v521 = vpop.f32.mrf.mxu0
      %v522 = vadd.f32 0.0, %v521
      %v523 = vpop.f32.mrf.mxu0
      %524 = vmatprep.mubr.bf16.mxu0 0
      %525 = vmatmul.mubr.bf16.gmra.mxu0 %v376
      %v526 = vpop.f32.mrf.mxu0
      %v527 = vadd.f32 0.0, %v526
      %v528 = vpop.f32.mrf.mxu0
      %v529 = vpop.f32.mrf.mxu0
      %v530 = vadd.f32 0.0, %v529
      %v531 = vpop.f32.mrf.mxu0
      %532 = vmatprep.mubr.bf16.mxu0 0
      %533 = vmatmul.mubr.bf16.gmra.mxu0 %v379
      %v534 = vpop.f32.mrf.mxu0
      %v535 = vadd.f32 0.0, %v534
      %v536 = vpop.f32.mrf.mxu0
      %v537 = vpop.f32.mrf.mxu0
      %v538 = vadd.f32 0.0, %v537
      %v539 = vpop.f32.mrf.mxu0
      %540 = vmatprep.mubr.bf16.mxu0 0
      %541 = vmatmul.mubr.bf16.gmra.mxu0 %v382
      %v542 = vpop.f32.mrf.mxu0
      %v543 = vadd.f32 0.0, %v542
      %v544 = vpop.f32.mrf.mxu0
      %v545 = vpop.f32.mrf.mxu0
      %v546 = vadd.f32 0.0, %v545
      %v547 = vpop.f32.mrf.mxu0
      %548 = vdwg.mxu0
      %v549 = vpack.c.bf16 %v426, %v423
      %v550 = vpack.c.bf16 %v434, %v431
      %v551 = vpack.c.bf16 %v442, %v439
      %v552 = vpack.c.bf16 %v450, %v447
      %v553 = vpack.c.bf16 %v458, %v455
      %v554 = vpack.c.bf16 %v466, %v463
      %v555 = vpack.c.bf16 %v474, %v471
      %v556 = vpack.c.bf16 %v482, %v479
      %v557 = vpack.c.bf16 %v490, %v487
      %v558 = vpack.c.bf16 %v498, %v495
      %v559 = vpack.c.bf16 %v506, %v503
      %v560 = vpack.c.bf16 %v514, %v511
      %v561 = vpack.c.bf16 %v522, %v519
      %v562 = vpack.c.bf16 %v530, %v527
      %v563 = vpack.c.bf16 %v538, %v535
      %v564 = vpack.c.bf16 %v546, %v543
      %v581 = vunpack.c.l.b16 %v549
      %v582 = vunpack.c.h.b16 %v549
      %v583 = vunpack.c.l.b16 %v550
      %v584 = vunpack.c.h.b16 %v550
      %v585 = vunpack.c.l.b16 %v551
      %v586 = vunpack.c.h.b16 %v551
      %v587 = vunpack.c.l.b16 %v552
      %v588 = vunpack.c.h.b16 %v552
      %v589 = vunpack.c.l.b16 %v553
      %v590 = vunpack.c.h.b16 %v553
      %v591 = vunpack.c.l.b16 %v554
      %v592 = vunpack.c.h.b16 %v554
      %v593 = vunpack.c.l.b16 %v555
      %v594 = vunpack.c.h.b16 %v555
      %v595 = vunpack.c.l.b16 %v556
      %v596 = vunpack.c.h.b16 %v556
      %v597 = vunpack.c.l.b16 %v557
      %v598 = vunpack.c.h.b16 %v557
      %v599 = vunpack.c.l.b16 %v558
      %v600 = vunpack.c.h.b16 %v558
      %v601 = vunpack.c.l.b16 %v559
      %v602 = vunpack.c.h.b16 %v559
      %v603 = vunpack.c.l.b16 %v560
      %v604 = vunpack.c.h.b16 %v560
      %v605 = vunpack.c.l.b16 %v561
      %v606 = vunpack.c.h.b16 %v561
      %v607 = vunpack.c.l.b16 %v562
      %v608 = vunpack.c.h.b16 %v562
      %v609 = vunpack.c.l.b16 %v563
      %v610 = vunpack.c.h.b16 %v563
      %v611 = vunpack.c.l.b16 %v564
      %v612 = vunpack.c.h.b16 %v564
      %v613 = vpack.c.b16 %v581, %v581
      %v614 = vpack.c.b16 %v582, %v582
      %v615 = vpack.c.b16 %v583, %v583
      %v616 = vpack.c.b16 %v584, %v584
      %v617 = vpack.c.b16 %v585, %v585
      %v618 = vpack.c.b16 %v586, %v586
      %v619 = vpack.c.b16 %v587, %v587
      %v620 = vpack.c.b16 %v588, %v588
      %v621 = vpack.c.b16 %v589, %v589
      %v622 = vpack.c.b16 %v590, %v590
      %v623 = vpack.c.b16 %v591, %v591
      %v624 = vpack.c.b16 %v592, %v592
      %v625 = vpack.c.b16 %v593, %v593
      %v626 = vpack.c.b16 %v594, %v594
      %v627 = vpack.c.b16 %v595, %v595
      %v628 = vpack.c.b16 %v596, %v596
      %v629 = vpack.c.b16 %v597, %v597
      %v630 = vpack.c.b16 %v598, %v598
      %v631 = vpack.c.b16 %v599, %v599
      %v632 = vpack.c.b16 %v600, %v600
      %v633 = vpack.c.b16 %v601, %v601
      %v634 = vpack.c.b16 %v602, %v602
      %v635 = vpack.c.b16 %v603, %v603
      %v636 = vpack.c.b16 %v604, %v604
      %v637 = vpack.c.b16 %v605, %v605
      %v638 = vpack.c.b16 %v606, %v606
      %v639 = vpack.c.b16 %v607, %v607
      %v640 = vpack.c.b16 %v608, %v608
      %v641 = vpack.c.b16 %v609, %v609
      %v642 = vpack.c.b16 %v610, %v610
      %v643 = vpack.c.b16 %v611, %v611
      %v644 = vpack.c.b16 %v612, %v612
      %677 = vst [vmem:[%s194] sm:$0xf] %v613
      %678 = vst [vmem:[%s194 + $0x4] sm:$0xf] %v614
      %679 = vst [vmem:[%s194 + $0x8] sm:$0xf] %v615
      %680 = vst [vmem:[%s194 + $0xc] sm:$0xf] %v616
      %681 = vst [vmem:[%s194 + $0x10] sm:$0xf] %v617
      %682 = vst [vmem:[%s194 + $0x14] sm:$0xf] %v618
      %683 = vst [vmem:[%s194 + $0x18] sm:$0xf] %v619
      %684 = vst [vmem:[%s194 + $0x1c] sm:$0xf] %v620
      %685 = vst [vmem:[%s194 + $0x20] sm:$0xf] %v621
      %686 = vst [vmem:[%s194 + $0x24] sm:$0xf] %v622
      %687 = vst [vmem:[%s194 + $0x28] sm:$0xf] %v623
      %688 = vst [vmem:[%s194 + $0x2c] sm:$0xf] %v624
      %689 = vst [vmem:[%s194 + $0x30] sm:$0xf] %v625
      %690 = vst [vmem:[%s194 + $0x34] sm:$0xf] %v626
      %691 = vst [vmem:[%s194 + $0x38] sm:$0xf] %v627
      %692 = vst [vmem:[%s194 + $0x3c] sm:$0xf] %v628
      %693 = vst [vmem:[%s194 + $0x40] sm:$0xf] %v629
      %694 = vst [vmem:[%s194 + $0x44] sm:$0xf] %v630
      %695 = vst [vmem:[%s194 + $0x48] sm:$0xf] %v631
      %696 = vst [vmem:[%s194 + $0x4c] sm:$0xf] %v632
      %697 = vst [vmem:[%s194 + $0x50] sm:$0xf] %v633
      %698 = vst [vmem:[%s194 + $0x54] sm:$0xf] %v634
      %699 = vst [vmem:[%s194 + $0x58] sm:$0xf] %v635
      %700 = vst [vmem:[%s194 + $0x5c] sm:$0xf] %v636
      %701 = vst [vmem:[%s194 + $0x60] sm:$0xf] %v637
      %702 = vst [vmem:[%s194 + $0x64] sm:$0xf] %v638
      %703 = vst [vmem:[%s194 + $0x68] sm:$0xf] %v639
      %704 = vst [vmem:[%s194 + $0x6c] sm:$0xf] %v640
      %705 = vst [vmem:[%s194 + $0x70] sm:$0xf] %v641
      %706 = vst [vmem:[%s194 + $0x74] sm:$0xf] %v642
      %707 = vst [vmem:[%s194 + $0x78] sm:$0xf] %v643
      %708 = vst [vmem:[%s194 + $0x7c] sm:$0xf] %v644
      %v709 = vld [vmem:[%s3] sm:$0x1]
      %v710 = vadd.f32 %v423, %v426
      %v711 = vadd.f32 %v710, %v431
      %v712 = vadd.f32 %v711, %v434
      %v713 = vadd.f32 %v712, %v439
      %v714 = vadd.f32 %v713, %v442
      %v715 = vadd.f32 %v714, %v447
      %v716 = vadd.f32 %v715, %v450
      %v717 = vadd.f32 %v716, %v455
      %v718 = vadd.f32 %v717, %v458
      %v719 = vadd.f32 %v718, %v463
      %v720 = vadd.f32 %v719, %v466
      %v721 = vadd.f32 %v720, %v471
      %v722 = vadd.f32 %v721, %v474
      %v723 = vadd.f32 %v722, %v479
      %v724 = vadd.f32 %v723, %v482
      %v725 = vadd.f32 %v724, %v487
      %v726 = vadd.f32 %v725, %v490
      %v727 = vadd.f32 %v726, %v495
      %v728 = vadd.f32 %v727, %v498
      %v729 = vadd.f32 %v728, %v503
      %v730 = vadd.f32 %v729, %v506
      %v731 = vadd.f32 %v730, %v511
      %v732 = vadd.f32 %v731, %v514
      %v733 = vadd.f32 %v732, %v519
      %v734 = vadd.f32 %v733, %v522
      %v735 = vadd.f32 %v734, %v527
      %v736 = vadd.f32 %v735, %v530
      %v737 = vadd.f32 %v736, %v535
      %v738 = vadd.f32 %v737, %v538
      %v739 = vadd.f32 %v738, %v543
      %v740 = vadd.f32 %v739, %v546
      %v741 = vrot.slane %v740, 4
      %v742 = vadd.f32 %v740, %v741
      %v743 = vrot.slane %v742, 2
      %v744 = vadd.f32 %v742, %v743
      %v745 = vrot.slane %v744, 1
      %v746 = vadd.f32 %v744, %v745
      %v747 = vadd.f32 %v709, %v746
      %748 = vst [vmem:[%s3] sm:$0x1] %v747
      %v749 = vld [vmem:[%s4] sm:$0x1]
      %v750 = vmul.f32 %v423, %v423
      %v751 = vmul.f32 %v426, %v426
      %v752 = vmul.f32 %v431, %v431
      %v753 = vmul.f32 %v434, %v434
      %v754 = vmul.f32 %v439, %v439
      %v755 = vmul.f32 %v442, %v442
      %v756 = vmul.f32 %v447, %v447
      %v757 = vmul.f32 %v450, %v450
      %v758 = vmul.f32 %v455, %v455
      %v759 = vmul.f32 %v458, %v458
      %v760 = vmul.f32 %v463, %v463
      %v761 = vmul.f32 %v466, %v466
      %v762 = vmul.f32 %v471, %v471
      %v763 = vmul.f32 %v474, %v474
      %v764 = vmul.f32 %v479, %v479
      %v765 = vmul.f32 %v482, %v482
      %v766 = vmul.f32 %v487, %v487
      %v767 = vmul.f32 %v490, %v490
      %v768 = vmul.f32 %v495, %v495
      %v769 = vmul.f32 %v498, %v498
      %v770 = vmul.f32 %v503, %v503
      %v771 = vmul.f32 %v506, %v506
      %v772 = vmul.f32 %v511, %v511
      %v773 = vmul.f32 %v514, %v514
      %v774 = vmul.f32 %v519, %v519
      %v775 = vmul.f32 %v522, %v522
      %v776 = vmul.f32 %v527, %v527
      %v777 = vmul.f32 %v530, %v530
      %v778 = vmul.f32 %v535, %v535
      %v779 = vmul.f32 %v538, %v538
      %v780 = vmul.f32 %v543, %v543
      %v781 = vmul.f32 %v546, %v546
      %v782 = vadd.f32 %v750, %v751
      %v783 = vadd.f32 %v782, %v752
      %v784 = vadd.f32 %v783, %v753
      %v785 = vadd.f32 %v784, %v754
      %v786 = vadd.f32 %v785, %v755
      %v787 = vadd.f32 %v786, %v756
      %v788 = vadd.f32 %v787, %v757
      %v789 = vadd.f32 %v788, %v758
      %v790 = vadd.f32 %v789, %v759
      %v791 = vadd.f32 %v790, %v760
      %v792 = vadd.f32 %v791, %v761
      %v793 = vadd.f32 %v792, %v762
      %v794 = vadd.f32 %v793, %v763
      %v795 = vadd.f32 %v794, %v764
      %v796 = vadd.f32 %v795, %v765
      %v797 = vadd.f32 %v796, %v766
      %v798 = vadd.f32 %v797, %v767
      %v799 = vadd.f32 %v798, %v768
      %v800 = vadd.f32 %v799, %v769
      %v801 = vadd.f32 %v800, %v770
      %v802 = vadd.f32 %v801, %v771
      %v803 = vadd.f32 %v802, %v772
      %v804 = vadd.f32 %v803, %v773
      %v805 = vadd.f32 %v804, %v774
      %v806 = vadd.f32 %v805, %v775
      %v807 = vadd.f32 %v806, %v776
      %v808 = vadd.f32 %v807, %v777
      %v809 = vadd.f32 %v808, %v778
      %v810 = vadd.f32 %v809, %v779
      %v811 = vadd.f32 %v810, %v780
      %v812 = vadd.f32 %v811, %v781
      %v813 = vrot.slane %v812, 4
      %v814 = vadd.f32 %v812, %v813
      %v815 = vrot.slane %v814, 2
      %v816 = vadd.f32 %v814, %v815
      %v817 = vrot.slane %v816, 1
      %v818 = vadd.f32 %v816, %v817
      %v819 = vadd.f32 %v749, %v818
      %820 = vst [vmem:[%s4] sm:$0x1] %v819
      %s821 = smul.u32 32, %s16
      %p822 = scmp.lt.s32.totalorder %s821, 63
      %s823 = scalar_select %p822, %s821, 63
      %s824 = smul.addr %s823, 4
      %s825 = scalar_lea.vmem %s2, %s824
      // Predicated region
      $region33: #{basic_block_forward.4} parent=27 // pred_check
        %p826 = pneg %p81
      $region34: #{basic_block_forward.4} parent=27 // pred_check_branch
        %828 = sbr.rel (%p826) target = $region36
      $region35: #{basic_block_forward.4} parent=27 // pred_region
        %s829 = smul.u32 32, %s16
      $region36: #{basic_block_forward.4} parent=27 // pred_fallthru
        _
      // Predicated region
      $region37: #{basic_block_forward.4} parent=27 // pred_check
        %p830 = pneg %p102
      $region38: #{basic_block_forward.4} parent=27 // pred_check_branch
        %832 = sbr.rel (%p830) target = $region40
      $region39: #{basic_block_forward.4} parent=27 // pred_region
        _
      $region40: #{basic_block_forward.4} parent=27 // pred_fallthru
        _
      // Predicated region
      $region41: #{basic_block_forward.4} parent=27 // pred_check
        %p833 = pneg %p123
      $region42: #{basic_block_forward.4} parent=27 // pred_check_branch
        %835 = sbr.rel (%p833) target = $region44
      $region43: #{basic_block_forward.4} parent=27 // pred_region
        _
      $region44: #{basic_block_forward.4} parent=27 // pred_fallthru
        _
      // Predicated region
      $region45: #{basic_block_forward.4} parent=27 // pred_check
        %p836 = pneg %p102
      $region46: #{basic_block_forward.4} parent=27 // pred_check_branch
        %838 = sbr.rel (%p836) target = $region48
      $region47: #{basic_block_forward.4} parent=27 // pred_region
        _
      $region48: #{basic_block_forward.4} parent=27 // pred_fallthru
        _
      // Predicated region
      $region49: #{basic_block_forward.4} parent=27 // pred_check
        %p839 = pneg %p123
      $region50: #{basic_block_forward.4} parent=27 // pred_check_branch
        %841 = sbr.rel (%p839) target = $region52
      $region51: #{basic_block_forward.4} parent=27 // pred_region
        _
      $region52: #{basic_block_forward.4} parent=27 // pred_fallthru
        _
    $region28: #{basic_block_forward.4} parent=5 // pred_fallthru
      _
    %p842 = scmp.le.s32.totalorder 2, %s11
    // Predicated region
    $region53: #{basic_block_forward.4} parent=5 // pred_check
      %p843 = pneg %p842
    $region54: #{basic_block_forward.4} parent=5 // pred_check_branch
      %845 = sbr.rel (%p843) target = $region56
    $region55: #{basic_block_forward.4} parent=5 // pred_region
      %s846 = ssub.s32 %s11, 2
      // Predicated region
      $region57: #{basic_block_forward.4} parent=55 // pred_check
        %p847 = pneg %p87
      $region58: #{basic_block_forward.4} parent=55 // pred_check_branch
        %849 = sbr.rel (%p847) target = $region60
      $region59: #{basic_block_forward.4} parent=55 // pred_region
        %s850 = smul.u32 32, %s17
        %p851 = scmp.lt.s32.totalorder %s850, 63
        %s852 = scalar_select %p851, %s850, 63
        %s853 = smul.addr %s852, 4
        %s854 = scalar_lea.vmem %s2, %s853
      $region60: #{basic_block_forward.4} parent=55 // pred_fallthru
        _
    $region56: #{basic_block_forward.4} parent=5 // pred_fallthru
      _
  $region6: #{basic_block_forward.4} parent=0 // loop_footer
    %s15 = sadd.s32 1, %s11
  $region7: #{basic_block_forward.4} parent=0 // loop_footer_branch
    %10 = sbr.rel target = $region3
  $region8: #{basic_block_forward.4} parent=0 // loop_exit
    _

// kernel: basic_block_forward.7
$region0: #{basic_block_forward.7}
  #allocation0 [shape = 'u32[]', space=smem, size = 0x4, offset = 0x4, fixed_abs, tag = 'smem constant byte address 0x4 - core index']
  #allocation1 [shape = 'u32[144,128]{1,0:T(1,128)}', space=vmem, size = 0x12000, scoped, tag = 'internal scratch']
  %s0 = inlined_call_operand.vmem [shape: bf16[512,128], index: 0, kind: input, shape index: {}]
  %s1 = inlined_call_operand.vmem [shape: bf16[512,4], index: 1, kind: input, shape index: {}]
  %s2 = inlined_call_operand.vmem [shape: bf16[4,128], index: 2, kind: input, shape index: {}]
  %s3 = inlined_call_operand.vmem [shape: f32[1,128], index: 3, kind: input, shape index: {}]
  %s4 = inlined_call_operand.vmem [shape: f32[1,128], index: 4, kind: input, shape index: {}]
  %s5 = inlined_call_operand.vmem [shape: f32[512,128], index: 5, kind: output, shape index: {}]
  %s6 = sld [smem:[#allocation0]]
  $region53: #{basic_block_forward.7} parent=0
    _
  %s8 = ssub.s32 1, %s6
  %s9 = scalar_select 0, %s8, %s6
  loop: start=0, step=1, limit=4
  $region2: #{basic_block_forward.7} parent=0 // loop_pre_header
    _
  $region3: #{basic_block_forward.7} parent=0 // loop_header
    %s11 = sphi 0, %s15
    %p12 = scmp.ge.s32.totalorder %s11, 4
    %s21 = sphi 0, %s23
    %s24 = sphi 0, %s21
    %s25 = sphi 0, %s24
    %s41 = sphi 0, %s25
    %s47 = sphi 0, %s49
    %s50 = sphi 0, %s47
    %s51 = sphi 0, %s50
    %s67 = sphi 0, %s51
    %s71 = sphi 0, %s71
    %s73 = sphi 0, %s71
    %s74 = sphi 0, %s73
    %s88 = sphi 0, %s74
    %s92 = sphi 0, %s92
    %s94 = sphi 0, %s92
    %s95 = sphi 0, %s94
    %s109 = sphi 0, %s95
    %s113 = sphi 0, %s113
    %s115 = sphi 0, %s113
    %s116 = sphi 0, %s115
    %s130 = sphi 0, %s116
    %s136 = sphi 0, %s138
    %s139 = sphi 0, %s136
    %s140 = sphi 0, %s139
    %s156 = sphi 0, %s140
  $region4: #{basic_block_forward.7} parent=0 // loop_header_branch
    %14 = sbr.rel (%p12) target = $region8
  $region5: #{basic_block_forward.7} parent=0 // loop_body
    %s16 = ssub.s32 %s11, 1
    %s17 = ssub.s32 %s11, 2
    %s18 = sadd.s32 %s11, 1
    %s19 = ssub.s32 %s11, %s18
    %p20 = scmp.eq.s32.totalorder %s19, 0
    %s22 = sadd.s32 %s21, 1
    %s23 = scalar_select %p20, %s21, %s22
    %p26 = pneg %p20
    %p27 = scmp.eq.s32.totalorder %s11, 1
    %p28 = por %p26, %p27
    %p29 = scmp.ne.s32.totalorder %s21, %s24
    %p30 = scmp.eq.s32.totalorder %s11, 0
    %p31 = por %p29, %p30
    %p32 = scmp.ne.s32.totalorder %s21, %s24
    %p33 = scmp.eq.s32.totalorder %s16, 1
    %p34 = por %p32, %p33
    %p35 = scmp.ne.s32.totalorder %s24, %s25
    %p36 = scmp.eq.s32.totalorder %s16, 0
    %p37 = por %p35, %p36
    %p38 = scmp.ne.s32.totalorder %s24, %s25
    %p39 = scmp.eq.s32.totalorder %s17, 1
    %p40 = por %p38, %p39
    %p42 = scmp.ne.s32.totalorder %s25, %s41
    %p43 = scmp.eq.s32.totalorder %s17, 0
    %p44 = por %p42, %p43
    %s45 = ssub.s32 %s11, %s18
    %p46 = scmp.eq.s32.totalorder %s45, 0
    %s48 = sadd.s32 %s47, 1
    %s49 = scalar_select %p46, %s47, %s48
    %p52 = pneg %p46
    %p53 = scmp.eq.s32.totalorder %s11, 1
    %p54 = por %p52, %p53
    %p55 = scmp.ne.s32.totalorder %s47, %s50
    %p56 = scmp.eq.s32.totalorder %s11, 0
    %p57 = por %p55, %p56
    %p58 = scmp.ne.s32.totalorder %s47, %s50
    %p59 = scmp.eq.s32.totalorder %s16, 1
    %p60 = por %p58, %p59
    %p61 = scmp.ne.s32.totalorder %s50, %s51
    %p62 = scmp.eq.s32.totalorder %s16, 0
    %p63 = por %p61, %p62
    %p64 = scmp.ne.s32.totalorder %s50, %s51
    %p65 = scmp.eq.s32.totalorder %s17, 1
    %p66 = por %p64, %p65
    %p68 = scmp.ne.s32.totalorder %s51, %s67
    %p69 = scmp.eq.s32.totalorder %s17, 0
    %p70 = por %p68, %p69
    %s72 = sadd.s32 %s71, 1
    %p75 = scmp.eq.s32.totalorder %s11, 1
    %p76 = scmp.ne.s32.totalorder %s71, %s73
    %p77 = scmp.eq.s32.totalorder %s11, 0
    %p78 = por %p76, %p77
    %p79 = scmp.ne.s32.totalorder %s71, %s73
    %p80 = scmp.eq.s32.totalorder %s16, 1
    %p81 = por %p79, %p80
    %p82 = scmp.ne.s32.totalorder %s73, %s74
    %p83 = scmp.eq.s32.totalorder %s16, 0
    %p84 = por %p82, %p83
    %p85 = scmp.ne.s32.totalorder %s73, %s74
    %p86 = scmp.eq.s32.totalorder %s17, 1
    %p87 = por %p85, %p86
    %p89 = scmp.ne.s32.totalorder %s74, %s88
    %p90 = scmp.eq.s32.totalorder %s17, 0
    %p91 = por %p89, %p90
    %s93 = sadd.s32 %s92, 1
    %p96 = scmp.eq.s32.totalorder %s11, 1
    %p97 = scmp.ne.s32.totalorder %s92, %s94
    %p98 = scmp.eq.s32.totalorder %s11, 0
    %p99 = por %p97, %p98
    %p100 = scmp.ne.s32.totalorder %s92, %s94
    %p101 = scmp.eq.s32.totalorder %s16, 1
    %p102 = por %p100, %p101
    %p103 = scmp.ne.s32.totalorder %s94, %s95
    %p104 = scmp.eq.s32.totalorder %s16, 0
    %p105 = por %p103, %p104
    %p106 = scmp.ne.s32.totalorder %s94, %s95
    %p107 = scmp.eq.s32.totalorder %s17, 1
    %p108 = por %p106, %p107
    %p110 = scmp.ne.s32.totalorder %s95, %s109
    %p111 = scmp.eq.s32.totalorder %s17, 0
    %p112 = por %p110, %p111
    %s114 = sadd.s32 %s113, 1
    %p117 = scmp.eq.s32.totalorder %s11, 1
    %p118 = scmp.ne.s32.totalorder %s113, %s115
    %p119 = scmp.eq.s32.totalorder %s11, 0
    %p120 = por %p118, %p119
    %p121 = scmp.ne.s32.totalorder %s113, %s115
    %p122 = scmp.eq.s32.totalorder %s16, 1
    %p123 = por %p121, %p122
    %p124 = scmp.ne.s32.totalorder %s115, %s116
    %p125 = scmp.eq.s32.totalorder %s16, 0
    %p126 = por %p124, %p125
    %p127 = scmp.ne.s32.totalorder %s115, %s116
    %p128 = scmp.eq.s32.totalorder %s17, 1
    %p129 = por %p127, %p128
    %p131 = scmp.ne.s32.totalorder %s116, %s130
    %p132 = scmp.eq.s32.totalorder %s17, 0
    %p133 = por %p131, %p132
    %s134 = ssub.s32 %s11, %s18
    %p135 = scmp.eq.s32.totalorder %s134, 0
    %s137 = sadd.s32 %s136, 1
    %s138 = scalar_select %p135, %s136, %s137
    %p141 = pneg %p135
    %p142 = scmp.eq.s32.totalorder %s11, 1
    %p143 = por %p141, %p142
    %p144 = scmp.ne.s32.totalorder %s136, %s139
    %p145 = scmp.eq.s32.totalorder %s11, 0
    %p146 = por %p144, %p145
    %p147 = scmp.ne.s32.totalorder %s136, %s139
    %p148 = scmp.eq.s32.totalorder %s16, 1
    %p149 = por %p147, %p148
    %p150 = scmp.ne.s32.totalorder %s139, %s140
    %p151 = scmp.eq.s32.totalorder %s16, 0
    %p152 = por %p150, %p151
    %p153 = scmp.ne.s32.totalorder %s139, %s140
    %p154 = scmp.eq.s32.totalorder %s17, 1
    %p155 = por %p153, %p154
    %p157 = scmp.ne.s32.totalorder %s140, %s156
    %p158 = scmp.eq.s32.totalorder %s17, 0
    %p159 = por %p157, %p158
    %p160 = scmp.le.s32.totalorder 1, %s11
    %p161 = scmp.lt.s32.totalorder %s11, 3
    %p162 = pnand %p160, %p161
    %p163 = pneg %p162
    // Predicated region
    $region9: #{basic_block_forward.7} parent=5 // pred_check
      _
    $region10: #{basic_block_forward.7} parent=5 // pred_check_branch
      %165 = sbr.rel (%p162) target = $region12
    $region11: #{basic_block_forward.7} parent=5 // pred_region
      %s166 = ssub.s32 %s11, 1
      // Predicated region
      $region13: #{basic_block_forward.7} parent=11 // pred_check
        %p167 = pneg %p84
      $region14: #{basic_block_forward.7} parent=11 // pred_check_branch
        %169 = sbr.rel (%p167) target = $region16
      $region15: #{basic_block_forward.7} parent=11 // pred_region
        _
      $region16: #{basic_block_forward.7} parent=11 // pred_fallthru
        _
      // Predicated region
      $region17: #{basic_block_forward.7} parent=11 // pred_check
        %p170 = pneg %p105
      $region18: #{basic_block_forward.7} parent=11 // pred_check_branch
        %172 = sbr.rel (%p170) target = $region20
      $region19: #{basic_block_forward.7} parent=11 // pred_region
        _
      $region20: #{basic_block_forward.7} parent=11 // pred_fallthru
        _
      // Predicated region
      $region21: #{basic_block_forward.7} parent=11 // pred_check
        %p173 = pneg %p126
      $region22: #{basic_block_forward.7} parent=11 // pred_check_branch
        %175 = sbr.rel (%p173) target = $region24
      $region23: #{basic_block_forward.7} parent=11 // pred_region
        _
      $region24: #{basic_block_forward.7} parent=11 // pred_fallthru
        _
    $region12: #{basic_block_forward.7} parent=5 // pred_fallthru
      _
    %p176 = scmp.lt.s32.totalorder %s11, 2
    // Predicated region
    $region25: #{basic_block_forward.7} parent=5 // pred_check
      %p177 = pneg %p176
    $region26: #{basic_block_forward.7} parent=5 // pred_check_branch
      %179 = sbr.rel (%p177) target = $region28
    $region27: #{basic_block_forward.7} parent=5 // pred_region
      // Predicated region
      $region29: #{basic_block_forward.7} parent=27 // pred_check
        %p180 = pneg %p31
      $region30: #{basic_block_forward.7} parent=27 // pred_check_branch
        %182 = sbr.rel (%p180) target = $region32
      $region31: #{basic_block_forward.7} parent=27 // pred_region
        %s183 = smul.u32 32, %s11
        %p184 = scmp.lt.s32.totalorder %s183, 63
        %s185 = scalar_select %p184, %s183, 63
        %s186 = smul.addr %s185, 4
        %s187 = scalar_lea.vmem %s0, %s186
        %s188 = smul.u32 32, %s11
      $region32: #{basic_block_forward.7} parent=27 // pred_fallthru
        _
      // Predicated region
      $region33: #{basic_block_forward.7} parent=27 // pred_check
        %p189 = pneg %p57
      $region34: #{basic_block_forward.7} parent=27 // pred_check_branch
        %191 = sbr.rel (%p189) target = $region36
      $region35: #{basic_block_forward.7} parent=27 // pred_region
        %s192 = smul.u32 32, %s11
        %p193 = scmp.lt.s32.totalorder %s192, 63
        %s194 = scalar_select %p193, %s192, 63
        %s195 = smul.addr %s194, 4
        %s196 = scalar_lea.vmem %s1, %s195
        %s197 = smul.u32 32, %s11
      $region36: #{basic_block_forward.7} parent=27 // pred_fallthru
        _
    $region28: #{basic_block_forward.7} parent=5 // pred_fallthru
      _
    %p198 = scmp.le.s32.totalorder 1, %s11
    %p199 = scmp.lt.s32.totalorder %s11, 3
    %p200 = pnand %p198, %p199
    %p201 = pneg %p200
    // Predicated region
    $region37: #{basic_block_forward.7} parent=5 // pred_check
      _
    $region38: #{basic_block_forward.7} parent=5 // pred_check_branch
      %203 = sbr.rel (%p200) target = $region40
    $region39: #{basic_block_forward.7} parent=5 // pred_region
      %s204 = ssub.s32 %s11, 1
      %s205 = smul.u32 32, %s16
      %p206 = scmp.lt.s32.totalorder %s205, 63
      %s207 = scalar_select %p206, %s205, 63
      %s208 = smul.addr %s207, 4
      %s209 = scalar_lea.vmem %s0, %s208
      %p210 = pneg %p37
      %p211 = pneg %p34
      %s212 = smul.u32 32, %s16
      %p213 = scmp.lt.s32.totalorder %s212, 63
      %s214 = scalar_select %p213, %s212, 63
      %s215 = smul.addr %s214, 4
      %s216 = scalar_lea.vmem %s1, %s215
      %p217 = pneg %p63
      %p218 = pneg %p60
      %p219 = pneg %p84
      %p220 = pneg %p81
      %p221 = pneg %p105
      %p222 = pneg %p102
      %p223 = pneg %p126
      %p224 = pneg %p123
      %p225 = pneg %p152
      %p226 = pneg %p149
      %s227 = smul.u32 32, %s16
      %p228 = scmp.lt.s32.totalorder %s227, 63
      %s229 = scalar_select %p228, %s227, 63
      %s230 = smul.addr %s229, 8
      %s231 = scalar_lea.vmem %s5, %s230
      %s232 = smul.u32 32, %s16
      %p233 = scmp.lt.s32.totalorder %s232, 63
      %s234 = scalar_select %p233, %s232, 63
      %s235 = smul.addr %s234, 4
      %s236 = scalar_lea.vmem %s0, %s235
      %s237 = smul.u32 32, %s16
      %s238 = smul.u32 32, %s16
      %p239 = scmp.lt.s32.totalorder %s238, 63
      %s240 = scalar_select %p239, %s238, 63
      %s241 = smul.addr %s240, 4
      %s242 = scalar_lea.vmem %s1, %s241
      %s243 = smul.u32 32, %s16
      %s244 = smul.u32 32, %s16
      %p245 = scmp.lt.s32.totalorder %s244, 63
      %s246 = scalar_select %p245, %s244, 63
      %s247 = smul.addr %s246, 8
      %s248 = scalar_lea.vmem %s5, %s247
      %s249 = smul.u32 32, %s16
      %v251 = vld [vmem:[%s236] sm:$0xf]
      %v252 = vld [vmem:[%s236 + $0x4] sm:$0xf]
      %v253 = vld [vmem:[%s236 + $0x8] sm:$0xf]
      %v254 = vld [vmem:[%s236 + $0xc] sm:$0xf]
      %v255 = vld [vmem:[%s236 + $0x10] sm:$0xf]
      %v256 = vld [vmem:[%s236 + $0x14] sm:$0xf]
      %v257 = vld [vmem:[%s236 + $0x18] sm:$0xf]
      %v258 = vld [vmem:[%s236 + $0x1c] sm:$0xf]
      %v259 = vld [vmem:[%s236 + $0x20] sm:$0xf]
      %v260 = vld [vmem:[%s236 + $0x24] sm:$0xf]
      %v261 = vld [vmem:[%s236 + $0x28] sm:$0xf]
      %v262 = vld [vmem:[%s236 + $0x2c] sm:$0xf]
      %v263 = vld [vmem:[%s236 + $0x30] sm:$0xf]
      %v264 = vld [vmem:[%s236 + $0x34] sm:$0xf]
      %v265 = vld [vmem:[%s236 + $0x38] sm:$0xf]
      %v266 = vld [vmem:[%s236 + $0x3c] sm:$0xf]
      %v267 = vld [vmem:[%s236 + $0x40] sm:$0xf]
      %v268 = vld [vmem:[%s236 + $0x44] sm:$0xf]
      %v269 = vld [vmem:[%s236 + $0x48] sm:$0xf]
      %v270 = vld [vmem:[%s236 + $0x4c] sm:$0xf]
      %v271 = vld [vmem:[%s236 + $0x50] sm:$0xf]
      %v272 = vld [vmem:[%s236 + $0x54] sm:$0xf]
      %v273 = vld [vmem:[%s236 + $0x58] sm:$0xf]
      %v274 = vld [vmem:[%s236 + $0x5c] sm:$0xf]
      %v275 = vld [vmem:[%s236 + $0x60] sm:$0xf]
      %v276 = vld [vmem:[%s236 + $0x64] sm:$0xf]
      %v277 = vld [vmem:[%s236 + $0x68] sm:$0xf]
      %v278 = vld [vmem:[%s236 + $0x6c] sm:$0xf]
      %v279 = vld [vmem:[%s236 + $0x70] sm:$0xf]
      %v280 = vld [vmem:[%s236 + $0x74] sm:$0xf]
      %v281 = vld [vmem:[%s236 + $0x78] sm:$0xf]
      %v282 = vld [vmem:[%s236 + $0x7c] sm:$0xf]
      %v283 = vunpack.c.l.bf16 %v251
      %v284 = vunpack.c.l.bf16 %v252
      %v285 = vunpack.c.l.bf16 %v253
      %v286 = vunpack.c.l.bf16 %v254
      %v287 = vunpack.c.l.bf16 %v255
      %v288 = vunpack.c.l.bf16 %v256
      %v289 = vunpack.c.l.bf16 %v257
      %v290 = vunpack.c.l.bf16 %v258
      %v291 = vunpack.c.l.bf16 %v259
      %v292 = vunpack.c.l.bf16 %v260
      %v293 = vunpack.c.l.bf16 %v261
      %v294 = vunpack.c.l.bf16 %v262
      %v295 = vunpack.c.l.bf16 %v263
      %v296 = vunpack.c.l.bf16 %v264
      %v297 = vunpack.c.l.bf16 %v265
      %v298 = vunpack.c.l.bf16 %v266
      %v299 = vunpack.c.l.bf16 %v267
      %v300 = vunpack.c.l.bf16 %v268
      %v301 = vunpack.c.l.bf16 %v269
      %v302 = vunpack.c.l.bf16 %v270
      %v303 = vunpack.c.l.bf16 %v271
      %v304 = vunpack.c.l.bf16 %v272
      %v305 = vunpack.c.l.bf16 %v273
      %v306 = vunpack.c.l.bf16 %v274
      %v307 = vunpack.c.l.bf16 %v275
      %v308 = vunpack.c.l.bf16 %v276
      %v309 = vunpack.c.l.bf16 %v277
      %v310 = vunpack.c.l.bf16 %v278
      %v311 = vunpack.c.l.bf16 %v279
      %v312 = vunpack.c.l.bf16 %v280
      %v313 = vunpack.c.l.bf16 %v281
      %v314 = vunpack.c.l.bf16 %v282
      %v315 = vld [vmem:[%s3] sm:$0x1]
      %v317 = vlaneseq
      %v318 = vshrl.u32 %v317, 7
      %v319 = vsub.s32 0, %v318
      %v320 = vrot.slane %v315, %v319
      %v322 = vmul.f32 %v283, %v320
      %v323 = vmul.f32 %v284, %v320
      %v324 = vmul.f32 %v285, %v320
      %v325 = vmul.f32 %v286, %v320
      %v326 = vmul.f32 %v287, %v320
      %v327 = vmul.f32 %v288, %v320
      %v328 = vmul.f32 %v289, %v320
      %v329 = vmul.f32 %v290, %v320
      %v330 = vmul.f32 %v291, %v320
      %v331 = vmul.f32 %v292, %v320
      %v332 = vmul.f32 %v293, %v320
      %v333 = vmul.f32 %v294, %v320
      %v334 = vmul.f32 %v295, %v320
      %v335 = vmul.f32 %v296, %v320
      %v336 = vmul.f32 %v297, %v320
      %v337 = vmul.f32 %v298, %v320
      %v338 = vmul.f32 %v299, %v320
      %v339 = vmul.f32 %v300, %v320
      %v340 = vmul.f32 %v301, %v320
      %v341 = vmul.f32 %v302, %v320
      %v342 = vmul.f32 %v303, %v320
      %v343 = vmul.f32 %v304, %v320
      %v344 = vmul.f32 %v305, %v320
      %v345 = vmul.f32 %v306, %v320
      %v346 = vmul.f32 %v307, %v320
      %v347 = vmul.f32 %v308, %v320
      %v348 = vmul.f32 %v309, %v320
      %v349 = vmul.f32 %v310, %v320
      %v350 = vmul.f32 %v311, %v320
      %v351 = vmul.f32 %v312, %v320
      %v352 = vmul.f32 %v313, %v320
      %v353 = vmul.f32 %v314, %v320
      %v354 = vld [vmem:[%s4] sm:$0x1]
      %v356 = vlaneseq
      %v357 = vshrl.u32 %v356, 7
      %v358 = vsub.s32 0, %v357
      %v359 = vrot.slane %v354, %v358
      %v361 = vadd.f32 %v322, %v359
      %v362 = vadd.f32 %v323, %v359
      %v363 = vadd.f32 %v324, %v359
      %v364 = vadd.f32 %v325, %v359
      %v365 = vadd.f32 %v326, %v359
      %v366 = vadd.f32 %v327, %v359
      %v367 = vadd.f32 %v328, %v359
      %v368 = vadd.f32 %v329, %v359
      %v369 = vadd.f32 %v330, %v359
      %v370 = vadd.f32 %v331, %v359
      %v371 = vadd.f32 %v332, %v359
      %v372 = vadd.f32 %v333, %v359
      %v373 = vadd.f32 %v334, %v359
      %v374 = vadd.f32 %v335, %v359
      %v375 = vadd.f32 %v336, %v359
      %v376 = vadd.f32 %v337, %v359
      %v377 = vadd.f32 %v338, %v359
      %v378 = vadd.f32 %v339, %v359
      %v379 = vadd.f32 %v340, %v359
      %v380 = vadd.f32 %v341, %v359
      %v381 = vadd.f32 %v342, %v359
      %v382 = vadd.f32 %v343, %v359
      %v383 = vadd.f32 %v344, %v359
      %v384 = vadd.f32 %v345, %v359
      %v385 = vadd.f32 %v346, %v359
      %v386 = vadd.f32 %v347, %v359
      %v387 = vadd.f32 %v348, %v359
      %v388 = vadd.f32 %v349, %v359
      %v389 = vadd.f32 %v350, %v359
      %v390 = vadd.f32 %v351, %v359
      %v391 = vadd.f32 %v352, %v359
      %v392 = vadd.f32 %v353, %v359
      %v393 = vmax.f32 %v361, 0.0
      %v394 = vmax.f32 %v362, 0.0
      %v395 = vmax.f32 %v363, 0.0
      %v396 = vmax.f32 %v364, 0.0
      %v397 = vmax.f32 %v365, 0.0
      %v398 = vmax.f32 %v366, 0.0
      %v399 = vmax.f32 %v367, 0.0
      %v400 = vmax.f32 %v368, 0.0
      %v401 = vmax.f32 %v369, 0.0
      %v402 = vmax.f32 %v370, 0.0
      %v403 = vmax.f32 %v371, 0.0
      %v404 = vmax.f32 %v372, 0.0
      %v405 = vmax.f32 %v373, 0.0
      %v406 = vmax.f32 %v374, 0.0
      %v407 = vmax.f32 %v375, 0.0
      %v408 = vmax.f32 %v376, 0.0
      %v409 = vmax.f32 %v377, 0.0
      %v410 = vmax.f32 %v378, 0.0
      %v411 = vmax.f32 %v379, 0.0
      %v412 = vmax.f32 %v380, 0.0
      %v413 = vmax.f32 %v381, 0.0
      %v414 = vmax.f32 %v382, 0.0
      %v415 = vmax.f32 %v383, 0.0
      %v416 = vmax.f32 %v384, 0.0
      %v417 = vmax.f32 %v385, 0.0
      %v418 = vmax.f32 %v386, 0.0
      %v419 = vmax.f32 %v387, 0.0
      %v420 = vmax.f32 %v388, 0.0
      %v421 = vmax.f32 %v389, 0.0
      %v422 = vmax.f32 %v390, 0.0
      %v423 = vmax.f32 %v391, 0.0
      %v424 = vmax.f32 %v392, 0.0
      %v425 = vld [vmem:[%s242] sm:$0xf]
      %v426 = vld [vmem:[%s242 + $0x4] sm:$0xf]
      %v427 = vld [vmem:[%s242 + $0x8] sm:$0xf]
      %v428 = vld [vmem:[%s242 + $0xc] sm:$0xf]
      %v429 = vld [vmem:[%s242 + $0x10] sm:$0xf]
      %v430 = vld [vmem:[%s242 + $0x14] sm:$0xf]
      %v431 = vld [vmem:[%s242 + $0x18] sm:$0xf]
      %v432 = vld [vmem:[%s242 + $0x1c] sm:$0xf]
      %v433 = vld [vmem:[%s242 + $0x20] sm:$0xf]
      %v434 = vld [vmem:[%s242 + $0x24] sm:$0xf]
      %v435 = vld [vmem:[%s242 + $0x28] sm:$0xf]
      %v436 = vld [vmem:[%s242 + $0x2c] sm:$0xf]
      %v437 = vld [vmem:[%s242 + $0x30] sm:$0xf]
      %v438 = vld [vmem:[%s242 + $0x34] sm:$0xf]
      %v439 = vld [vmem:[%s242 + $0x38] sm:$0xf]
      %v440 = vld [vmem:[%s242 + $0x3c] sm:$0xf]
      %v441 = vld [vmem:[%s242 + $0x40] sm:$0xf]
      %v442 = vld [vmem:[%s242 + $0x44] sm:$0xf]
      %v443 = vld [vmem:[%s242 + $0x48] sm:$0xf]
      %v444 = vld [vmem:[%s242 + $0x4c] sm:$0xf]
      %v445 = vld [vmem:[%s242 + $0x50] sm:$0xf]
      %v446 = vld [vmem:[%s242 + $0x54] sm:$0xf]
      %v447 = vld [vmem:[%s242 + $0x58] sm:$0xf]
      %v448 = vld [vmem:[%s242 + $0x5c] sm:$0xf]
      %v449 = vld [vmem:[%s242 + $0x60] sm:$0xf]
      %v450 = vld [vmem:[%s242 + $0x64] sm:$0xf]
      %v451 = vld [vmem:[%s242 + $0x68] sm:$0xf]
      %v452 = vld [vmem:[%s242 + $0x6c] sm:$0xf]
      %v453 = vld [vmem:[%s242 + $0x70] sm:$0xf]
      %v454 = vld [vmem:[%s242 + $0x74] sm:$0xf]
      %v455 = vld [vmem:[%s242 + $0x78] sm:$0xf]
      %v456 = vld [vmem:[%s242 + $0x7c] sm:$0xf]
      %v457 = vld [vmem:[%s2] sm:$0x3]
      %v490 = vunpack.c.l.b16 %v425
      %v491 = vunpack.c.l.b16 %v426
      %v492 = vunpack.c.l.b16 %v427
      %v493 = vunpack.c.l.b16 %v428
      %v494 = vunpack.c.l.b16 %v429
      %v495 = vunpack.c.l.b16 %v430
      %v496 = vunpack.c.l.b16 %v431
      %v497 = vunpack.c.l.b16 %v432
      %v498 = vunpack.c.l.b16 %v433
      %v499 = vunpack.c.l.b16 %v434
      %v500 = vunpack.c.l.b16 %v435
      %v501 = vunpack.c.l.b16 %v436
      %v502 = vunpack.c.l.b16 %v437
      %v503 = vunpack.c.l.b16 %v438
      %v504 = vunpack.c.l.b16 %v439
      %v505 = vunpack.c.l.b16 %v440
      %v506 = vunpack.c.l.b16 %v441
      %v507 = vunpack.c.l.b16 %v442
      %v508 = vunpack.c.l.b16 %v443
      %v509 = vunpack.c.l.b16 %v444
      %v510 = vunpack.c.l.b16 %v445
      %v511 = vunpack.c.l.b16 %v446
      %v512 = vunpack.c.l.b16 %v447
      %v513 = vunpack.c.l.b16 %v448
      %v514 = vunpack.c.l.b16 %v449
      %v515 = vunpack.c.l.b16 %v450
      %v516 = vunpack.c.l.b16 %v451
      %v517 = vunpack.c.l.b16 %v452
      %v518 = vunpack.c.l.b16 %v453
      %v519 = vunpack.c.l.b16 %v454
      %v520 = vunpack.c.l.b16 %v455
      %v521 = vunpack.c.l.b16 %v456
      %v522 = vpack.c.b16 %v491, %v490
      %v523 = vpack.c.b16 %v493, %v492
      %v524 = vpack.c.b16 %v495, %v494
      %v525 = vpack.c.b16 %v497, %v496
      %v526 = vpack.c.b16 %v499, %v498
      %v527 = vpack.c.b16 %v501, %v500
      %v528 = vpack.c.b16 %v503, %v502
      %v529 = vpack.c.b16 %v505, %v504
      %v530 = vpack.c.b16 %v507, %v506
      %v531 = vpack.c.b16 %v509, %v508
      %v532 = vpack.c.b16 %v511, %v510
      %v533 = vpack.c.b16 %v513, %v512
      %v534 = vpack.c.b16 %v515, %v514
      %v535 = vpack.c.b16 %v517, %v516
      %v536 = vpack.c.b16 %v519, %v518
      %v537 = vpack.c.b16 %v521, %v520
      %vm538 = vcmask 31744
      %v540 = vsel %vm538, %v522, 0
      %v543 = vsel %vm538, %v523, 0
      %v546 = vsel %vm538, %v524, 0
      %v549 = vsel %vm538, %v525, 0
      %v552 = vsel %vm538, %v526, 0
      %v555 = vsel %vm538, %v527, 0
      %v558 = vsel %vm538, %v528, 0
      %v561 = vsel %vm538, %v529, 0
      %v564 = vsel %vm538, %v530, 0
      %v567 = vsel %vm538, %v531, 0
      %v570 = vsel %vm538, %v532, 0
      %v573 = vsel %vm538, %v533, 0
      %v576 = vsel %vm538, %v534, 0
      %v579 = vsel %vm538, %v535, 0
      %v582 = vsel %vm538, %v536, 0
      %v585 = vsel %vm538, %v537, 0
      %vm587 = vcmask 1041408
      %v589 = vsel %vm587, %v457, 0
      %591 = vmatprep.subr.bf16.mxu0 0
      %592 = vmatpush1.bf16.msra.mxu0 0
      %593 = vmatprep.subr.bf16.mxu0 0
      %594 = vmatpush1.bf16.msra.mxu0 0
      %595 = vmatprep.subr.bf16.mxu0 0
      %596 = vmatpush1.bf16.msra.mxu0 0
      %597 = vmatprep.subr.bf16.mxu0 0
      %598 = vmatpush1.bf16.msra.mxu0 0
      %599 = vmatprep.subr.bf16.mxu0 0
      %600 = vmatpush1.bf16.msra.mxu0 0
      %601 = vmatprep.subr.bf16.mxu0 0
      %602 = vmatpush1.bf16.msra.mxu0 0
      %603 = vmatprep.subr.bf16.mxu0 0
      %604 = vmatpush1.bf16.msra.mxu0 0
      %605 = vmatprep.subr.bf16.mxu0 0
      %606 = vmatpush1.bf16.msra.mxu0 %v589
      %607 = vmatprep.subr.bf16.mxu0 0
      %608 = vmatpush2.bf16.msra.mxu0 0
      %609 = vmatprep.subr.bf16.mxu0 0
      %610 = vmatpush2.bf16.msra.mxu0 0
      %611 = vmatprep.subr.bf16.mxu0 0
      %612 = vmatpush2.bf16.msra.mxu0 0
      %613 = vmatprep.subr.bf16.mxu0 0
      %614 = vmatpush2.bf16.msra.mxu0 0
      %615 = vmatprep.subr.bf16.mxu0 0
      %616 = vmatpush2.bf16.msra.mxu0 0
      %617 = vmatprep.subr.bf16.mxu0 0
      %618 = vmatpush2.bf16.msra.mxu0 0
      %619 = vmatprep.subr.bf16.mxu0 0
      %620 = vmatpush2.bf16.msra.mxu0 0
      %621 = vmatprep.subr.bf16.mxu0 0
      %622 = vmatpush2.bf16.msra.mxu0 0
      %623 = vmatprep.mubr.bf16.mxu0 0
      %624 = vmatmul.mubr.bf16.gmra.mxu0 %v540
      %v625 = vpop.f32.mrf.mxu0
      %v626 = vadd.f32 0.0, %v625
      %v627 = vpop.f32.mrf.mxu0
      %v628 = vpop.f32.mrf.mxu0
      %v629 = vadd.f32 0.0, %v628
      %v630 = vpop.f32.mrf.mxu0
      %631 = vmatprep.mubr.bf16.mxu0 0
      %632 = vmatmul.mubr.bf16.gmra.mxu0 %v543
      %v633 = vpop.f32.mrf.mxu0
      %v634 = vadd.f32 0.0, %v633
      %v635 = vpop.f32.mrf.mxu0
      %v636 = vpop.f32.mrf.mxu0
      %v637 = vadd.f32 0.0, %v636
      %v638 = vpop.f32.mrf.mxu0
      %639 = vmatprep.mubr.bf16.mxu0 0
      %640 = vmatmul.mubr.bf16.gmra.mxu0 %v546
      %v641 = vpop.f32.mrf.mxu0
      %v642 = vadd.f32 0.0, %v641
      %v643 = vpop.f32.mrf.mxu0
      %v644 = vpop.f32.mrf.mxu0
      %v645 = vadd.f32 0.0, %v644
      %v646 = vpop.f32.mrf.mxu0
      %647 = vmatprep.mubr.bf16.mxu0 0
      %648 = vmatmul.mubr.bf16.gmra.mxu0 %v549
      %v649 = vpop.f32.mrf.mxu0
      %v650 = vadd.f32 0.0, %v649
      %v651 = vpop.f32.mrf.mxu0
      %v652 = vpop.f32.mrf.mxu0
      %v653 = vadd.f32 0.0, %v652
      %v654 = vpop.f32.mrf.mxu0
      %655 = vmatprep.mubr.bf16.mxu0 0
      %656 = vmatmul.mubr.bf16.gmra.mxu0 %v552
      %v657 = vpop.f32.mrf.mxu0
      %v658 = vadd.f32 0.0, %v657
      %v659 = vpop.f32.mrf.mxu0
      %v660 = vpop.f32.mrf.mxu0
      %v661 = vadd.f32 0.0, %v660
      %v662 = vpop.f32.mrf.mxu0
      %663 = vmatprep.mubr.bf16.mxu0 0
      %664 = vmatmul.mubr.bf16.gmra.mxu0 %v555
      %v665 = vpop.f32.mrf.mxu0
      %v666 = vadd.f32 0.0, %v665
      %v667 = vpop.f32.mrf.mxu0
      %v668 = vpop.f32.mrf.mxu0
      %v669 = vadd.f32 0.0, %v668
      %v670 = vpop.f32.mrf.mxu0
      %671 = vmatprep.mubr.bf16.mxu0 0
      %672 = vmatmul.mubr.bf16.gmra.mxu0 %v558
      %v673 = vpop.f32.mrf.mxu0
      %v674 = vadd.f32 0.0, %v673
      %v675 = vpop.f32.mrf.mxu0
      %v676 = vpop.f32.mrf.mxu0
      %v677 = vadd.f32 0.0, %v676
      %v678 = vpop.f32.mrf.mxu0
      %679 = vmatprep.mubr.bf16.mxu0 0
      %680 = vmatmul.mubr.bf16.gmra.mxu0 %v561
      %v681 = vpop.f32.mrf.mxu0
      %v682 = vadd.f32 0.0, %v681
      %v683 = vpop.f32.mrf.mxu0
      %v684 = vpop.f32.mrf.mxu0
      %v685 = vadd.f32 0.0, %v684
      %v686 = vpop.f32.mrf.mxu0
      %687 = vmatprep.mubr.bf16.mxu0 0
      %688 = vmatmul.mubr.bf16.gmra.mxu0 %v564
      %v689 = vpop.f32.mrf.mxu0
      %v690 = vadd.f32 0.0, %v689
      %v691 = vpop.f32.mrf.mxu0
      %v692 = vpop.f32.mrf.mxu0
      %v693 = vadd.f32 0.0, %v692
      %v694 = vpop.f32.mrf.mxu0
      %695 = vmatprep.mubr.bf16.mxu0 0
      %696 = vmatmul.mubr.bf16.gmra.mxu0 %v567
      %v697 = vpop.f32.mrf.mxu0
      %v698 = vadd.f32 0.0, %v697
      %v699 = vpop.f32.mrf.mxu0
      %v700 = vpop.f32.mrf.mxu0
      %v701 = vadd.f32 0.0, %v700
      %v702 = vpop.f32.mrf.mxu0
      %703 = vmatprep.mubr.bf16.mxu0 0
      %704 = vmatmul.mubr.bf16.gmra.mxu0 %v570
      %v705 = vpop.f32.mrf.mxu0
      %v706 = vadd.f32 0.0, %v705
      %v707 = vpop.f32.mrf.mxu0
      %v708 = vpop.f32.mrf.mxu0
      %v709 = vadd.f32 0.0, %v708
      %v710 = vpop.f32.mrf.mxu0
      %711 = vmatprep.mubr.bf16.mxu0 0
      %712 = vmatmul.mubr.bf16.gmra.mxu0 %v573
      %v713 = vpop.f32.mrf.mxu0
      %v714 = vadd.f32 0.0, %v713
      %v715 = vpop.f32.mrf.mxu0
      %v716 = vpop.f32.mrf.mxu0
      %v717 = vadd.f32 0.0, %v716
      %v718 = vpop.f32.mrf.mxu0
      %719 = vmatprep.mubr.bf16.mxu0 0
      %720 = vmatmul.mubr.bf16.gmra.mxu0 %v576
      %v721 = vpop.f32.mrf.mxu0
      %v722 = vadd.f32 0.0, %v721
      %v723 = vpop.f32.mrf.mxu0
      %v724 = vpop.f32.mrf.mxu0
      %v725 = vadd.f32 0.0, %v724
      %v726 = vpop.f32.mrf.mxu0
      %727 = vmatprep.mubr.bf16.mxu0 0
      %728 = vmatmul.mubr.bf16.gmra.mxu0 %v579
      %v729 = vpop.f32.mrf.mxu0
      %v730 = vadd.f32 0.0, %v729
      %v731 = vpop.f32.mrf.mxu0
      %v732 = vpop.f32.mrf.mxu0
      %v733 = vadd.f32 0.0, %v732
      %v734 = vpop.f32.mrf.mxu0
      %735 = vmatprep.mubr.bf16.mxu0 0
      %736 = vmatmul.mubr.bf16.gmra.mxu0 %v582
      %v737 = vpop.f32.mrf.mxu0
      %v738 = vadd.f32 0.0, %v737
      %v739 = vpop.f32.mrf.mxu0
      %v740 = vpop.f32.mrf.mxu0
      %v741 = vadd.f32 0.0, %v740
      %v742 = vpop.f32.mrf.mxu0
      %743 = vmatprep.mubr.bf16.mxu0 0
      %744 = vmatmul.mubr.bf16.gmra.mxu0 %v585
      %v745 = vpop.f32.mrf.mxu0
      %v746 = vadd.f32 0.0, %v745
      %v747 = vpop.f32.mrf.mxu0
      %v748 = vpop.f32.mrf.mxu0
      %v749 = vadd.f32 0.0, %v748
      %v750 = vpop.f32.mrf.mxu0
      %751 = vdwg.mxu0
      %v752 = vadd.f32 %v393, %v626
      %v753 = vadd.f32 %v394, %v629
      %v754 = vadd.f32 %v395, %v634
      %v755 = vadd.f32 %v396, %v637
      %v756 = vadd.f32 %v397, %v642
      %v757 = vadd.f32 %v398, %v645
      %v758 = vadd.f32 %v399, %v650
      %v759 = vadd.f32 %v400, %v653
      %v760 = vadd.f32 %v401, %v658
      %v761 = vadd.f32 %v402, %v661
      %v762 = vadd.f32 %v403, %v666
      %v763 = vadd.f32 %v404, %v669
      %v764 = vadd.f32 %v405, %v674
      %v765 = vadd.f32 %v406, %v677
      %v766 = vadd.f32 %v407, %v682
      %v767 = vadd.f32 %v408, %v685
      %v768 = vadd.f32 %v409, %v690
      %v769 = vadd.f32 %v410, %v693
      %v770 = vadd.f32 %v411, %v698
      %v771 = vadd.f32 %v412, %v701
      %v772 = vadd.f32 %v413, %v706
      %v773 = vadd.f32 %v414, %v709
      %v774 = vadd.f32 %v415, %v714
      %v775 = vadd.f32 %v416, %v717
      %v776 = vadd.f32 %v417, %v722
      %v777 = vadd.f32 %v418, %v725
      %v778 = vadd.f32 %v419, %v730
      %v779 = vadd.f32 %v420, %v733
      %v780 = vadd.f32 %v421, %v738
      %v781 = vadd.f32 %v422, %v741
      %v782 = vadd.f32 %v423, %v746
      %v783 = vadd.f32 %v424, %v749
      %v784 = vmax.f32 %v752, 0.0
      %v785 = vmax.f32 %v753, 0.0
      %v786 = vmax.f32 %v754, 0.0
      %v787 = vmax.f32 %v755, 0.0
      %v788 = vmax.f32 %v756, 0.0
      %v789 = vmax.f32 %v757, 0.0
      %v790 = vmax.f32 %v758, 0.0
      %v791 = vmax.f32 %v759, 0.0
      %v792 = vmax.f32 %v760, 0.0
      %v793 = vmax.f32 %v761, 0.0
      %v794 = vmax.f32 %v762, 0.0
      %v795 = vmax.f32 %v763, 0.0
      %v796 = vmax.f32 %v764, 0.0
      %v797 = vmax.f32 %v765, 0.0
      %v798 = vmax.f32 %v766, 0.0
      %v799 = vmax.f32 %v767, 0.0
      %v800 = vmax.f32 %v768, 0.0
      %v801 = vmax.f32 %v769, 0.0
      %v802 = vmax.f32 %v770, 0.0
      %v803 = vmax.f32 %v771, 0.0
      %v804 = vmax.f32 %v772, 0.0
      %v805 = vmax.f32 %v773, 0.0
      %v806 = vmax.f32 %v774, 0.0
      %v807 = vmax.f32 %v775, 0.0
      %v808 = vmax.f32 %v776, 0.0
      %v809 = vmax.f32 %v777, 0.0
      %v810 = vmax.f32 %v778, 0.0
      %v811 = vmax.f32 %v779, 0.0
      %v812 = vmax.f32 %v780, 0.0
      %v813 = vmax.f32 %v781, 0.0
      %v814 = vmax.f32 %v782, 0.0
      %v815 = vmax.f32 %v783, 0.0
      %816 = vst [vmem:[%s248] sm:$0xff] %v784
      %817 = vst [vmem:[%s248 + $0x8] sm:$0xff] %v785
      %818 = vst [vmem:[%s248 + $0x10] sm:$0xff] %v786
      %819 = vst [vmem:[%s248 + $0x18] sm:$0xff] %v787
      %820 = vst [vmem:[%s248 + $0x20] sm:$0xff] %v788
      %821 = vst [vmem:[%s248 + $0x28] sm:$0xff] %v789
      %822 = vst [vmem:[%s248 + $0x30] sm:$0xff] %v790
      %823 = vst [vmem:[%s248 + $0x38] sm:$0xff] %v791
      %824 = vst [vmem:[%s248 + $0x40] sm:$0xff] %v792
      %825 = vst [vmem:[%s248 + $0x48] sm:$0xff] %v793
      %826 = vst [vmem:[%s248 + $0x50] sm:$0xff] %v794
      %827 = vst [vmem:[%s248 + $0x58] sm:$0xff] %v795
      %828 = vst [vmem:[%s248 + $0x60] sm:$0xff] %v796
      %829 = vst [vmem:[%s248 + $0x68] sm:$0xff] %v797
      %830 = vst [vmem:[%s248 + $0x70] sm:$0xff] %v798
      %831 = vst [vmem:[%s248 + $0x78] sm:$0xff] %v799
      %832 = vst [vmem:[%s248 + $0x80] sm:$0xff] %v800
      %833 = vst [vmem:[%s248 + $0x88] sm:$0xff] %v801
      %834 = vst [vmem:[%s248 + $0x90] sm:$0xff] %v802
      %835 = vst [vmem:[%s248 + $0x98] sm:$0xff] %v803
      %836 = vst [vmem:[%s248 + $0xa0] sm:$0xff] %v804
      %837 = vst [vmem:[%s248 + $0xa8] sm:$0xff] %v805
      %838 = vst [vmem:[%s248 + $0xb0] sm:$0xff] %v806
      %839 = vst [vmem:[%s248 + $0xb8] sm:$0xff] %v807
      %840 = vst [vmem:[%s248 + $0xc0] sm:$0xff] %v808
      %841 = vst [vmem:[%s248 + $0xc8] sm:$0xff] %v809
      %842 = vst [vmem:[%s248 + $0xd0] sm:$0xff] %v810
      %843 = vst [vmem:[%s248 + $0xd8] sm:$0xff] %v811
      %844 = vst [vmem:[%s248 + $0xe0] sm:$0xff] %v812
      %845 = vst [vmem:[%s248 + $0xe8] sm:$0xff] %v813
      %846 = vst [vmem:[%s248 + $0xf0] sm:$0xff] %v814
      %847 = vst [vmem:[%s248 + $0xf8] sm:$0xff] %v815
      %s848 = smul.u32 32, %s16
      %p849 = scmp.lt.s32.totalorder %s848, 63
      %s850 = scalar_select %p849, %s848, 63
      %s851 = smul.addr %s850, 8
      %s852 = scalar_lea.vmem %s5, %s851
      // Predicated region
      $region41: #{basic_block_forward.7} parent=39 // pred_check
        %p853 = pneg %p149
      $region42: #{basic_block_forward.7} parent=39 // pred_check_branch
        %855 = sbr.rel (%p853) target = $region44
      $region43: #{basic_block_forward.7} parent=39 // pred_region
        %s856 = smul.u32 32, %s16
      $region44: #{basic_block_forward.7} parent=39 // pred_fallthru
        _
    $region40: #{basic_block_forward.7} parent=5 // pred_fallthru
      _
    %p857 = scmp.le.s32.totalorder 2, %s11
    // Predicated region
    $region45: #{basic_block_forward.7} parent=5 // pred_check
      %p858 = pneg %p857
    $region46: #{basic_block_forward.7} parent=5 // pred_check_branch
      %860 = sbr.rel (%p858) target = $region48
    $region47: #{basic_block_forward.7} parent=5 // pred_region
      %s861 = ssub.s32 %s11, 2
      // Predicated region
      $region49: #{basic_block_forward.7} parent=47 // pred_check
        %p862 = pneg %p155
      $region50: #{basic_block_forward.7} parent=47 // pred_check_branch
        %864 = sbr.rel (%p862) target = $region52
      $region51: #{basic_block_forward.7} parent=47 // pred_region
        %s865 = smul.u32 32, %s17
        %p866 = scmp.lt.s32.totalorder %s865, 63
        %s867 = scalar_select %p866, %s865, 63
        %s868 = smul.addr %s867, 8
        %s869 = scalar_lea.vmem %s5, %s868
      $region52: #{basic_block_forward.7} parent=47 // pred_fallthru
        _
    $region48: #{basic_block_forward.7} parent=5 // pred_fallthru
      _
  $region6: #{basic_block_forward.7} parent=0 // loop_footer
    %s15 = sadd.s32 1, %s11
  $region7: #{basic_block_forward.7} parent=0 // loop_footer_branch
    %10 = sbr.rel target = $region3
  $region8: #{basic_block_forward.7} parent=0 // loop_exit
    _

// kernel: basic_block_forward.6
$region0: #{basic_block_forward.6}
  #allocation0 [shape = 'u32[]', space=smem, size = 0x4, offset = 0x4, fixed_abs, tag = 'smem constant byte address 0x4 - core index']
  #allocation1 [shape = 'u32[144,128]{1,0:T(1,128)}', space=vmem, size = 0x12000, scoped, tag = 'internal scratch']
  %s0 = inlined_call_operand.vmem [shape: bf16[512,1152], index: 0, kind: input, shape index: {}]
  %s1 = inlined_call_operand.vmem [shape: bf16[1152,128], index: 1, kind: input, shape index: {}]
  %s2 = inlined_call_operand.vmem [shape: bf16[512,128], index: 2, kind: output, shape index: {0}]
  %s3 = inlined_call_operand.vmem [shape: f32[1,128], index: 3, kind: output, shape index: {1}]
  %s4 = inlined_call_operand.vmem [shape: f32[1,128], index: 4, kind: output, shape index: {2}]
  %5 = xla_tuple %s2, %s3, %s4
  %s6 = sld [smem:[#allocation0]]
  $region61: #{basic_block_forward.6} parent=0
    _
  %s8 = ssub.s32 1, %s6
  %s9 = scalar_select 0, %s8, %s6
  loop: start=0, step=1, limit=4
  $region2: #{basic_block_forward.6} parent=0 // loop_pre_header
    _
  $region3: #{basic_block_forward.6} parent=0 // loop_header
    %s11 = sphi 0, %s15
    %p12 = scmp.ge.s32.totalorder %s11, 4
    %s21 = sphi 0, %s23
    %s24 = sphi 0, %s21
    %s25 = sphi 0, %s24
    %s41 = sphi 0, %s25
    %s45 = sphi 0, %s45
    %s47 = sphi 0, %s45
    %s48 = sphi 0, %s47
    %s62 = sphi 0, %s48
    %s68 = sphi 0, %s70
    %s71 = sphi 0, %s68
    %s72 = sphi 0, %s71
    %s88 = sphi 0, %s72
    %s92 = sphi 0, %s92
    %s94 = sphi 0, %s92
    %s95 = sphi 0, %s94
    %s109 = sphi 0, %s95
    %s113 = sphi 0, %s113
    %s115 = sphi 0, %s113
    %s116 = sphi 0, %s115
    %s130 = sphi 0, %s116
  $region4: #{basic_block_forward.6} parent=0 // loop_header_branch
    %14 = sbr.rel (%p12) target = $region8
  $region5: #{basic_block_forward.6} parent=0 // loop_body
    %s16 = ssub.s32 %s11, 1
    %s17 = ssub.s32 %s11, 2
    %s18 = sadd.s32 %s11, 1
    %s19 = ssub.s32 %s11, %s18
    %p20 = scmp.eq.s32.totalorder %s19, 0
    %s22 = sadd.s32 %s21, 1
    %s23 = scalar_select %p20, %s21, %s22
    %p26 = pneg %p20
    %p27 = scmp.eq.s32.totalorder %s11, 1
    %p28 = por %p26, %p27
    %p29 = scmp.ne.s32.totalorder %s21, %s24
    %p30 = scmp.eq.s32.totalorder %s11, 0
    %p31 = por %p29, %p30
    %p32 = scmp.ne.s32.totalorder %s21, %s24
    %p33 = scmp.eq.s32.totalorder %s16, 1
    %p34 = por %p32, %p33
    %p35 = scmp.ne.s32.totalorder %s24, %s25
    %p36 = scmp.eq.s32.totalorder %s16, 0
    %p37 = por %p35, %p36
    %p38 = scmp.ne.s32.totalorder %s24, %s25
    %p39 = scmp.eq.s32.totalorder %s17, 1
    %p40 = por %p38, %p39
    %p42 = scmp.ne.s32.totalorder %s25, %s41
    %p43 = scmp.eq.s32.totalorder %s17, 0
    %p44 = por %p42, %p43
    %s46 = sadd.s32 %s45, 1
    %p49 = scmp.eq.s32.totalorder %s11, 1
    %p50 = scmp.ne.s32.totalorder %s45, %s47
    %p51 = scmp.eq.s32.totalorder %s11, 0
    %p52 = por %p50, %p51
    %p53 = scmp.ne.s32.totalorder %s45, %s47
    %p54 = scmp.eq.s32.totalorder %s16, 1
    %p55 = por %p53, %p54
    %p56 = scmp.ne.s32.totalorder %s47, %s48
    %p57 = scmp.eq.s32.totalorder %s16, 0
    %p58 = por %p56, %p57
    %p59 = scmp.ne.s32.totalorder %s47, %s48
    %p60 = scmp.eq.s32.totalorder %s17, 1
    %p61 = por %p59, %p60
    %p63 = scmp.ne.s32.totalorder %s48, %s62
    %p64 = scmp.eq.s32.totalorder %s17, 0
    %p65 = por %p63, %p64
    %s66 = ssub.s32 %s11, %s18
    %p67 = scmp.eq.s32.totalorder %s66, 0
    %s69 = sadd.s32 %s68, 1
    %s70 = scalar_select %p67, %s68, %s69
    %p73 = pneg %p67
    %p74 = scmp.eq.s32.totalorder %s11, 1
    %p75 = por %p73, %p74
    %p76 = scmp.ne.s32.totalorder %s68, %s71
    %p77 = scmp.eq.s32.totalorder %s11, 0
    %p78 = por %p76, %p77
    %p79 = scmp.ne.s32.totalorder %s68, %s71
    %p80 = scmp.eq.s32.totalorder %s16, 1
    %p81 = por %p79, %p80
    %p82 = scmp.ne.s32.totalorder %s71, %s72
    %p83 = scmp.eq.s32.totalorder %s16, 0
    %p84 = por %p82, %p83
    %p85 = scmp.ne.s32.totalorder %s71, %s72
    %p86 = scmp.eq.s32.totalorder %s17, 1
    %p87 = por %p85, %p86
    %p89 = scmp.ne.s32.totalorder %s72, %s88
    %p90 = scmp.eq.s32.totalorder %s17, 0
    %p91 = por %p89, %p90
    %s93 = sadd.s32 %s92, 1
    %p96 = scmp.eq.s32.totalorder %s11, 1
    %p97 = scmp.ne.s32.totalorder %s92, %s94
    %p98 = scmp.eq.s32.totalorder %s11, 0
    %p99 = por %p97, %p98
    %p100 = scmp.ne.s32.totalorder %s92, %s94
    %p101 = scmp.eq.s32.totalorder %s16, 1
    %p102 = por %p100, %p101
    %p103 = scmp.ne.s32.totalorder %s94, %s95
    %p104 = scmp.eq.s32.totalorder %s16, 0
    %p105 = por %p103, %p104
    %p106 = scmp.ne.s32.totalorder %s94, %s95
    %p107 = scmp.eq.s32.totalorder %s17, 1
    %p108 = por %p106, %p107
    %p110 = scmp.ne.s32.totalorder %s95, %s109
    %p111 = scmp.eq.s32.totalorder %s17, 0
    %p112 = por %p110, %p111
    %s114 = sadd.s32 %s113, 1
    %p117 = scmp.eq.s32.totalorder %s11, 1
    %p118 = scmp.ne.s32.totalorder %s113, %s115
    %p119 = scmp.eq.s32.totalorder %s11, 0
    %p120 = por %p118, %p119
    %p121 = scmp.ne.s32.totalorder %s113, %s115
    %p122 = scmp.eq.s32.totalorder %s16, 1
    %p123 = por %p121, %p122
    %p124 = scmp.ne.s32.totalorder %s115, %s116
    %p125 = scmp.eq.s32.totalorder %s16, 0
    %p126 = por %p124, %p125
    %p127 = scmp.ne.s32.totalorder %s115, %s116
    %p128 = scmp.eq.s32.totalorder %s17, 1
    %p129 = por %p127, %p128
    %p131 = scmp.ne.s32.totalorder %s116, %s130
    %p132 = scmp.eq.s32.totalorder %s17, 0
    %p133 = por %p131, %p132
    %p134 = scmp.le.s32.totalorder 1, %s11
    %p135 = scmp.lt.s32.totalorder %s11, 3
    %p136 = pnand %p134, %p135
    %p137 = pneg %p136
    // Predicated region
    $region9: #{basic_block_forward.6} parent=5 // pred_check
      _
    $region10: #{basic_block_forward.6} parent=5 // pred_check_branch
      %139 = sbr.rel (%p136) target = $region12
    $region11: #{basic_block_forward.6} parent=5 // pred_region
      %s140 = ssub.s32 %s11, 1
      // Predicated region
      $region13: #{basic_block_forward.6} parent=11 // pred_check
        %p141 = pneg %p58
      $region14: #{basic_block_forward.6} parent=11 // pred_check_branch
        %143 = sbr.rel (%p141) target = $region16
      $region15: #{basic_block_forward.6} parent=11 // pred_region
        _
      $region16: #{basic_block_forward.6} parent=11 // pred_fallthru
        _
    $region12: #{basic_block_forward.6} parent=5 // pred_fallthru
      _
    %p144 = scmp.lt.s32.totalorder %s11, 2
    // Predicated region
    $region17: #{basic_block_forward.6} parent=5 // pred_check
      %p145 = pneg %p144
    $region18: #{basic_block_forward.6} parent=5 // pred_check_branch
      %147 = sbr.rel (%p145) target = $region20
    $region19: #{basic_block_forward.6} parent=5 // pred_region
      // Predicated region
      $region21: #{basic_block_forward.6} parent=19 // pred_check
        %p148 = pneg %p31
      $region22: #{basic_block_forward.6} parent=19 // pred_check_branch
        %150 = sbr.rel (%p148) target = $region24
      $region23: #{basic_block_forward.6} parent=19 // pred_region
        %s151 = smul.u32 32, %s11
        %p152 = scmp.lt.s32.totalorder %s151, 63
        %s153 = scalar_select %p152, %s151, 63
        %s154 = smul.addr %s153, 9
        %s155 = smul.addr %s154, 4
        %s156 = scalar_lea.vmem %s0, %s155
        %s157 = smul.u32 32, %s11
      $region24: #{basic_block_forward.6} parent=19 // pred_fallthru
        _
    $region20: #{basic_block_forward.6} parent=5 // pred_fallthru
      _
    %p158 = scmp.le.s32.totalorder 1, %s11
    %p159 = scmp.lt.s32.totalorder %s11, 3
    %p160 = pnand %p158, %p159
    %p161 = pneg %p160
    // Predicated region
    $region25: #{basic_block_forward.6} parent=5 // pred_check
      _
    $region26: #{basic_block_forward.6} parent=5 // pred_check_branch
      %163 = sbr.rel (%p160) target = $region28
    $region27: #{basic_block_forward.6} parent=5 // pred_region
      %s164 = ssub.s32 %s11, 1
      %s165 = smul.u32 32, %s16
      %p166 = scmp.lt.s32.totalorder %s165, 63
      %s167 = scalar_select %p166, %s165, 63
      %s168 = smul.addr %s167, 9
      %s169 = smul.addr %s168, 4
      %s170 = scalar_lea.vmem %s0, %s169
      %p171 = pneg %p37
      %p172 = pneg %p34
      %p173 = pneg %p58
      %p174 = pneg %p55
      %p175 = pneg %p84
      %p176 = pneg %p81
      %s177 = smul.u32 32, %s16
      %p178 = scmp.lt.s32.totalorder %s177, 63
      %s179 = scalar_select %p178, %s177, 63
      %s180 = smul.addr %s179, 4
      %s181 = scalar_lea.vmem %s2, %s180
      %p182 = pneg %p105
      %p183 = pneg %p102
      %p184 = pneg %p126
      %p185 = pneg %p123
      %s186 = smul.u32 32, %s16
      %p187 = scmp.lt.s32.totalorder %s186, 63
      %s188 = scalar_select %p187, %s186, 63
      %s189 = smul.addr %s188, 9
      %s190 = smul.addr %s189, 4
      %s191 = scalar_lea.vmem %s0, %s190
      %s192 = smul.u32 32, %s16
      %s193 = smul.u32 32, %s16
      %p194 = scmp.lt.s32.totalorder %s193, 63
      %s195 = scalar_select %p194, %s193, 63
      %s196 = smul.addr %s195, 4
      %s197 = scalar_lea.vmem %s2, %s196
      %s198 = smul.u32 32, %s16
      %p200 = scmp.eq.s32.totalorder %s16, 0
      // Predicated region
      $region29: #{basic_block_forward.6} parent=27 // pred_check
        %p201 = pneg %p200
      $region30: #{basic_block_forward.6} parent=27 // pred_check_branch
        %203 = sbr.rel (%p201) target = $region32
      $region31: #{basic_block_forward.6} parent=27 // pred_region
        %204 = vst [vmem:[%s3] sm:$0x1] 0.0
        %205 = vst [vmem:[%s4] sm:$0x1] 0.0
      $region32: #{basic_block_forward.6} parent=27 // pred_fallthru
        _
      %v206 = vld [vmem:[%s191] sm:$0xff]
      %v207 = vld [vmem:[%s191 + $0x8] sm:$0xff]
      %v208 = vld [vmem:[%s191 + $0x10] sm:$0xff]
      %v209 = vld [vmem:[%s191 + $0x18] sm:$0xff]
      %v210 = vld [vmem:[%s191 + $0x20] sm:$0xf]
      %v211 = vld [vmem:[%s191 + $0x24] sm:$0xff]
      %v212 = vld [vmem:[%s191 + $0x2c] sm:$0xff]
      %v213 = vld [vmem:[%s191 + $0x34] sm:$0xff]
      %v214 = vld [vmem:[%s191 + $0x3c] sm:$0xff]
      %v215 = vld [vmem:[%s191 + $0x44] sm:$0xf]
      %v216 = vld [vmem:[%s191 + $0x48] sm:$0xff]
      %v217 = vld [vmem:[%s191 + $0x50] sm:$0xff]
      %v218 = vld [vmem:[%s191 + $0x58] sm:$0xff]
      %v219 = vld [vmem:[%s191 + $0x60] sm:$0xff]
      %v220 = vld [vmem:[%s191 + $0x68] sm:$0xf]
      %v221 = vld [vmem:[%s191 + $0x6c] sm:$0xff]
      %v222 = vld [vmem:[%s191 + $0x74] sm:$0xff]
      %v223 = vld [vmem:[%s191 + $0x7c] sm:$0xff]
      %v224 = vld [vmem:[%s191 + $0x84] sm:$0xff]
      %v225 = vld [vmem:[%s191 + $0x8c] sm:$0xf]
      %v226 = vld [vmem:[%s191 + $0x90] sm:$0xff]
      %v227 = vld [vmem:[%s191 + $0x98] sm:$0xff]
      %v228 = vld [vmem:[%s191 + $0xa0] sm:$0xff]
      %v229 = vld [vmem:[%s191 + $0xa8] sm:$0xff]
      %v230 = vld [vmem:[%s191 + $0xb0] sm:$0xf]
      %v231 = vld [vmem:[%s191 + $0xb4] sm:$0xff]
      %v232 = vld [vmem:[%s191 + $0xbc] sm:$0xff]
      %v233 = vld [vmem:[%s191 + $0xc4] sm:$0xff]
      %v234 = vld [vmem:[%s191 + $0xcc] sm:$0xff]
      %v235 = vld [vmem:[%s191 + $0xd4] sm:$0xf]
      %v236 = vld [vmem:[%s191 + $0xd8] sm:$0xff]
      %v237 = vld [vmem:[%s191 + $0xe0] sm:$0xff]
      %v238 = vld [vmem:[%s191 + $0xe8] sm:$0xff]
      %v239 = vld [vmem:[%s191 + $0xf0] sm:$0xff]
      %v240 = vld [vmem:[%s191 + $0xf8] sm:$0xf]
      %v241 = vld [vmem:[%s191 + $0xfc] sm:$0xff]
      %v242 = vld [vmem:[%s191 + $0x104] sm:$0xff]
      %v243 = vld [vmem:[%s191 + $0x10c] sm:$0xff]
      %v244 = vld [vmem:[%s191 + $0x114] sm:$0xff]
      %v245 = vld [vmem:[%s191 + $0x11c] sm:$0xf]
      %v246 = vld [vmem:[%s191 + $0x120] sm:$0xff]
      %v247 = vld [vmem:[%s191 + $0x128] sm:$0xff]
      %v248 = vld [vmem:[%s191 + $0x130] sm:$0xff]
      %v249 = vld [vmem:[%s191 + $0x138] sm:$0xff]
      %v250 = vld [vmem:[%s191 + $0x140] sm:$0xf]
      %v251 = vld [vmem:[%s191 + $0x144] sm:$0xff]
      %v252 = vld [vmem:[%s191 + $0x14c] sm:$0xff]
      %v253 = vld [vmem:[%s191 + $0x154] sm:$0xff]
      %v254 = vld [vmem:[%s191 + $0x15c] sm:$0xff]
      %v255 = vld [vmem:[%s191 + $0x164] sm:$0xf]
      %v256 = vld [vmem:[%s191 + $0x168] sm:$0xff]
      %v257 = vld [vmem:[%s191 + $0x170] sm:$0xff]
      %v258 = vld [vmem:[%s191 + $0x178] sm:$0xff]
      %v259 = vld [vmem:[%s191 + $0x180] sm:$0xff]
      %v260 = vld [vmem:[%s191 + $0x188] sm:$0xf]
      %v261 = vld [vmem:[%s191 + $0x18c] sm:$0xff]
      %v262 = vld [vmem:[%s191 + $0x194] sm:$0xff]
      %v263 = vld [vmem:[%s191 + $0x19c] sm:$0xff]
      %v264 = vld [vmem:[%s191 + $0x1a4] sm:$0xff]
      %v265 = vld [vmem:[%s191 + $0x1ac] sm:$0xf]
      %v266 = vld [vmem:[%s191 + $0x1b0] sm:$0xff]
      %v267 = vld [vmem:[%s191 + $0x1b8] sm:$0xff]
      %v268 = vld [vmem:[%s191 + $0x1c0] sm:$0xff]
      %v269 = vld [vmem:[%s191 + $0x1c8] sm:$0xff]
      %v270 = vld [vmem:[%s191 + $0x1d0] sm:$0xf]
      %v271 = vld [vmem:[%s191 + $0x1d4] sm:$0xff]
      %v272 = vld [vmem:[%s191 + $0x1dc] sm:$0xff]
      %v273 = vld [vmem:[%s191 + $0x1e4] sm:$0xff]
      %v274 = vld [vmem:[%s191 + $0x1ec] sm:$0xff]
      %v275 = vld [vmem:[%s191 + $0x1f4] sm:$0xf]
      %v276 = vld [vmem:[%s191 + $0x1f8] sm:$0xff]
      %v277 = vld [vmem:[%s191 + $0x200] sm:$0xff]
      %v278 = vld [vmem:[%s191 + $0x208] sm:$0xff]
      %v279 = vld [vmem:[%s191 + $0x210] sm:$0xff]
      %v280 = vld [vmem:[%s191 + $0x218] sm:$0xf]
      %v281 = vld [vmem:[%s191 + $0x21c] sm:$0xff]
      %v282 = vld [vmem:[%s191 + $0x224] sm:$0xff]
      %v283 = vld [vmem:[%s191 + $0x22c] sm:$0xff]
      %v284 = vld [vmem:[%s191 + $0x234] sm:$0xff]
      %v285 = vld [vmem:[%s191 + $0x23c] sm:$0xf]
      %v286 = vld [vmem:[%s191 + $0x240] sm:$0xff]
      %v287 = vld [vmem:[%s191 + $0x248] sm:$0xff]
      %v288 = vld [vmem:[%s191 + $0x250] sm:$0xff]
      %v289 = vld [vmem:[%s191 + $0x258] sm:$0xff]
      %v290 = vld [vmem:[%s191 + $0x260] sm:$0xf]
      %v291 = vld [vmem:[%s191 + $0x264] sm:$0xff]
      %v292 = vld [vmem:[%s191 + $0x26c] sm:$0xff]
      %v293 = vld [vmem:[%s191 + $0x274] sm:$0xff]
      %v294 = vld [vmem:[%s191 + $0x27c] sm:$0xff]
      %v295 = vld [vmem:[%s191 + $0x284] sm:$0xf]
      %v296 = vld [vmem:[%s191 + $0x288] sm:$0xff]
      %v297 = vld [vmem:[%s191 + $0x290] sm:$0xff]
      %v298 = vld [vmem:[%s191 + $0x298] sm:$0xff]
      %v299 = vld [vmem:[%s191 + $0x2a0] sm:$0xff]
      %v300 = vld [vmem:[%s191 + $0x2a8] sm:$0xf]
      %v301 = vld [vmem:[%s191 + $0x2ac] sm:$0xff]
      %v302 = vld [vmem:[%s191 + $0x2b4] sm:$0xff]
      %v303 = vld [vmem:[%s191 + $0x2bc] sm:$0xff]
      %v304 = vld [vmem:[%s191 + $0x2c4] sm:$0xff]
      %v305 = vld [vmem:[%s191 + $0x2cc] sm:$0xf]
      %v306 = vld [vmem:[%s191 + $0x2d0] sm:$0xff]
      %v307 = vld [vmem:[%s191 + $0x2d8] sm:$0xff]
      %v308 = vld [vmem:[%s191 + $0x2e0] sm:$0xff]
      %v309 = vld [vmem:[%s191 + $0x2e8] sm:$0xff]
      %v310 = vld [vmem:[%s191 + $0x2f0] sm:$0xf]
      %v311 = vld [vmem:[%s191 + $0x2f4] sm:$0xff]
      %v312 = vld [vmem:[%s191 + $0x2fc] sm:$0xff]
      %v313 = vld [vmem:[%s191 + $0x304] sm:$0xff]
      %v314 = vld [vmem:[%s191 + $0x30c] sm:$0xff]
      %v315 = vld [vmem:[%s191 + $0x314] sm:$0xf]
      %v316 = vld [vmem:[%s191 + $0x318] sm:$0xff]
      %v317 = vld [vmem:[%s191 + $0x320] sm:$0xff]
      %v318 = vld [vmem:[%s191 + $0x328] sm:$0xff]
      %v319 = vld [vmem:[%s191 + $0x330] sm:$0xff]
      %v320 = vld [vmem:[%s191 + $0x338] sm:$0xf]
      %v321 = vld [vmem:[%s191 + $0x33c] sm:$0xff]
      %v322 = vld [vmem:[%s191 + $0x344] sm:$0xff]
      %v323 = vld [vmem:[%s191 + $0x34c] sm:$0xff]
      %v324 = vld [vmem:[%s191 + $0x354] sm:$0xff]
      %v325 = vld [vmem:[%s191 + $0x35c] sm:$0xf]
      %v326 = vld [vmem:[%s191 + $0x360] sm:$0xff]
      %v327 = vld [vmem:[%s191 + $0x368] sm:$0xff]
      %v328 = vld [vmem:[%s191 + $0x370] sm:$0xff]
      %v329 = vld [vmem:[%s191 + $0x378] sm:$0xff]
      %v330 = vld [vmem:[%s191 + $0x380] sm:$0xf]
      %v331 = vld [vmem:[%s191 + $0x384] sm:$0xff]
      %v332 = vld [vmem:[%s191 + $0x38c] sm:$0xff]
      %v333 = vld [vmem:[%s191 + $0x394] sm:$0xff]
      %v334 = vld [vmem:[%s191 + $0x39c] sm:$0xff]
      %v335 = vld [vmem:[%s191 + $0x3a4] sm:$0xf]
      %v336 = vld [vmem:[%s191 + $0x3a8] sm:$0xff]
      %v337 = vld [vmem:[%s191 + $0x3b0] sm:$0xff]
      %v338 = vld [vmem:[%s191 + $0x3b8] sm:$0xff]
      %v339 = vld [vmem:[%s191 + $0x3c0] sm:$0xff]
      %v340 = vld [vmem:[%s191 + $0x3c8] sm:$0xf]
      %v341 = vld [vmem:[%s191 + $0x3cc] sm:$0xff]
      %v342 = vld [vmem:[%s191 + $0x3d4] sm:$0xff]
      %v343 = vld [vmem:[%s191 + $0x3dc] sm:$0xff]
      %v344 = vld [vmem:[%s191 + $0x3e4] sm:$0xff]
      %v345 = vld [vmem:[%s191 + $0x3ec] sm:$0xf]
      %v346 = vld [vmem:[%s191 + $0x3f0] sm:$0xff]
      %v347 = vld [vmem:[%s191 + $0x3f8] sm:$0xff]
      %v348 = vld [vmem:[%s191 + $0x400] sm:$0xff]
      %v349 = vld [vmem:[%s191 + $0x408] sm:$0xff]
      %v350 = vld [vmem:[%s191 + $0x410] sm:$0xf]
      %v351 = vld [vmem:[%s191 + $0x414] sm:$0xff]
      %v352 = vld [vmem:[%s191 + $0x41c] sm:$0xff]
      %v353 = vld [vmem:[%s191 + $0x424] sm:$0xff]
      %v354 = vld [vmem:[%s191 + $0x42c] sm:$0xff]
      %v355 = vld [vmem:[%s191 + $0x434] sm:$0xf]
      %v356 = vld [vmem:[%s191 + $0x438] sm:$0xff]
      %v357 = vld [vmem:[%s191 + $0x440] sm:$0xff]
      %v358 = vld [vmem:[%s191 + $0x448] sm:$0xff]
      %v359 = vld [vmem:[%s191 + $0x450] sm:$0xff]
      %v360 = vld [vmem:[%s191 + $0x458] sm:$0xf]
      %v361 = vld [vmem:[%s191 + $0x45c] sm:$0xff]
      %v362 = vld [vmem:[%s191 + $0x464] sm:$0xff]
      %v363 = vld [vmem:[%s191 + $0x46c] sm:$0xff]
      %v364 = vld [vmem:[%s191 + $0x474] sm:$0xff]
      %v365 = vld [vmem:[%s191 + $0x47c] sm:$0xf]
      %v366 = vld [vmem:[%s1] sm:$0xf]
      %v367 = vld [vmem:[%s1 + $0x4] sm:$0xf]
      %v368 = vld [vmem:[%s1 + $0x8] sm:$0xf]
      %v369 = vld [vmem:[%s1 + $0xc] sm:$0xf]
      %v370 = vld [vmem:[%s1 + $0x10] sm:$0xf]
      %v371 = vld [vmem:[%s1 + $0x14] sm:$0xf]
      %v372 = vld [vmem:[%s1 + $0x18] sm:$0xf]
      %v373 = vld [vmem:[%s1 + $0x1c] sm:$0xf]
      %v374 = vld [vmem:[%s1 + $0x20] sm:$0xf]
      %v375 = vld [vmem:[%s1 + $0x24] sm:$0xf]
      %v376 = vld [vmem:[%s1 + $0x28] sm:$0xf]
      %v377 = vld [vmem:[%s1 + $0x2c] sm:$0xf]
      %v378 = vld [vmem:[%s1 + $0x30] sm:$0xf]
      %v379 = vld [vmem:[%s1 + $0x34] sm:$0xf]
      %v380 = vld [vmem:[%s1 + $0x38] sm:$0xf]
      %v381 = vld [vmem:[%s1 + $0x3c] sm:$0xf]
      %v382 = vld [vmem:[%s1 + $0x40] sm:$0xf]
      %v383 = vld [vmem:[%s1 + $0x44] sm:$0xf]
      %v384 = vld [vmem:[%s1 + $0x48] sm:$0xf]
      %v385 = vld [vmem:[%s1 + $0x4c] sm:$0xf]
      %v386 = vld [vmem:[%s1 + $0x50] sm:$0xf]
      %v387 = vld [vmem:[%s1 + $0x54] sm:$0xf]
      %v388 = vld [vmem:[%s1 + $0x58] sm:$0xf]
      %v389 = vld [vmem:[%s1 + $0x5c] sm:$0xf]
      %v390 = vld [vmem:[%s1 + $0x60] sm:$0xf]
      %v391 = vld [vmem:[%s1 + $0x64] sm:$0xf]
      %v392 = vld [vmem:[%s1 + $0x68] sm:$0xf]
      %v393 = vld [vmem:[%s1 + $0x6c] sm:$0xf]
      %v394 = vld [vmem:[%s1 + $0x70] sm:$0xf]
      %v395 = vld [vmem:[%s1 + $0x74] sm:$0xf]
      %v396 = vld [vmem:[%s1 + $0x78] sm:$0xf]
      %v397 = vld [vmem:[%s1 + $0x7c] sm:$0xf]
      %v398 = vld [vmem:[%s1 + $0x80] sm:$0xf]
      %v399 = vld [vmem:[%s1 + $0x84] sm:$0xf]
      %v400 = vld [vmem:[%s1 + $0x88] sm:$0xf]
      %v401 = vld [vmem:[%s1 + $0x8c] sm:$0xf]
      %v402 = vld [vmem:[%s1 + $0x90] sm:$0xf]
      %v403 = vld [vmem:[%s1 + $0x94] sm:$0xf]
      %v404 = vld [vmem:[%s1 + $0x98] sm:$0xf]
      %v405 = vld [vmem:[%s1 + $0x9c] sm:$0xf]
      %v406 = vld [vmem:[%s1 + $0xa0] sm:$0xf]
      %v407 = vld [vmem:[%s1 + $0xa4] sm:$0xf]
      %v408 = vld [vmem:[%s1 + $0xa8] sm:$0xf]
      %v409 = vld [vmem:[%s1 + $0xac] sm:$0xf]
      %v410 = vld [vmem:[%s1 + $0xb0] sm:$0xf]
      %v411 = vld [vmem:[%s1 + $0xb4] sm:$0xf]
      %v412 = vld [vmem:[%s1 + $0xb8] sm:$0xf]
      %v413 = vld [vmem:[%s1 + $0xbc] sm:$0xf]
      %v414 = vld [vmem:[%s1 + $0xc0] sm:$0xf]
      %v415 = vld [vmem:[%s1 + $0xc4] sm:$0xf]
      %v416 = vld [vmem:[%s1 + $0xc8] sm:$0xf]
      %v417 = vld [vmem:[%s1 + $0xcc] sm:$0xf]
      %v418 = vld [vmem:[%s1 + $0xd0] sm:$0xf]
      %v419 = vld [vmem:[%s1 + $0xd4] sm:$0xf]
      %v420 = vld [vmem:[%s1 + $0xd8] sm:$0xf]
      %v421 = vld [vmem:[%s1 + $0xdc] sm:$0xf]
      %v422 = vld [vmem:[%s1 + $0xe0] sm:$0xf]
      %v423 = vld [vmem:[%s1 + $0xe4] sm:$0xf]
      %v424 = vld [vmem:[%s1 + $0xe8] sm:$0xf]
      %v425 = vld [vmem:[%s1 + $0xec] sm:$0xf]
      %v426 = vld [vmem:[%s1 + $0xf0] sm:$0xf]
      %v427 = vld [vmem:[%s1 + $0xf4] sm:$0xf]
      %v428 = vld [vmem:[%s1 + $0xf8] sm:$0xf]
      %v429 = vld [vmem:[%s1 + $0xfc] sm:$0xf]
      %v430 = vld [vmem:[%s1 + $0x100] sm:$0xf]
      %v431 = vld [vmem:[%s1 + $0x104] sm:$0xf]
      %v432 = vld [vmem:[%s1 + $0x108] sm:$0xf]
      %v433 = vld [vmem:[%s1 + $0x10c] sm:$0xf]
      %v434 = vld [vmem:[%s1 + $0x110] sm:$0xf]
      %v435 = vld [vmem:[%s1 + $0x114] sm:$0xf]
      %v436 = vld [vmem:[%s1 + $0x118] sm:$0xf]
      %v437 = vld [vmem:[%s1 + $0x11c] sm:$0xf]
      %v438 = vld [vmem:[%s1 + $0x120] sm:$0xf]
      %v439 = vld [vmem:[%s1 + $0x124] sm:$0xf]
      %v440 = vld [vmem:[%s1 + $0x128] sm:$0xf]
      %v441 = vld [vmem:[%s1 + $0x12c] sm:$0xf]
      %v442 = vld [vmem:[%s1 + $0x130] sm:$0xf]
      %v443 = vld [vmem:[%s1 + $0x134] sm:$0xf]
      %v444 = vld [vmem:[%s1 + $0x138] sm:$0xf]
      %v445 = vld [vmem:[%s1 + $0x13c] sm:$0xf]
      %v446 = vld [vmem:[%s1 + $0x140] sm:$0xf]
      %v447 = vld [vmem:[%s1 + $0x144] sm:$0xf]
      %v448 = vld [vmem:[%s1 + $0x148] sm:$0xf]
      %v449 = vld [vmem:[%s1 + $0x14c] sm:$0xf]
      %v450 = vld [vmem:[%s1 + $0x150] sm:$0xf]
      %v451 = vld [vmem:[%s1 + $0x154] sm:$0xf]
      %v452 = vld [vmem:[%s1 + $0x158] sm:$0xf]
      %v453 = vld [vmem:[%s1 + $0x15c] sm:$0xf]
      %v454 = vld [vmem:[%s1 + $0x160] sm:$0xf]
      %v455 = vld [vmem:[%s1 + $0x164] sm:$0xf]
      %v456 = vld [vmem:[%s1 + $0x168] sm:$0xf]
      %v457 = vld [vmem:[%s1 + $0x16c] sm:$0xf]
      %v458 = vld [vmem:[%s1 + $0x170] sm:$0xf]
      %v459 = vld [vmem:[%s1 + $0x174] sm:$0xf]
      %v460 = vld [vmem:[%s1 + $0x178] sm:$0xf]
      %v461 = vld [vmem:[%s1 + $0x17c] sm:$0xf]
      %v462 = vld [vmem:[%s1 + $0x180] sm:$0xf]
      %v463 = vld [vmem:[%s1 + $0x184] sm:$0xf]
      %v464 = vld [vmem:[%s1 + $0x188] sm:$0xf]
      %v465 = vld [vmem:[%s1 + $0x18c] sm:$0xf]
      %v466 = vld [vmem:[%s1 + $0x190] sm:$0xf]
      %v467 = vld [vmem:[%s1 + $0x194] sm:$0xf]
      %v468 = vld [vmem:[%s1 + $0x198] sm:$0xf]
      %v469 = vld [vmem:[%s1 + $0x19c] sm:$0xf]
      %v470 = vld [vmem:[%s1 + $0x1a0] sm:$0xf]
      %v471 = vld [vmem:[%s1 + $0x1a4] sm:$0xf]
      %v472 = vld [vmem:[%s1 + $0x1a8] sm:$0xf]
      %v473 = vld [vmem:[%s1 + $0x1ac] sm:$0xf]
      %v474 = vld [vmem:[%s1 + $0x1b0] sm:$0xf]
      %v475 = vld [vmem:[%s1 + $0x1b4] sm:$0xf]
      %v476 = vld [vmem:[%s1 + $0x1b8] sm:$0xf]
      %v477 = vld [vmem:[%s1 + $0x1bc] sm:$0xf]
      %v478 = vld [vmem:[%s1 + $0x1c0] sm:$0xf]
      %v479 = vld [vmem:[%s1 + $0x1c4] sm:$0xf]
      %v480 = vld [vmem:[%s1 + $0x1c8] sm:$0xf]
      %v481 = vld [vmem:[%s1 + $0x1cc] sm:$0xf]
      %v482 = vld [vmem:[%s1 + $0x1d0] sm:$0xf]
      %v483 = vld [vmem:[%s1 + $0x1d4] sm:$0xf]
      %v484 = vld [vmem:[%s1 + $0x1d8] sm:$0xf]
      %v485 = vld [vmem:[%s1 + $0x1dc] sm:$0xf]
      %v486 = vld [vmem:[%s1 + $0x1e0] sm:$0xf]
      %v487 = vld [vmem:[%s1 + $0x1e4] sm:$0xf]
      %v488 = vld [vmem:[%s1 + $0x1e8] sm:$0xf]
      %v489 = vld [vmem:[%s1 + $0x1ec] sm:$0xf]
      %v490 = vld [vmem:[%s1 + $0x1f0] sm:$0xf]
      %v491 = vld [vmem:[%s1 + $0x1f4] sm:$0xf]
      %v492 = vld [vmem:[%s1 + $0x1f8] sm:$0xf]
      %v493 = vld [vmem:[%s1 + $0x1fc] sm:$0xf]
      %v494 = vld [vmem:[%s1 + $0x200] sm:$0xf]
      %v495 = vld [vmem:[%s1 + $0x204] sm:$0xf]
      %v496 = vld [vmem:[%s1 + $0x208] sm:$0xf]
      %v497 = vld [vmem:[%s1 + $0x20c] sm:$0xf]
      %v498 = vld [vmem:[%s1 + $0x210] sm:$0xf]
      %v499 = vld [vmem:[%s1 + $0x214] sm:$0xf]
      %v500 = vld [vmem:[%s1 + $0x218] sm:$0xf]
      %v501 = vld [vmem:[%s1 + $0x21c] sm:$0xf]
      %v502 = vld [vmem:[%s1 + $0x220] sm:$0xf]
      %v503 = vld [vmem:[%s1 + $0x224] sm:$0xf]
      %v504 = vld [vmem:[%s1 + $0x228] sm:$0xf]
      %v505 = vld [vmem:[%s1 + $0x22c] sm:$0xf]
      %v506 = vld [vmem:[%s1 + $0x230] sm:$0xf]
      %v507 = vld [vmem:[%s1 + $0x234] sm:$0xf]
      %v508 = vld [vmem:[%s1 + $0x238] sm:$0xf]
      %v509 = vld [vmem:[%s1 + $0x23c] sm:$0xf]
      %v670 = vunpack.c.l.b16 %v206
      %v671 = vunpack.c.h.b16 %v206
      %v672 = vunpack.c.l.b16 %v207
      %v673 = vunpack.c.h.b16 %v207
      %v674 = vunpack.c.l.b16 %v208
      %v675 = vunpack.c.h.b16 %v208
      %v676 = vunpack.c.l.b16 %v209
      %v677 = vunpack.c.h.b16 %v209
      %v678 = vunpack.c.l.b16 %v210
      %v679 = vunpack.c.l.b16 %v211
      %v680 = vunpack.c.h.b16 %v211
      %v681 = vunpack.c.l.b16 %v212
      %v682 = vunpack.c.h.b16 %v212
      %v683 = vunpack.c.l.b16 %v213
      %v684 = vunpack.c.h.b16 %v213
      %v685 = vunpack.c.l.b16 %v214
      %v686 = vunpack.c.h.b16 %v214
      %v687 = vunpack.c.l.b16 %v215
      %v688 = vunpack.c.l.b16 %v216
      %v689 = vunpack.c.h.b16 %v216
      %v690 = vunpack.c.l.b16 %v217
      %v691 = vunpack.c.h.b16 %v217
      %v692 = vunpack.c.l.b16 %v218
      %v693 = vunpack.c.h.b16 %v218
      %v694 = vunpack.c.l.b16 %v219
      %v695 = vunpack.c.h.b16 %v219
      %v696 = vunpack.c.l.b16 %v220
      %v697 = vunpack.c.l.b16 %v221
      %v698 = vunpack.c.h.b16 %v221
      %v699 = vunpack.c.l.b16 %v222
      %v700 = vunpack.c.h.b16 %v222
      %v701 = vunpack.c.l.b16 %v223
      %v702 = vunpack.c.h.b16 %v223
      %v703 = vunpack.c.l.b16 %v224
      %v704 = vunpack.c.h.b16 %v224
      %v705 = vunpack.c.l.b16 %v225
      %v706 = vunpack.c.l.b16 %v226
      %v707 = vunpack.c.h.b16 %v226
      %v708 = vunpack.c.l.b16 %v227
      %v709 = vunpack.c.h.b16 %v227
      %v710 = vunpack.c.l.b16 %v228
      %v711 = vunpack.c.h.b16 %v228
      %v712 = vunpack.c.l.b16 %v229
      %v713 = vunpack.c.h.b16 %v229
      %v714 = vunpack.c.l.b16 %v230
      %v715 = vunpack.c.l.b16 %v231
      %v716 = vunpack.c.h.b16 %v231
      %v717 = vunpack.c.l.b16 %v232
      %v718 = vunpack.c.h.b16 %v232
      %v719 = vunpack.c.l.b16 %v233
      %v720 = vunpack.c.h.b16 %v233
      %v721 = vunpack.c.l.b16 %v234
      %v722 = vunpack.c.h.b16 %v234
      %v723 = vunpack.c.l.b16 %v235
      %v724 = vunpack.c.l.b16 %v236
      %v725 = vunpack.c.h.b16 %v236
      %v726 = vunpack.c.l.b16 %v237
      %v727 = vunpack.c.h.b16 %v237
      %v728 = vunpack.c.l.b16 %v238
      %v729 = vunpack.c.h.b16 %v238
      %v730 = vunpack.c.l.b16 %v239
      %v731 = vunpack.c.h.b16 %v239
      %v732 = vunpack.c.l.b16 %v240
      %v733 = vunpack.c.l.b16 %v241
      %v734 = vunpack.c.h.b16 %v241
      %v735 = vunpack.c.l.b16 %v242
      %v736 = vunpack.c.h.b16 %v242
      %v737 = vunpack.c.l.b16 %v243
      %v738 = vunpack.c.h.b16 %v243
      %v739 = vunpack.c.l.b16 %v244
      %v740 = vunpack.c.h.b16 %v244
      %v741 = vunpack.c.l.b16 %v245
      %v742 = vunpack.c.l.b16 %v246
      %v743 = vunpack.c.h.b16 %v246
      %v744 = vunpack.c.l.b16 %v247
      %v745 = vunpack.c.h.b16 %v247
      %v746 = vunpack.c.l.b16 %v248
      %v747 = vunpack.c.h.b16 %v248
      %v748 = vunpack.c.l.b16 %v249
      %v749 = vunpack.c.h.b16 %v249
      %v750 = vunpack.c.l.b16 %v250
      %v751 = vunpack.c.l.b16 %v251
      %v752 = vunpack.c.h.b16 %v251
      %v753 = vunpack.c.l.b16 %v252
      %v754 = vunpack.c.h.b16 %v252
      %v755 = vunpack.c.l.b16 %v253
      %v756 = vunpack.c.h.b16 %v253
      %v757 = vunpack.c.l.b16 %v254
      %v758 = vunpack.c.h.b16 %v254
      %v759 = vunpack.c.l.b16 %v255
      %v760 = vunpack.c.l.b16 %v256
      %v761 = vunpack.c.h.b16 %v256
      %v762 = vunpack.c.l.b16 %v257
      %v763 = vunpack.c.h.b16 %v257
      %v764 = vunpack.c.l.b16 %v258
      %v765 = vunpack.c.h.b16 %v258
      %v766 = vunpack.c.l.b16 %v259
      %v767 = vunpack.c.h.b16 %v259
      %v768 = vunpack.c.l.b16 %v260
      %v769 = vunpack.c.l.b16 %v261
      %v770 = vunpack.c.h.b16 %v261
      %v771 = vunpack.c.l.b16 %v262
      %v772 = vunpack.c.h.b16 %v262
      %v773 = vunpack.c.l.b16 %v263
      %v774 = vunpack.c.h.b16 %v263
      %v775 = vunpack.c.l.b16 %v264
      %v776 = vunpack.c.h.b16 %v264
      %v777 = vunpack.c.l.b16 %v265
      %v778 = vunpack.c.l.b16 %v266
      %v779 = vunpack.c.h.b16 %v266
      %v780 = vunpack.c.l.b16 %v267
      %v781 = vunpack.c.h.b16 %v267
      %v782 = vunpack.c.l.b16 %v268
      %v783 = vunpack.c.h.b16 %v268
      %v784 = vunpack.c.l.b16 %v269
      %v785 = vunpack.c.h.b16 %v269
      %v786 = vunpack.c.l.b16 %v270
      %v787 = vunpack.c.l.b16 %v271
      %v788 = vunpack.c.h.b16 %v271
      %v789 = vunpack.c.l.b16 %v272
      %v790 = vunpack.c.h.b16 %v272
      %v791 = vunpack.c.l.b16 %v273
      %v792 = vunpack.c.h.b16 %v273
      %v793 = vunpack.c.l.b16 %v274
      %v794 = vunpack.c.h.b16 %v274
      %v795 = vunpack.c.l.b16 %v275
      %v796 = vunpack.c.l.b16 %v276
      %v797 = vunpack.c.h.b16 %v276
      %v798 = vunpack.c.l.b16 %v277
      %v799 = vunpack.c.h.b16 %v277
      %v800 = vunpack.c.l.b16 %v278
      %v801 = vunpack.c.h.b16 %v278
      %v802 = vunpack.c.l.b16 %v279
      %v803 = vunpack.c.h.b16 %v279
      %v804 = vunpack.c.l.b16 %v280
      %v805 = vunpack.c.l.b16 %v281
      %v806 = vunpack.c.h.b16 %v281
      %v807 = vunpack.c.l.b16 %v282
      %v808 = vunpack.c.h.b16 %v282
      %v809 = vunpack.c.l.b16 %v283
      %v810 = vunpack.c.h.b16 %v283
      %v811 = vunpack.c.l.b16 %v284
      %v812 = vunpack.c.h.b16 %v284
      %v813 = vunpack.c.l.b16 %v285
      %v814 = vunpack.c.l.b16 %v286
      %v815 = vunpack.c.h.b16 %v286
      %v816 = vunpack.c.l.b16 %v287
      %v817 = vunpack.c.h.b16 %v287
      %v818 = vunpack.c.l.b16 %v288
      %v819 = vunpack.c.h.b16 %v288
      %v820 = vunpack.c.l.b16 %v289
      %v821 = vunpack.c.h.b16 %v289
      %v822 = vunpack.c.l.b16 %v290
      %v823 = vunpack.c.l.b16 %v291
      %v824 = vunpack.c.h.b16 %v291
      %v825 = vunpack.c.l.b16 %v292
      %v826 = vunpack.c.h.b16 %v292
      %v827 = vunpack.c.l.b16 %v293
      %v828 = vunpack.c.h.b16 %v293
      %v829 = vunpack.c.l.b16 %v294
      %v830 = vunpack.c.h.b16 %v294
      %v831 = vunpack.c.l.b16 %v295
      %v832 = vunpack.c.l.b16 %v296
      %v833 = vunpack.c.h.b16 %v296
      %v834 = vunpack.c.l.b16 %v297
      %v835 = vunpack.c.h.b16 %v297
      %v836 = vunpack.c.l.b16 %v298
      %v837 = vunpack.c.h.b16 %v298
      %v838 = vunpack.c.l.b16 %v299
      %v839 = vunpack.c.h.b16 %v299
      %v840 = vunpack.c.l.b16 %v300
      %v841 = vunpack.c.l.b16 %v301
      %v842 = vunpack.c.h.b16 %v301
      %v843 = vunpack.c.l.b16 %v302
      %v844 = vunpack.c.h.b16 %v302
      %v845 = vunpack.c.l.b16 %v303
      %v846 = vunpack.c.h.b16 %v303
      %v847 = vunpack.c.l.b16 %v304
      %v848 = vunpack.c.h.b16 %v304
      %v849 = vunpack.c.l.b16 %v305
      %v850 = vunpack.c.l.b16 %v306
      %v851 = vunpack.c.h.b16 %v306
      %v852 = vunpack.c.l.b16 %v307
      %v853 = vunpack.c.h.b16 %v307
      %v854 = vunpack.c.l.b16 %v308
      %v855 = vunpack.c.h.b16 %v308
      %v856 = vunpack.c.l.b16 %v309
      %v857 = vunpack.c.h.b16 %v309
      %v858 = vunpack.c.l.b16 %v310
      %v859 = vunpack.c.l.b16 %v311
      %v860 = vunpack.c.h.b16 %v311
      %v861 = vunpack.c.l.b16 %v312
      %v862 = vunpack.c.h.b16 %v312
      %v863 = vunpack.c.l.b16 %v313
      %v864 = vunpack.c.h.b16 %v313
      %v865 = vunpack.c.l.b16 %v314
      %v866 = vunpack.c.h.b16 %v314
      %v867 = vunpack.c.l.b16 %v315
      %v868 = vunpack.c.l.b16 %v316
      %v869 = vunpack.c.h.b16 %v316
      %v870 = vunpack.c.l.b16 %v317
      %v871 = vunpack.c.h.b16 %v317
      %v872 = vunpack.c.l.b16 %v318
      %v873 = vunpack.c.h.b16 %v318
      %v874 = vunpack.c.l.b16 %v319
      %v875 = vunpack.c.h.b16 %v319
      %v876 = vunpack.c.l.b16 %v320
      %v877 = vunpack.c.l.b16 %v321
      %v878 = vunpack.c.h.b16 %v321
      %v879 = vunpack.c.l.b16 %v322
      %v880 = vunpack.c.h.b16 %v322
      %v881 = vunpack.c.l.b16 %v323
      %v882 = vunpack.c.h.b16 %v323
      %v883 = vunpack.c.l.b16 %v324
      %v884 = vunpack.c.h.b16 %v324
      %v885 = vunpack.c.l.b16 %v325
      %v886 = vunpack.c.l.b16 %v326
      %v887 = vunpack.c.h.b16 %v326
      %v888 = vunpack.c.l.b16 %v327
      %v889 = vunpack.c.h.b16 %v327
      %v890 = vunpack.c.l.b16 %v328
      %v891 = vunpack.c.h.b16 %v328
      %v892 = vunpack.c.l.b16 %v329
      %v893 = vunpack.c.h.b16 %v329
      %v894 = vunpack.c.l.b16 %v330
      %v895 = vunpack.c.l.b16 %v331
      %v896 = vunpack.c.h.b16 %v331
      %v897 = vunpack.c.l.b16 %v332
      %v898 = vunpack.c.h.b16 %v332
      %v899 = vunpack.c.l.b16 %v333
      %v900 = vunpack.c.h.b16 %v333
      %v901 = vunpack.c.l.b16 %v334
      %v902 = vunpack.c.h.b16 %v334
      %v903 = vunpack.c.l.b16 %v335
      %v904 = vunpack.c.l.b16 %v336
      %v905 = vunpack.c.h.b16 %v336
      %v906 = vunpack.c.l.b16 %v337
      %v907 = vunpack.c.h.b16 %v337
      %v908 = vunpack.c.l.b16 %v338
      %v909 = vunpack.c.h.b16 %v338
      %v910 = vunpack.c.l.b16 %v339
      %v911 = vunpack.c.h.b16 %v339
      %v912 = vunpack.c.l.b16 %v340
      %v913 = vunpack.c.l.b16 %v341
      %v914 = vunpack.c.h.b16 %v341
      %v915 = vunpack.c.l.b16 %v342
      %v916 = vunpack.c.h.b16 %v342
      %v917 = vunpack.c.l.b16 %v343
      %v918 = vunpack.c.h.b16 %v343
      %v919 = vunpack.c.l.b16 %v344
      %v920 = vunpack.c.h.b16 %v344
      %v921 = vunpack.c.l.b16 %v345
      %v922 = vunpack.c.l.b16 %v346
      %v923 = vunpack.c.h.b16 %v346
      %v924 = vunpack.c.l.b16 %v347
      %v925 = vunpack.c.h.b16 %v347
      %v926 = vunpack.c.l.b16 %v348
      %v927 = vunpack.c.h.b16 %v348
      %v928 = vunpack.c.l.b16 %v349
      %v929 = vunpack.c.h.b16 %v349
      %v930 = vunpack.c.l.b16 %v350
      %v931 = vunpack.c.l.b16 %v351
      %v932 = vunpack.c.h.b16 %v351
      %v933 = vunpack.c.l.b16 %v352
      %v934 = vunpack.c.h.b16 %v352
      %v935 = vunpack.c.l.b16 %v353
      %v936 = vunpack.c.h.b16 %v353
      %v937 = vunpack.c.l.b16 %v354
      %v938 = vunpack.c.h.b16 %v354
      %v939 = vunpack.c.l.b16 %v355
      %v940 = vunpack.c.l.b16 %v356
      %v941 = vunpack.c.h.b16 %v356
      %v942 = vunpack.c.l.b16 %v357
      %v943 = vunpack.c.h.b16 %v357
      %v944 = vunpack.c.l.b16 %v358
      %v945 = vunpack.c.h.b16 %v358
      %v946 = vunpack.c.l.b16 %v359
      %v947 = vunpack.c.h.b16 %v359
      %v948 = vunpack.c.l.b16 %v360
      %v949 = vunpack.c.l.b16 %v361
      %v950 = vunpack.c.h.b16 %v361
      %v951 = vunpack.c.l.b16 %v362
      %v952 = vunpack.c.h.b16 %v362
      %v953 = vunpack.c.l.b16 %v363
      %v954 = vunpack.c.h.b16 %v363
      %v955 = vunpack.c.l.b16 %v364
      %v956 = vunpack.c.h.b16 %v364
      %v957 = vunpack.c.l.b16 %v365
      %v958 = vpack.c.b16 %v679, %v670
      %v959 = vpack.c.b16 %v680, %v671
      %v960 = vpack.c.b16 %v681, %v672
      %v961 = vpack.c.b16 %v682, %v673
      %v962 = vpack.c.b16 %v683, %v674
      %v963 = vpack.c.b16 %v684, %v675
      %v964 = vpack.c.b16 %v685, %v676
      %v965 = vpack.c.b16 %v686, %v677
      %v966 = vpack.c.b16 %v687, %v678
      %v967 = vpack.c.b16 %v697, %v688
      %v968 = vpack.c.b16 %v698, %v689
      %v969 = vpack.c.b16 %v699, %v690
      %v970 = vpack.c.b16 %v700, %v691
      %v971 = vpack.c.b16 %v701, %v692
      %v972 = vpack.c.b16 %v702, %v693
      %v973 = vpack.c.b16 %v703, %v694
      %v974 = vpack.c.b16 %v704, %v695
      %v975 = vpack.c.b16 %v705, %v696
      %v976 = vpack.c.b16 %v715, %v706
      %v977 = vpack.c.b16 %v716, %v707
      %v978 = vpack.c.b16 %v717, %v708
      %v979 = vpack.c.b16 %v718, %v709
      %v980 = vpack.c.b16 %v719, %v710
      %v981 = vpack.c.b16 %v720, %v711
      %v982 = vpack.c.b16 %v721, %v712
      %v983 = vpack.c.b16 %v722, %v713
      %v984 = vpack.c.b16 %v723, %v714
      %v985 = vpack.c.b16 %v733, %v724
      %v986 = vpack.c.b16 %v734, %v725
      %v987 = vpack.c.b16 %v735, %v726
      %v988 = vpack.c.b16 %v736, %v727
      %v989 = vpack.c.b16 %v737, %v728
      %v990 = vpack.c.b16 %v738, %v729
      %v991 = vpack.c.b16 %v739, %v730
      %v992 = vpack.c.b16 %v740, %v731
      %v993 = vpack.c.b16 %v741, %v732
      %v994 = vpack.c.b16 %v751, %v742
      %v995 = vpack.c.b16 %v752, %v743
      %v996 = vpack.c.b16 %v753, %v744
      %v997 = vpack.c.b16 %v754, %v745
      %v998 = vpack.c.b16 %v755, %v746
      %v999 = vpack.c.b16 %v756, %v747
      %v1000 = vpack.c.b16 %v757, %v748
      %v1001 = vpack.c.b16 %v758, %v749
      %v1002 = vpack.c.b16 %v759, %v750
      %v1003 = vpack.c.b16 %v769, %v760
      %v1004 = vpack.c.b16 %v770, %v761
      %v1005 = vpack.c.b16 %v771, %v762
      %v1006 = vpack.c.b16 %v772, %v763
      %v1007 = vpack.c.b16 %v773, %v764
      %v1008 = vpack.c.b16 %v774, %v765
      %v1009 = vpack.c.b16 %v775, %v766
      %v1010 = vpack.c.b16 %v776, %v767
      %v1011 = vpack.c.b16 %v777, %v768
      %v1012 = vpack.c.b16 %v787, %v778
      %v1013 = vpack.c.b16 %v788, %v779
      %v1014 = vpack.c.b16 %v789, %v780
      %v1015 = vpack.c.b16 %v790, %v781
      %v1016 = vpack.c.b16 %v791, %v782
      %v1017 = vpack.c.b16 %v792, %v783
      %v1018 = vpack.c.b16 %v793, %v784
      %v1019 = vpack.c.b16 %v794, %v785
      %v1020 = vpack.c.b16 %v795, %v786
      %v1021 = vpack.c.b16 %v805, %v796
      %v1022 = vpack.c.b16 %v806, %v797
      %v1023 = vpack.c.b16 %v807, %v798
      %v1024 = vpack.c.b16 %v808, %v799
      %v1025 = vpack.c.b16 %v809, %v800
      %v1026 = vpack.c.b16 %v810, %v801
      %v1027 = vpack.c.b16 %v811, %v802
      %v1028 = vpack.c.b16 %v812, %v803
      %v1029 = vpack.c.b16 %v813, %v804
      %v1030 = vpack.c.b16 %v823, %v814
      %v1031 = vpack.c.b16 %v824, %v815
      %v1032 = vpack.c.b16 %v825, %v816
      %v1033 = vpack.c.b16 %v826, %v817
      %v1034 = vpack.c.b16 %v827, %v818
      %v1035 = vpack.c.b16 %v828, %v819
      %v1036 = vpack.c.b16 %v829, %v820
      %v1037 = vpack.c.b16 %v830, %v821
      %v1038 = vpack.c.b16 %v831, %v822
      %v1039 = vpack.c.b16 %v841, %v832
      %v1040 = vpack.c.b16 %v842, %v833
      %v1041 = vpack.c.b16 %v843, %v834
      %v1042 = vpack.c.b16 %v844, %v835
      %v1043 = vpack.c.b16 %v845, %v836
      %v1044 = vpack.c.b16 %v846, %v837
      %v1045 = vpack.c.b16 %v847, %v838
      %v1046 = vpack.c.b16 %v848, %v839
      %v1047 = vpack.c.b16 %v849, %v840
      %v1048 = vpack.c.b16 %v859, %v850
      %v1049 = vpack.c.b16 %v860, %v851
      %v1050 = vpack.c.b16 %v861, %v852
      %v1051 = vpack.c.b16 %v862, %v853
      %v1052 = vpack.c.b16 %v863, %v854
      %v1053 = vpack.c.b16 %v864, %v855
      %v1054 = vpack.c.b16 %v865, %v856
      %v1055 = vpack.c.b16 %v866, %v857
      %v1056 = vpack.c.b16 %v867, %v858
      %v1057 = vpack.c.b16 %v877, %v868
      %v1058 = vpack.c.b16 %v878, %v869
      %v1059 = vpack.c.b16 %v879, %v870
      %v1060 = vpack.c.b16 %v880, %v871
      %v1061 = vpack.c.b16 %v881, %v872
      %v1062 = vpack.c.b16 %v882, %v873
      %v1063 = vpack.c.b16 %v883, %v874
      %v1064 = vpack.c.b16 %v884, %v875
      %v1065 = vpack.c.b16 %v885, %v876
      %v1066 = vpack.c.b16 %v895, %v886
      %v1067 = vpack.c.b16 %v896, %v887
      %v1068 = vpack.c.b16 %v897, %v888
      %v1069 = vpack.c.b16 %v898, %v889
      %v1070 = vpack.c.b16 %v899, %v890
      %v1071 = vpack.c.b16 %v900, %v891
      %v1072 = vpack.c.b16 %v901, %v892
      %v1073 = vpack.c.b16 %v902, %v893
      %v1074 = vpack.c.b16 %v903, %v894
      %v1075 = vpack.c.b16 %v913, %v904
      %v1076 = vpack.c.b16 %v914, %v905
      %v1077 = vpack.c.b16 %v915, %v906
      %v1078 = vpack.c.b16 %v916, %v907
      %v1079 = vpack.c.b16 %v917, %v908
      %v1080 = vpack.c.b16 %v918, %v909
      %v1081 = vpack.c.b16 %v919, %v910
      %v1082 = vpack.c.b16 %v920, %v911
      %v1083 = vpack.c.b16 %v921, %v912
      %v1084 = vpack.c.b16 %v931, %v922
      %v1085 = vpack.c.b16 %v932, %v923
      %v1086 = vpack.c.b16 %v933, %v924
      %v1087 = vpack.c.b16 %v934, %v925
      %v1088 = vpack.c.b16 %v935, %v926
      %v1089 = vpack.c.b16 %v936, %v927
      %v1090 = vpack.c.b16 %v937, %v928
      %v1091 = vpack.c.b16 %v938, %v929
      %v1092 = vpack.c.b16 %v939, %v930
      %v1093 = vpack.c.b16 %v949, %v940
      %v1094 = vpack.c.b16 %v950, %v941
      %v1095 = vpack.c.b16 %v951, %v942
      %v1096 = vpack.c.b16 %v952, %v943
      %v1097 = vpack.c.b16 %v953, %v944
      %v1098 = vpack.c.b16 %v954, %v945
      %v1099 = vpack.c.b16 %v955, %v946
      %v1100 = vpack.c.b16 %v956, %v947
      %v1101 = vpack.c.b16 %v957, %v948
      %v1390 = vunpack.c.l.b16 %v366
      %v1391 = vunpack.c.l.b16 %v367
      %v1392 = vunpack.c.l.b16 %v368
      %v1393 = vunpack.c.l.b16 %v369
      %v1394 = vunpack.c.l.b16 %v370
      %v1395 = vunpack.c.l.b16 %v371
      %v1396 = vunpack.c.l.b16 %v372
      %v1397 = vunpack.c.l.b16 %v373
      %v1398 = vunpack.c.l.b16 %v374
      %v1399 = vunpack.c.l.b16 %v375
      %v1400 = vunpack.c.l.b16 %v376
      %v1401 = vunpack.c.l.b16 %v377
      %v1402 = vunpack.c.l.b16 %v378
      %v1403 = vunpack.c.l.b16 %v379
      %v1404 = vunpack.c.l.b16 %v380
      %v1405 = vunpack.c.l.b16 %v381
      %v1406 = vunpack.c.l.b16 %v382
      %v1407 = vunpack.c.l.b16 %v383
      %v1408 = vunpack.c.l.b16 %v384
      %v1409 = vunpack.c.l.b16 %v385
      %v1410 = vunpack.c.l.b16 %v386
      %v1411 = vunpack.c.l.b16 %v387
      %v1412 = vunpack.c.l.b16 %v388
      %v1413 = vunpack.c.l.b16 %v389
      %v1414 = vunpack.c.l.b16 %v390
      %v1415 = vunpack.c.l.b16 %v391
      %v1416 = vunpack.c.l.b16 %v392
      %v1417 = vunpack.c.l.b16 %v393
      %v1418 = vunpack.c.l.b16 %v394
      %v1419 = vunpack.c.l.b16 %v395
      %v1420 = vunpack.c.l.b16 %v396
      %v1421 = vunpack.c.l.b16 %v397
      %v1422 = vunpack.c.l.b16 %v398
      %v1423 = vunpack.c.l.b16 %v399
      %v1424 = vunpack.c.l.b16 %v400
      %v1425 = vunpack.c.l.b16 %v401
      %v1426 = vunpack.c.l.b16 %v402
      %v1427 = vunpack.c.l.b16 %v403
      %v1428 = vunpack.c.l.b16 %v404
      %v1429 = vunpack.c.l.b16 %v405
      %v1430 = vunpack.c.l.b16 %v406
      %v1431 = vunpack.c.l.b16 %v407
      %v1432 = vunpack.c.l.b16 %v408
      %v1433 = vunpack.c.l.b16 %v409
      %v1434 = vunpack.c.l.b16 %v410
      %v1435 = vunpack.c.l.b16 %v411
      %v1436 = vunpack.c.l.b16 %v412
      %v1437 = vunpack.c.l.b16 %v413
      %v1438 = vunpack.c.l.b16 %v414
      %v1439 = vunpack.c.l.b16 %v415
      %v1440 = vunpack.c.l.b16 %v416
      %v1441 = vunpack.c.l.b16 %v417
      %v1442 = vunpack.c.l.b16 %v418
      %v1443 = vunpack.c.l.b16 %v419
      %v1444 = vunpack.c.l.b16 %v420
      %v1445 = vunpack.c.l.b16 %v421
      %v1446 = vunpack.c.l.b16 %v422
      %v1447 = vunpack.c.l.b16 %v423
      %v1448 = vunpack.c.l.b16 %v424
      %v1449 = vunpack.c.l.b16 %v425
      %v1450 = vunpack.c.l.b16 %v426
      %v1451 = vunpack.c.l.b16 %v427
      %v1452 = vunpack.c.l.b16 %v428
      %v1453 = vunpack.c.l.b16 %v429
      %v1454 = vunpack.c.l.b16 %v430
      %v1455 = vunpack.c.l.b16 %v431
      %v1456 = vunpack.c.l.b16 %v432
      %v1457 = vunpack.c.l.b16 %v433
      %v1458 = vunpack.c.l.b16 %v434
      %v1459 = vunpack.c.l.b16 %v435
      %v1460 = vunpack.c.l.b16 %v436
      %v1461 = vunpack.c.l.b16 %v437
      %v1462 = vunpack.c.l.b16 %v438
      %v1463 = vunpack.c.l.b16 %v439
      %v1464 = vunpack.c.l.b16 %v440
      %v1465 = vunpack.c.l.b16 %v441
      %v1466 = vunpack.c.l.b16 %v442
      %v1467 = vunpack.c.l.b16 %v443
      %v1468 = vunpack.c.l.b16 %v444
      %v1469 = vunpack.c.l.b16 %v445
      %v1470 = vunpack.c.l.b16 %v446
      %v1471 = vunpack.c.l.b16 %v447
      %v1472 = vunpack.c.l.b16 %v448
      %v1473 = vunpack.c.l.b16 %v449
      %v1474 = vunpack.c.l.b16 %v450
      %v1475 = vunpack.c.l.b16 %v451
      %v1476 = vunpack.c.l.b16 %v452
      %v1477 = vunpack.c.l.b16 %v453
      %v1478 = vunpack.c.l.b16 %v454
      %v1479 = vunpack.c.l.b16 %v455
      %v1480 = vunpack.c.l.b16 %v456
      %v1481 = vunpack.c.l.b16 %v457
      %v1482 = vunpack.c.l.b16 %v458
      %v1483 = vunpack.c.l.b16 %v459
      %v1484 = vunpack.c.l.b16 %v460
      %v1485 = vunpack.c.l.b16 %v461
      %v1486 = vunpack.c.l.b16 %v462
      %v1487 = vunpack.c.l.b16 %v463
      %v1488 = vunpack.c.l.b16 %v464
      %v1489 = vunpack.c.l.b16 %v465
      %v1490 = vunpack.c.l.b16 %v466
      %v1491 = vunpack.c.l.b16 %v467
      %v1492 = vunpack.c.l.b16 %v468
      %v1493 = vunpack.c.l.b16 %v469
      %v1494 = vunpack.c.l.b16 %v470
      %v1495 = vunpack.c.l.b16 %v471
      %v1496 = vunpack.c.l.b16 %v472
      %v1497 = vunpack.c.l.b16 %v473
      %v1498 = vunpack.c.l.b16 %v474
      %v1499 = vunpack.c.l.b16 %v475
      %v1500 = vunpack.c.l.b16 %v476
      %v1501 = vunpack.c.l.b16 %v477
      %v1502 = vunpack.c.l.b16 %v478
      %v1503 = vunpack.c.l.b16 %v479
      %v1504 = vunpack.c.l.b16 %v480
      %v1505 = vunpack.c.l.b16 %v481
      %v1506 = vunpack.c.l.b16 %v482
      %v1507 = vunpack.c.l.b16 %v483
      %v1508 = vunpack.c.l.b16 %v484
      %v1509 = vunpack.c.l.b16 %v485
      %v1510 = vunpack.c.l.b16 %v486
      %v1511 = vunpack.c.l.b16 %v487
      %v1512 = vunpack.c.l.b16 %v488
      %v1513 = vunpack.c.l.b16 %v489
      %v1514 = vunpack.c.l.b16 %v490
      %v1515 = vunpack.c.l.b16 %v491
      %v1516 = vunpack.c.l.b16 %v492
      %v1517 = vunpack.c.l.b16 %v493
      %v1518 = vunpack.c.l.b16 %v494
      %v1519 = vunpack.c.l.b16 %v495
      %v1520 = vunpack.c.l.b16 %v496
      %v1521 = vunpack.c.l.b16 %v497
      %v1522 = vunpack.c.l.b16 %v498
      %v1523 = vunpack.c.l.b16 %v499
      %v1524 = vunpack.c.l.b16 %v500
      %v1525 = vunpack.c.l.b16 %v501
      %v1526 = vunpack.c.l.b16 %v502
      %v1527 = vunpack.c.l.b16 %v503
      %v1528 = vunpack.c.l.b16 %v504
      %v1529 = vunpack.c.l.b16 %v505
      %v1530 = vunpack.c.l.b16 %v506
      %v1531 = vunpack.c.l.b16 %v507
      %v1532 = vunpack.c.l.b16 %v508
      %v1533 = vunpack.c.l.b16 %v509
      %v1534 = vpack.c.b16 %v1391, %v1390
      %v1535 = vpack.c.b16 %v1393, %v1392
      %v1536 = vpack.c.b16 %v1395, %v1394
      %v1537 = vpack.c.b16 %v1397, %v1396
      %v1538 = vpack.c.b16 %v1399, %v1398
      %v1539 = vpack.c.b16 %v1401, %v1400
      %v1540 = vpack.c.b16 %v1403, %v1402
      %v1541 = vpack.c.b16 %v1405, %v1404
      %v1542 = vpack.c.b16 %v1407, %v1406
      %v1543 = vpack.c.b16 %v1409, %v1408
      %v1544 = vpack.c.b16 %v1411, %v1410
      %v1545 = vpack.c.b16 %v1413, %v1412
      %v1546 = vpack.c.b16 %v1415, %v1414
      %v1547 = vpack.c.b16 %v1417, %v1416
      %v1548 = vpack.c.b16 %v1419, %v1418
      %v1549 = vpack.c.b16 %v1421, %v1420
      %v1550 = vpack.c.b16 %v1423, %v1422
      %v1551 = vpack.c.b16 %v1425, %v1424
      %v1552 = vpack.c.b16 %v1427, %v1426
      %v1553 = vpack.c.b16 %v1429, %v1428
      %v1554 = vpack.c.b16 %v1431, %v1430
      %v1555 = vpack.c.b16 %v1433, %v1432
      %v1556 = vpack.c.b16 %v1435, %v1434
      %v1557 = vpack.c.b16 %v1437, %v1436
      %v1558 = vpack.c.b16 %v1439, %v1438
      %v1559 = vpack.c.b16 %v1441, %v1440
      %v1560 = vpack.c.b16 %v1443, %v1442
      %v1561 = vpack.c.b16 %v1445, %v1444
      %v1562 = vpack.c.b16 %v1447, %v1446
      %v1563 = vpack.c.b16 %v1449, %v1448
      %v1564 = vpack.c.b16 %v1451, %v1450
      %v1565 = vpack.c.b16 %v1453, %v1452
      %v1566 = vpack.c.b16 %v1455, %v1454
      %v1567 = vpack.c.b16 %v1457, %v1456
      %v1568 = vpack.c.b16 %v1459, %v1458
      %v1569 = vpack.c.b16 %v1461, %v1460
      %v1570 = vpack.c.b16 %v1463, %v1462
      %v1571 = vpack.c.b16 %v1465, %v1464
      %v1572 = vpack.c.b16 %v1467, %v1466
      %v1573 = vpack.c.b16 %v1469, %v1468
      %v1574 = vpack.c.b16 %v1471, %v1470
      %v1575 = vpack.c.b16 %v1473, %v1472
      %v1576 = vpack.c.b16 %v1475, %v1474
      %v1577 = vpack.c.b16 %v1477, %v1476
      %v1578 = vpack.c.b16 %v1479, %v1478
      %v1579 = vpack.c.b16 %v1481, %v1480
      %v1580 = vpack.c.b16 %v1483, %v1482
      %v1581 = vpack.c.b16 %v1485, %v1484
      %v1582 = vpack.c.b16 %v1487, %v1486
      %v1583 = vpack.c.b16 %v1489, %v1488
      %v1584 = vpack.c.b16 %v1491, %v1490
      %v1585 = vpack.c.b16 %v1493, %v1492
      %v1586 = vpack.c.b16 %v1495, %v1494
      %v1587 = vpack.c.b16 %v1497, %v1496
      %v1588 = vpack.c.b16 %v1499, %v1498
      %v1589 = vpack.c.b16 %v1501, %v1500
      %v1590 = vpack.c.b16 %v1503, %v1502
      %v1591 = vpack.c.b16 %v1505, %v1504
      %v1592 = vpack.c.b16 %v1507, %v1506
      %v1593 = vpack.c.b16 %v1509, %v1508
      %v1594 = vpack.c.b16 %v1511, %v1510
      %v1595 = vpack.c.b16 %v1513, %v1512
      %v1596 = vpack.c.b16 %v1515, %v1514
      %v1597 = vpack.c.b16 %v1517, %v1516
      %v1598 = vpack.c.b16 %v1519, %v1518
      %v1599 = vpack.c.b16 %v1521, %v1520
      %v1600 = vpack.c.b16 %v1523, %v1522
      %v1601 = vpack.c.b16 %v1525, %v1524
      %v1602 = vpack.c.b16 %v1527, %v1526
      %v1603 = vpack.c.b16 %v1529, %v1528
      %v1604 = vpack.c.b16 %v1531, %v1530
      %v1605 = vpack.c.b16 %v1533, %v1532
      %1678 = vmatprep.subr.bf16.mxu0 0
      %1679 = vmatpush1.bf16.msra.mxu0 %v1541
      %1680 = vmatprep.subr.bf16.mxu0 0
      %1681 = vmatpush1.bf16.msra.mxu0 %v1540
      %1682 = vmatprep.subr.bf16.mxu0 0
      %1683 = vmatpush1.bf16.msra.mxu0 %v1539
      %1684 = vmatprep.subr.bf16.mxu0 0
      %1685 = vmatpush1.bf16.msra.mxu0 %v1538
      %1686 = vmatprep.subr.bf16.mxu0 0
      %1687 = vmatpush1.bf16.msra.mxu0 %v1537
      %1688 = vmatprep.subr.bf16.mxu0 0
      %1689 = vmatpush1.bf16.msra.mxu0 %v1536
      %1690 = vmatprep.subr.bf16.mxu0 0
      %1691 = vmatpush1.bf16.msra.mxu0 %v1535
      %1692 = vmatprep.subr.bf16.mxu0 0
      %1693 = vmatpush1.bf16.msra.mxu0 %v1534
      %1694 = vmatprep.subr.bf16.mxu0 0
      %1695 = vmatpush2.bf16.msra.mxu0 %v1549
      %1696 = vmatprep.subr.bf16.mxu0 0
      %1697 = vmatpush2.bf16.msra.mxu0 %v1548
      %1698 = vmatprep.subr.bf16.mxu0 0
      %1699 = vmatpush2.bf16.msra.mxu0 %v1547
      %1700 = vmatprep.subr.bf16.mxu0 0
      %1701 = vmatpush2.bf16.msra.mxu0 %v1546
      %1702 = vmatprep.subr.bf16.mxu0 0
      %1703 = vmatpush2.bf16.msra.mxu0 %v1545
      %1704 = vmatprep.subr.bf16.mxu0 0
      %1705 = vmatpush2.bf16.msra.mxu0 %v1544
      %1706 = vmatprep.subr.bf16.mxu0 0
      %1707 = vmatpush2.bf16.msra.mxu0 %v1543
      %1708 = vmatprep.subr.bf16.mxu0 0
      %1709 = vmatpush2.bf16.msra.mxu0 %v1542
      %1710 = vmatprep.mubr.bf16.mxu0 %v959
      %1711 = vmatmul.mubr.bf16.gmra.mxu0 %v958
      %v1712 = vpop.f32.mrf.mxu0
      %v1713 = vadd.f32 0.0, %v1712
      %v1714 = vpop.f32.mrf.mxu0
      %v1715 = vpop.f32.mrf.mxu0
      %v1716 = vadd.f32 0.0, %v1715
      %v1717 = vpop.f32.mrf.mxu0
      %1718 = vmatprep.mubr.bf16.mxu0 %v968
      %1719 = vmatmul.mubr.bf16.gmra.mxu0 %v967
      %v1720 = vpop.f32.mrf.mxu0
      %v1721 = vadd.f32 0.0, %v1720
      %v1722 = vpop.f32.mrf.mxu0
      %v1723 = vpop.f32.mrf.mxu0
      %v1724 = vadd.f32 0.0, %v1723
      %v1725 = vpop.f32.mrf.mxu0
      %1726 = vmatprep.mubr.bf16.mxu0 %v977
      %1727 = vmatmul.mubr.bf16.gmra.mxu0 %v976
      %v1728 = vpop.f32.mrf.mxu0
      %v1729 = vadd.f32 0.0, %v1728
      %v1730 = vpop.f32.mrf.mxu0
      %v1731 = vpop.f32.mrf.mxu0
      %v1732 = vadd.f32 0.0, %v1731
      %v1733 = vpop.f32.mrf.mxu0
      %1734 = vmatprep.mubr.bf16.mxu0 %v986
      %1735 = vmatmul.mubr.bf16.gmra.mxu0 %v985
      %v1736 = vpop.f32.mrf.mxu0
      %v1737 = vadd.f32 0.0, %v1736
      %v1738 = vpop.f32.mrf.mxu0
      %v1739 = vpop.f32.mrf.mxu0
      %v1740 = vadd.f32 0.0, %v1739
      %v1741 = vpop.f32.mrf.mxu0
      %1742 = vmatprep.mubr.bf16.mxu0 %v995
      %1743 = vmatmul.mubr.bf16.gmra.mxu0 %v994
      %v1744 = vpop.f32.mrf.mxu0
      %v1745 = vadd.f32 0.0, %v1744
      %v1746 = vpop.f32.mrf.mxu0
      %v1747 = vpop.f32.mrf.mxu0
      %v1748 = vadd.f32 0.0, %v1747
      %v1749 = vpop.f32.mrf.mxu0
      %1750 = vmatprep.mubr.bf16.mxu0 %v1004
      %1751 = vmatmul.mubr.bf16.gmra.mxu0 %v1003
      %v1752 = vpop.f32.mrf.mxu0
      %v1753 = vadd.f32 0.0, %v1752
      %v1754 = vpop.f32.mrf.mxu0
      %v1755 = vpop.f32.mrf.mxu0
      %v1756 = vadd.f32 0.0, %v1755
      %v1757 = vpop.f32.mrf.mxu0
      %1758 = vmatprep.mubr.bf16.mxu0 %v1013
      %1759 = vmatmul.mubr.bf16.gmra.mxu0 %v1012
      %v1760 = vpop.f32.mrf.mxu0
      %v1761 = vadd.f32 0.0, %v1760
      %v1762 = vpop.f32.mrf.mxu0
      %v1763 = vpop.f32.mrf.mxu0
      %v1764 = vadd.f32 0.0, %v1763
      %v1765 = vpop.f32.mrf.mxu0
      %1766 = vmatprep.mubr.bf16.mxu0 %v1022
      %1767 = vmatmul.mubr.bf16.gmra.mxu0 %v1021
      %v1768 = vpop.f32.mrf.mxu0
      %v1769 = vadd.f32 0.0, %v1768
      %v1770 = vpop.f32.mrf.mxu0
      %v1771 = vpop.f32.mrf.mxu0
      %v1772 = vadd.f32 0.0, %v1771
      %v1773 = vpop.f32.mrf.mxu0
      %1774 = vmatprep.mubr.bf16.mxu0 %v1031
      %1775 = vmatmul.mubr.bf16.gmra.mxu0 %v1030
      %v1776 = vpop.f32.mrf.mxu0
      %v1777 = vadd.f32 0.0, %v1776
      %v1778 = vpop.f32.mrf.mxu0
      %v1779 = vpop.f32.mrf.mxu0
      %v1780 = vadd.f32 0.0, %v1779
      %v1781 = vpop.f32.mrf.mxu0
      %1782 = vmatprep.mubr.bf16.mxu0 %v1040
      %1783 = vmatmul.mubr.bf16.gmra.mxu0 %v1039
      %v1784 = vpop.f32.mrf.mxu0
      %v1785 = vadd.f32 0.0, %v1784
      %v1786 = vpop.f32.mrf.mxu0
      %v1787 = vpop.f32.mrf.mxu0
      %v1788 = vadd.f32 0.0, %v1787
      %v1789 = vpop.f32.mrf.mxu0
      %1790 = vmatprep.mubr.bf16.mxu0 %v1049
      %1791 = vmatmul.mubr.bf16.gmra.mxu0 %v1048
      %v1792 = vpop.f32.mrf.mxu0
      %v1793 = vadd.f32 0.0, %v1792
      %v1794 = vpop.f32.mrf.mxu0
      %v1795 = vpop.f32.mrf.mxu0
      %v1796 = vadd.f32 0.0, %v1795
      %v1797 = vpop.f32.mrf.mxu0
      %1798 = vmatprep.mubr.bf16.mxu0 %v1058
      %1799 = vmatmul.mubr.bf16.gmra.mxu0 %v1057
      %v1800 = vpop.f32.mrf.mxu0
      %v1801 = vadd.f32 0.0, %v1800
      %v1802 = vpop.f32.mrf.mxu0
      %v1803 = vpop.f32.mrf.mxu0
      %v1804 = vadd.f32 0.0, %v1803
      %v1805 = vpop.f32.mrf.mxu0
      %1806 = vmatprep.mubr.bf16.mxu0 %v1067
      %1807 = vmatmul.mubr.bf16.gmra.mxu0 %v1066
      %v1808 = vpop.f32.mrf.mxu0
      %v1809 = vadd.f32 0.0, %v1808
      %v1810 = vpop.f32.mrf.mxu0
      %v1811 = vpop.f32.mrf.mxu0
      %v1812 = vadd.f32 0.0, %v1811
      %v1813 = vpop.f32.mrf.mxu0
      %1814 = vmatprep.mubr.bf16.mxu0 %v1076
      %1815 = vmatmul.mubr.bf16.gmra.mxu0 %v1075
      %v1816 = vpop.f32.mrf.mxu0
      %v1817 = vadd.f32 0.0, %v1816
      %v1818 = vpop.f32.mrf.mxu0
      %v1819 = vpop.f32.mrf.mxu0
      %v1820 = vadd.f32 0.0, %v1819
      %v1821 = vpop.f32.mrf.mxu0
      %1822 = vmatprep.mubr.bf16.mxu0 %v1085
      %1823 = vmatmul.mubr.bf16.gmra.mxu0 %v1084
      %v1824 = vpop.f32.mrf.mxu0
      %v1825 = vadd.f32 0.0, %v1824
      %v1826 = vpop.f32.mrf.mxu0
      %v1827 = vpop.f32.mrf.mxu0
      %v1828 = vadd.f32 0.0, %v1827
      %v1829 = vpop.f32.mrf.mxu0
      %1830 = vmatprep.mubr.bf16.mxu0 %v1094
      %1831 = vmatmul.mubr.bf16.gmra.mxu0 %v1093
      %v1832 = vpop.f32.mrf.mxu0
      %v1833 = vadd.f32 0.0, %v1832
      %v1834 = vpop.f32.mrf.mxu0
      %v1835 = vpop.f32.mrf.mxu0
      %v1836 = vadd.f32 0.0, %v1835
      %v1837 = vpop.f32.mrf.mxu0
      %1838 = vdwg.mxu0
      %1839 = vmatprep.subr.bf16.mxu0 0
      %1840 = vmatpush1.bf16.msra.mxu0 %v1557
      %1841 = vmatprep.subr.bf16.mxu0 0
      %1842 = vmatpush1.bf16.msra.mxu0 %v1556
      %1843 = vmatprep.subr.bf16.mxu0 0
      %1844 = vmatpush1.bf16.msra.mxu0 %v1555
      %1845 = vmatprep.subr.bf16.mxu0 0
      %1846 = vmatpush1.bf16.msra.mxu0 %v1554
      %1847 = vmatprep.subr.bf16.mxu0 0
      %1848 = vmatpush1.bf16.msra.mxu0 %v1553
      %1849 = vmatprep.subr.bf16.mxu0 0
      %1850 = vmatpush1.bf16.msra.mxu0 %v1552
      %1851 = vmatprep.subr.bf16.mxu0 0
      %1852 = vmatpush1.bf16.msra.mxu0 %v1551
      %1853 = vmatprep.subr.bf16.mxu0 0
      %1854 = vmatpush1.bf16.msra.mxu0 %v1550
      %1855 = vmatprep.subr.bf16.mxu0 0
      %1856 = vmatpush2.bf16.msra.mxu0 %v1565
      %1857 = vmatprep.subr.bf16.mxu0 0
      %1858 = vmatpush2.bf16.msra.mxu0 %v1564
      %1859 = vmatprep.subr.bf16.mxu0 0
      %1860 = vmatpush2.bf16.msra.mxu0 %v1563
      %1861 = vmatprep.subr.bf16.mxu0 0
      %1862 = vmatpush2.bf16.msra.mxu0 %v1562
      %1863 = vmatprep.subr.bf16.mxu0 0
      %1864 = vmatpush2.bf16.msra.mxu0 %v1561
      %1865 = vmatprep.subr.bf16.mxu0 0
      %1866 = vmatpush2.bf16.msra.mxu0 %v1560
      %1867 = vmatprep.subr.bf16.mxu0 0
      %1868 = vmatpush2.bf16.msra.mxu0 %v1559
      %1869 = vmatprep.subr.bf16.mxu0 0
      %1870 = vmatpush2.bf16.msra.mxu0 %v1558
      %1871 = vmatprep.mubr.bf16.mxu0 %v961
      %1872 = vmatmul.mubr.bf16.gmra.mxu0 %v960
      %v1873 = vpop.f32.mrf.mxu0
      %v1874 = vadd.f32 %v1713, %v1873
      %v1875 = vpop.f32.mrf.mxu0
      %v1876 = vpop.f32.mrf.mxu0
      %v1877 = vadd.f32 %v1716, %v1876
      %v1878 = vpop.f32.mrf.mxu0
      %1879 = vmatprep.mubr.bf16.mxu0 %v970
      %1880 = vmatmul.mubr.bf16.gmra.mxu0 %v969
      %v1881 = vpop.f32.mrf.mxu0
      %v1882 = vadd.f32 %v1721, %v1881
      %v1883 = vpop.f32.mrf.mxu0
      %v1884 = vpop.f32.mrf.mxu0
      %v1885 = vadd.f32 %v1724, %v1884
      %v1886 = vpop.f32.mrf.mxu0
      %1887 = vmatprep.mubr.bf16.mxu0 %v979
      %1888 = vmatmul.mubr.bf16.gmra.mxu0 %v978
      %v1889 = vpop.f32.mrf.mxu0
      %v1890 = vadd.f32 %v1729, %v1889
      %v1891 = vpop.f32.mrf.mxu0
      %v1892 = vpop.f32.mrf.mxu0
      %v1893 = vadd.f32 %v1732, %v1892
      %v1894 = vpop.f32.mrf.mxu0
      %1895 = vmatprep.mubr.bf16.mxu0 %v988
      %1896 = vmatmul.mubr.bf16.gmra.mxu0 %v987
      %v1897 = vpop.f32.mrf.mxu0
      %v1898 = vadd.f32 %v1737, %v1897
      %v1899 = vpop.f32.mrf.mxu0
      %v1900 = vpop.f32.mrf.mxu0
      %v1901 = vadd.f32 %v1740, %v1900
      %v1902 = vpop.f32.mrf.mxu0
      %1903 = vmatprep.mubr.bf16.mxu0 %v997
      %1904 = vmatmul.mubr.bf16.gmra.mxu0 %v996
      %v1905 = vpop.f32.mrf.mxu0
      %v1906 = vadd.f32 %v1745, %v1905
      %v1907 = vpop.f32.mrf.mxu0
      %v1908 = vpop.f32.mrf.mxu0
      %v1909 = vadd.f32 %v1748, %v1908
      %v1910 = vpop.f32.mrf.mxu0
      %1911 = vmatprep.mubr.bf16.mxu0 %v1006
      %1912 = vmatmul.mubr.bf16.gmra.mxu0 %v1005
      %v1913 = vpop.f32.mrf.mxu0
      %v1914 = vadd.f32 %v1753, %v1913
      %v1915 = vpop.f32.mrf.mxu0
      %v1916 = vpop.f32.mrf.mxu0
      %v1917 = vadd.f32 %v1756, %v1916
      %v1918 = vpop.f32.mrf.mxu0
      %1919 = vmatprep.mubr.bf16.mxu0 %v1015
      %1920 = vmatmul.mubr.bf16.gmra.mxu0 %v1014
      %v1921 = vpop.f32.mrf.mxu0
      %v1922 = vadd.f32 %v1761, %v1921
      %v1923 = vpop.f32.mrf.mxu0
      %v1924 = vpop.f32.mrf.mxu0
      %v1925 = vadd.f32 %v1764, %v1924
      %v1926 = vpop.f32.mrf.mxu0
      %1927 = vmatprep.mubr.bf16.mxu0 %v1024
      %1928 = vmatmul.mubr.bf16.gmra.mxu0 %v1023
      %v1929 = vpop.f32.mrf.mxu0
      %v1930 = vadd.f32 %v1769, %v1929
      %v1931 = vpop.f32.mrf.mxu0
      %v1932 = vpop.f32.mrf.mxu0
      %v1933 = vadd.f32 %v1772, %v1932
      %v1934 = vpop.f32.mrf.mxu0
      %1935 = vmatprep.mubr.bf16.mxu0 %v1033
      %1936 = vmatmul.mubr.bf16.gmra.mxu0 %v1032
      %v1937 = vpop.f32.mrf.mxu0
      %v1938 = vadd.f32 %v1777, %v1937
      %v1939 = vpop.f32.mrf.mxu0
      %v1940 = vpop.f32.mrf.mxu0
      %v1941 = vadd.f32 %v1780, %v1940
      %v1942 = vpop.f32.mrf.mxu0
      %1943 = vmatprep.mubr.bf16.mxu0 %v1042
      %1944 = vmatmul.mubr.bf16.gmra.mxu0 %v1041
      %v1945 = vpop.f32.mrf.mxu0
      %v1946 = vadd.f32 %v1785, %v1945
      %v1947 = vpop.f32.mrf.mxu0
      %v1948 = vpop.f32.mrf.mxu0
      %v1949 = vadd.f32 %v1788, %v1948
      %v1950 = vpop.f32.mrf.mxu0
      %1951 = vmatprep.mubr.bf16.mxu0 %v1051
      %1952 = vmatmul.mubr.bf16.gmra.mxu0 %v1050
      %v1953 = vpop.f32.mrf.mxu0
      %v1954 = vadd.f32 %v1793, %v1953
      %v1955 = vpop.f32.mrf.mxu0
      %v1956 = vpop.f32.mrf.mxu0
      %v1957 = vadd.f32 %v1796, %v1956
      %v1958 = vpop.f32.mrf.mxu0
      %1959 = vmatprep.mubr.bf16.mxu0 %v1060
      %1960 = vmatmul.mubr.bf16.gmra.mxu0 %v1059
      %v1961 = vpop.f32.mrf.mxu0
      %v1962 = vadd.f32 %v1801, %v1961
      %v1963 = vpop.f32.mrf.mxu0
      %v1964 = vpop.f32.mrf.mxu0
      %v1965 = vadd.f32 %v1804, %v1964
      %v1966 = vpop.f32.mrf.mxu0
      %1967 = vmatprep.mubr.bf16.mxu0 %v1069
      %1968 = vmatmul.mubr.bf16.gmra.mxu0 %v1068
      %v1969 = vpop.f32.mrf.mxu0
      %v1970 = vadd.f32 %v1809, %v1969
      %v1971 = vpop.f32.mrf.mxu0
      %v1972 = vpop.f32.mrf.mxu0
      %v1973 = vadd.f32 %v1812, %v1972
      %v1974 = vpop.f32.mrf.mxu0
      %1975 = vmatprep.mubr.bf16.mxu0 %v1078
      %1976 = vmatmul.mubr.bf16.gmra.mxu0 %v1077
      %v1977 = vpop.f32.mrf.mxu0
      %v1978 = vadd.f32 %v1817, %v1977
      %v1979 = vpop.f32.mrf.mxu0
      %v1980 = vpop.f32.mrf.mxu0
      %v1981 = vadd.f32 %v1820, %v1980
      %v1982 = vpop.f32.mrf.mxu0
      %1983 = vmatprep.mubr.bf16.mxu0 %v1087
      %1984 = vmatmul.mubr.bf16.gmra.mxu0 %v1086
      %v1985 = vpop.f32.mrf.mxu0
      %v1986 = vadd.f32 %v1825, %v1985
      %v1987 = vpop.f32.mrf.mxu0
      %v1988 = vpop.f32.mrf.mxu0
      %v1989 = vadd.f32 %v1828, %v1988
      %v1990 = vpop.f32.mrf.mxu0
      %1991 = vmatprep.mubr.bf16.mxu0 %v1096
      %1992 = vmatmul.mubr.bf16.gmra.mxu0 %v1095
      %v1993 = vpop.f32.mrf.mxu0
      %v1994 = vadd.f32 %v1833, %v1993
      %v1995 = vpop.f32.mrf.mxu0
      %v1996 = vpop.f32.mrf.mxu0
      %v1997 = vadd.f32 %v1836, %v1996
      %v1998 = vpop.f32.mrf.mxu0
      %1999 = vdwg.mxu0
      %2000 = vmatprep.subr.bf16.mxu0 0
      %2001 = vmatpush1.bf16.msra.mxu0 %v1573
      %2002 = vmatprep.subr.bf16.mxu0 0
      %2003 = vmatpush1.bf16.msra.mxu0 %v1572
      %2004 = vmatprep.subr.bf16.mxu0 0
      %2005 = vmatpush1.bf16.msra.mxu0 %v1571
      %2006 = vmatprep.subr.bf16.mxu0 0
      %2007 = vmatpush1.bf16.msra.mxu0 %v1570
      %2008 = vmatprep.subr.bf16.mxu0 0
      %2009 = vmatpush1.bf16.msra.mxu0 %v1569
      %2010 = vmatprep.subr.bf16.mxu0 0
      %2011 = vmatpush1.bf16.msra.mxu0 %v1568
      %2012 = vmatprep.subr.bf16.mxu0 0
      %2013 = vmatpush1.bf16.msra.mxu0 %v1567
      %2014 = vmatprep.subr.bf16.mxu0 0
      %2015 = vmatpush1.bf16.msra.mxu0 %v1566
      %2016 = vmatprep.subr.bf16.mxu0 0
      %2017 = vmatpush2.bf16.msra.mxu0 %v1581
      %2018 = vmatprep.subr.bf16.mxu0 0
      %2019 = vmatpush2.bf16.msra.mxu0 %v1580
      %2020 = vmatprep.subr.bf16.mxu0 0
      %2021 = vmatpush2.bf16.msra.mxu0 %v1579
      %2022 = vmatprep.subr.bf16.mxu0 0
      %2023 = vmatpush2.bf16.msra.mxu0 %v1578
      %2024 = vmatprep.subr.bf16.mxu0 0
      %2025 = vmatpush2.bf16.msra.mxu0 %v1577
      %2026 = vmatprep.subr.bf16.mxu0 0
      %2027 = vmatpush2.bf16.msra.mxu0 %v1576
      %2028 = vmatprep.subr.bf16.mxu0 0
      %2029 = vmatpush2.bf16.msra.mxu0 %v1575
      %2030 = vmatprep.subr.bf16.mxu0 0
      %2031 = vmatpush2.bf16.msra.mxu0 %v1574
      %2032 = vmatprep.mubr.bf16.mxu0 %v963
      %2033 = vmatmul.mubr.bf16.gmra.mxu0 %v962
      %v2034 = vpop.f32.mrf.mxu0
      %v2035 = vadd.f32 %v1874, %v2034
      %v2036 = vpop.f32.mrf.mxu0
      %v2037 = vpop.f32.mrf.mxu0
      %v2038 = vadd.f32 %v1877, %v2037
      %v2039 = vpop.f32.mrf.mxu0
      %2040 = vmatprep.mubr.bf16.mxu0 %v972
      %2041 = vmatmul.mubr.bf16.gmra.mxu0 %v971
      %v2042 = vpop.f32.mrf.mxu0
      %v2043 = vadd.f32 %v1882, %v2042
      %v2044 = vpop.f32.mrf.mxu0
      %v2045 = vpop.f32.mrf.mxu0
      %v2046 = vadd.f32 %v1885, %v2045
      %v2047 = vpop.f32.mrf.mxu0
      %2048 = vmatprep.mubr.bf16.mxu0 %v981
      %2049 = vmatmul.mubr.bf16.gmra.mxu0 %v980
      %v2050 = vpop.f32.mrf.mxu0
      %v2051 = vadd.f32 %v1890, %v2050
      %v2052 = vpop.f32.mrf.mxu0
      %v2053 = vpop.f32.mrf.mxu0
      %v2054 = vadd.f32 %v1893, %v2053
      %v2055 = vpop.f32.mrf.mxu0
      %2056 = vmatprep.mubr.bf16.mxu0 %v990
      %2057 = vmatmul.mubr.bf16.gmra.mxu0 %v989
      %v2058 = vpop.f32.mrf.mxu0
      %v2059 = vadd.f32 %v1898, %v2058
      %v2060 = vpop.f32.mrf.mxu0
      %v2061 = vpop.f32.mrf.mxu0
      %v2062 = vadd.f32 %v1901, %v2061
      %v2063 = vpop.f32.mrf.mxu0
      %2064 = vmatprep.mubr.bf16.mxu0 %v999
      %2065 = vmatmul.mubr.bf16.gmra.mxu0 %v998
      %v2066 = vpop.f32.mrf.mxu0
      %v2067 = vadd.f32 %v1906, %v2066
      %v2068 = vpop.f32.mrf.mxu0
      %v2069 = vpop.f32.mrf.mxu0
      %v2070 = vadd.f32 %v1909, %v2069
      %v2071 = vpop.f32.mrf.mxu0
      %2072 = vmatprep.mubr.bf16.mxu0 %v1008
      %2073 = vmatmul.mubr.bf16.gmra.mxu0 %v1007
      %v2074 = vpop.f32.mrf.mxu0
      %v2075 = vadd.f32 %v1914, %v2074
      %v2076 = vpop.f32.mrf.mxu0
      %v2077 = vpop.f32.mrf.mxu0
      %v2078 = vadd.f32 %v1917, %v2077
      %v2079 = vpop.f32.mrf.mxu0
      %2080 = vmatprep.mubr.bf16.mxu0 %v1017
      %2081 = vmatmul.mubr.bf16.gmra.mxu0 %v1016
      %v2082 = vpop.f32.mrf.mxu0
      %v2083 = vadd.f32 %v1922, %v2082
      %v2084 = vpop.f32.mrf.mxu0
      %v2085 = vpop.f32.mrf.mxu0
      %v2086 = vadd.f32 %v1925, %v2085
      %v2087 = vpop.f32.mrf.mxu0
      %2088 = vmatprep.mubr.bf16.mxu0 %v1026
      %2089 = vmatmul.mubr.bf16.gmra.mxu0 %v1025
      %v2090 = vpop.f32.mrf.mxu0
      %v2091 = vadd.f32 %v1930, %v2090
      %v2092 = vpop.f32.mrf.mxu0
      %v2093 = vpop.f32.mrf.mxu0
      %v2094 = vadd.f32 %v1933, %v2093
      %v2095 = vpop.f32.mrf.mxu0
      %2096 = vmatprep.mubr.bf16.mxu0 %v1035
      %2097 = vmatmul.mubr.bf16.gmra.mxu0 %v1034
      %v2098 = vpop.f32.mrf.mxu0
      %v2099 = vadd.f32 %v1938, %v2098
      %v2100 = vpop.f32.mrf.mxu0
      %v2101 = vpop.f32.mrf.mxu0
      %v2102 = vadd.f32 %v1941, %v2101
      %v2103 = vpop.f32.mrf.mxu0
      %2104 = vmatprep.mubr.bf16.mxu0 %v1044
      %2105 = vmatmul.mubr.bf16.gmra.mxu0 %v1043
      %v2106 = vpop.f32.mrf.mxu0
      %v2107 = vadd.f32 %v1946, %v2106
      %v2108 = vpop.f32.mrf.mxu0
      %v2109 = vpop.f32.mrf.mxu0
      %v2110 = vadd.f32 %v1949, %v2109
      %v2111 = vpop.f32.mrf.mxu0
      %2112 = vmatprep.mubr.bf16.mxu0 %v1053
      %2113 = vmatmul.mubr.bf16.gmra.mxu0 %v1052
      %v2114 = vpop.f32.mrf.mxu0
      %v2115 = vadd.f32 %v1954, %v2114
      %v2116 = vpop.f32.mrf.mxu0
      %v2117 = vpop.f32.mrf.mxu0
      %v2118 = vadd.f32 %v1957, %v2117
      %v2119 = vpop.f32.mrf.mxu0
      %2120 = vmatprep.mubr.bf16.mxu0 %v1062
      %2121 = vmatmul.mubr.bf16.gmra.mxu0 %v1061
      %v2122 = vpop.f32.mrf.mxu0
      %v2123 = vadd.f32 %v1962, %v2122
      %v2124 = vpop.f32.mrf.mxu0
      %v2125 = vpop.f32.mrf.mxu0
      %v2126 = vadd.f32 %v1965, %v2125
      %v2127 = vpop.f32.mrf.mxu0
      %2128 = vmatprep.mubr.bf16.mxu0 %v1071
      %2129 = vmatmul.mubr.bf16.gmra.mxu0 %v1070
      %v2130 = vpop.f32.mrf.mxu0
      %v2131 = vadd.f32 %v1970, %v2130
      %v2132 = vpop.f32.mrf.mxu0
      %v2133 = vpop.f32.mrf.mxu0
      %v2134 = vadd.f32 %v1973, %v2133
      %v2135 = vpop.f32.mrf.mxu0
      %2136 = vmatprep.mubr.bf16.mxu0 %v1080
      %2137 = vmatmul.mubr.bf16.gmra.mxu0 %v1079
      %v2138 = vpop.f32.mrf.mxu0
      %v2139 = vadd.f32 %v1978, %v2138
      %v2140 = vpop.f32.mrf.mxu0
      %v2141 = vpop.f32.mrf.mxu0
      %v2142 = vadd.f32 %v1981, %v2141
      %v2143 = vpop.f32.mrf.mxu0
      %2144 = vmatprep.mubr.bf16.mxu0 %v1089
      %2145 = vmatmul.mubr.bf16.gmra.mxu0 %v1088
      %v2146 = vpop.f32.mrf.mxu0
      %v2147 = vadd.f32 %v1986, %v2146
      %v2148 = vpop.f32.mrf.mxu0
      %v2149 = vpop.f32.mrf.mxu0
      %v2150 = vadd.f32 %v1989, %v2149
      %v2151 = vpop.f32.mrf.mxu0
      %2152 = vmatprep.mubr.bf16.mxu0 %v1098
      %2153 = vmatmul.mubr.bf16.gmra.mxu0 %v1097
      %v2154 = vpop.f32.mrf.mxu0
      %v2155 = vadd.f32 %v1994, %v2154
      %v2156 = vpop.f32.mrf.mxu0
      %v2157 = vpop.f32.mrf.mxu0
      %v2158 = vadd.f32 %v1997, %v2157
      %v2159 = vpop.f32.mrf.mxu0
      %2160 = vdwg.mxu0
      %2161 = vmatprep.subr.bf16.mxu0 0
      %2162 = vmatpush1.bf16.msra.mxu0 %v1589
      %2163 = vmatprep.subr.bf16.mxu0 0
      %2164 = vmatpush1.bf16.msra.mxu0 %v1588
      %2165 = vmatprep.subr.bf16.mxu0 0
      %2166 = vmatpush1.bf16.msra.mxu0 %v1587
      %2167 = vmatprep.subr.bf16.mxu0 0
      %2168 = vmatpush1.bf16.msra.mxu0 %v1586
      %2169 = vmatprep.subr.bf16.mxu0 0
      %2170 = vmatpush1.bf16.msra.mxu0 %v1585
      %2171 = vmatprep.subr.bf16.mxu0 0
      %2172 = vmatpush1.bf16.msra.mxu0 %v1584
      %2173 = vmatprep.subr.bf16.mxu0 0
      %2174 = vmatpush1.bf16.msra.mxu0 %v1583
      %2175 = vmatprep.subr.bf16.mxu0 0
      %2176 = vmatpush1.bf16.msra.mxu0 %v1582
      %2177 = vmatprep.subr.bf16.mxu0 0
      %2178 = vmatpush2.bf16.msra.mxu0 %v1597
      %2179 = vmatprep.subr.bf16.mxu0 0
      %2180 = vmatpush2.bf16.msra.mxu0 %v1596
      %2181 = vmatprep.subr.bf16.mxu0 0
      %2182 = vmatpush2.bf16.msra.mxu0 %v1595
      %2183 = vmatprep.subr.bf16.mxu0 0
      %2184 = vmatpush2.bf16.msra.mxu0 %v1594
      %2185 = vmatprep.subr.bf16.mxu0 0
      %2186 = vmatpush2.bf16.msra.mxu0 %v1593
      %2187 = vmatprep.subr.bf16.mxu0 0
      %2188 = vmatpush2.bf16.msra.mxu0 %v1592
      %2189 = vmatprep.subr.bf16.mxu0 0
      %2190 = vmatpush2.bf16.msra.mxu0 %v1591
      %2191 = vmatprep.subr.bf16.mxu0 0
      %2192 = vmatpush2.bf16.msra.mxu0 %v1590
      %2193 = vmatprep.mubr.bf16.mxu0 %v965
      %2194 = vmatmul.mubr.bf16.gmra.mxu0 %v964
      %v2195 = vpop.f32.mrf.mxu0
      %v2196 = vadd.f32 %v2035, %v2195
      %v2197 = vpop.f32.mrf.mxu0
      %v2198 = vpop.f32.mrf.mxu0
      %v2199 = vadd.f32 %v2038, %v2198
      %v2200 = vpop.f32.mrf.mxu0
      %2201 = vmatprep.mubr.bf16.mxu0 %v974
      %2202 = vmatmul.mubr.bf16.gmra.mxu0 %v973
      %v2203 = vpop.f32.mrf.mxu0
      %v2204 = vadd.f32 %v2043, %v2203
      %v2205 = vpop.f32.mrf.mxu0
      %v2206 = vpop.f32.mrf.mxu0
      %v2207 = vadd.f32 %v2046, %v2206
      %v2208 = vpop.f32.mrf.mxu0
      %2209 = vmatprep.mubr.bf16.mxu0 %v983
      %2210 = vmatmul.mubr.bf16.gmra.mxu0 %v982
      %v2211 = vpop.f32.mrf.mxu0
      %v2212 = vadd.f32 %v2051, %v2211
      %v2213 = vpop.f32.mrf.mxu0
      %v2214 = vpop.f32.mrf.mxu0
      %v2215 = vadd.f32 %v2054, %v2214
      %v2216 = vpop.f32.mrf.mxu0
      %2217 = vmatprep.mubr.bf16.mxu0 %v992
      %2218 = vmatmul.mubr.bf16.gmra.mxu0 %v991
      %v2219 = vpop.f32.mrf.mxu0
      %v2220 = vadd.f32 %v2059, %v2219
      %v2221 = vpop.f32.mrf.mxu0
      %v2222 = vpop.f32.mrf.mxu0
      %v2223 = vadd.f32 %v2062, %v2222
      %v2224 = vpop.f32.mrf.mxu0
      %2225 = vmatprep.mubr.bf16.mxu0 %v1001
      %2226 = vmatmul.mubr.bf16.gmra.mxu0 %v1000
      %v2227 = vpop.f32.mrf.mxu0
      %v2228 = vadd.f32 %v2067, %v2227
      %v2229 = vpop.f32.mrf.mxu0
      %v2230 = vpop.f32.mrf.mxu0
      %v2231 = vadd.f32 %v2070, %v2230
      %v2232 = vpop.f32.mrf.mxu0
      %2233 = vmatprep.mubr.bf16.mxu0 %v1010
      %2234 = vmatmul.mubr.bf16.gmra.mxu0 %v1009
      %v2235 = vpop.f32.mrf.mxu0
      %v2236 = vadd.f32 %v2075, %v2235
      %v2237 = vpop.f32.mrf.mxu0
      %v2238 = vpop.f32.mrf.mxu0
      %v2239 = vadd.f32 %v2078, %v2238
      %v2240 = vpop.f32.mrf.mxu0
      %2241 = vmatprep.mubr.bf16.mxu0 %v1019
      %2242 = vmatmul.mubr.bf16.gmra.mxu0 %v1018
      %v2243 = vpop.f32.mrf.mxu0
      %v2244 = vadd.f32 %v2083, %v2243
      %v2245 = vpop.f32.mrf.mxu0
      %v2246 = vpop.f32.mrf.mxu0
      %v2247 = vadd.f32 %v2086, %v2246
      %v2248 = vpop.f32.mrf.mxu0
      %2249 = vmatprep.mubr.bf16.mxu0 %v1028
      %2250 = vmatmul.mubr.bf16.gmra.mxu0 %v1027
      %v2251 = vpop.f32.mrf.mxu0
      %v2252 = vadd.f32 %v2091, %v2251
      %v2253 = vpop.f32.mrf.mxu0
      %v2254 = vpop.f32.mrf.mxu0
      %v2255 = vadd.f32 %v2094, %v2254
      %v2256 = vpop.f32.mrf.mxu0
      %2257 = vmatprep.mubr.bf16.mxu0 %v1037
      %2258 = vmatmul.mubr.bf16.gmra.mxu0 %v1036
      %v2259 = vpop.f32.mrf.mxu0
      %v2260 = vadd.f32 %v2099, %v2259
      %v2261 = vpop.f32.mrf.mxu0
      %v2262 = vpop.f32.mrf.mxu0
      %v2263 = vadd.f32 %v2102, %v2262
      %v2264 = vpop.f32.mrf.mxu0
      %2265 = vmatprep.mubr.bf16.mxu0 %v1046
      %2266 = vmatmul.mubr.bf16.gmra.mxu0 %v1045
      %v2267 = vpop.f32.mrf.mxu0
      %v2268 = vadd.f32 %v2107, %v2267
      %v2269 = vpop.f32.mrf.mxu0
      %v2270 = vpop.f32.mrf.mxu0
      %v2271 = vadd.f32 %v2110, %v2270
      %v2272 = vpop.f32.mrf.mxu0
      %2273 = vmatprep.mubr.bf16.mxu0 %v1055
      %2274 = vmatmul.mubr.bf16.gmra.mxu0 %v1054
      %v2275 = vpop.f32.mrf.mxu0
      %v2276 = vadd.f32 %v2115, %v2275
      %v2277 = vpop.f32.mrf.mxu0
      %v2278 = vpop.f32.mrf.mxu0
      %v2279 = vadd.f32 %v2118, %v2278
      %v2280 = vpop.f32.mrf.mxu0
      %2281 = vmatprep.mubr.bf16.mxu0 %v1064
      %2282 = vmatmul.mubr.bf16.gmra.mxu0 %v1063
      %v2283 = vpop.f32.mrf.mxu0
      %v2284 = vadd.f32 %v2123, %v2283
      %v2285 = vpop.f32.mrf.mxu0
      %v2286 = vpop.f32.mrf.mxu0
      %v2287 = vadd.f32 %v2126, %v2286
      %v2288 = vpop.f32.mrf.mxu0
      %2289 = vmatprep.mubr.bf16.mxu0 %v1073
      %2290 = vmatmul.mubr.bf16.gmra.mxu0 %v1072
      %v2291 = vpop.f32.mrf.mxu0
      %v2292 = vadd.f32 %v2131, %v2291
      %v2293 = vpop.f32.mrf.mxu0
      %v2294 = vpop.f32.mrf.mxu0
      %v2295 = vadd.f32 %v2134, %v2294
      %v2296 = vpop.f32.mrf.mxu0
      %2297 = vmatprep.mubr.bf16.mxu0 %v1082
      %2298 = vmatmul.mubr.bf16.gmra.mxu0 %v1081
      %v2299 = vpop.f32.mrf.mxu0
      %v2300 = vadd.f32 %v2139, %v2299
      %v2301 = vpop.f32.mrf.mxu0
      %v2302 = vpop.f32.mrf.mxu0
      %v2303 = vadd.f32 %v2142, %v2302
      %v2304 = vpop.f32.mrf.mxu0
      %2305 = vmatprep.mubr.bf16.mxu0 %v1091
      %2306 = vmatmul.mubr.bf16.gmra.mxu0 %v1090
      %v2307 = vpop.f32.mrf.mxu0
      %v2308 = vadd.f32 %v2147, %v2307
      %v2309 = vpop.f32.mrf.mxu0
      %v2310 = vpop.f32.mrf.mxu0
      %v2311 = vadd.f32 %v2150, %v2310
      %v2312 = vpop.f32.mrf.mxu0
      %2313 = vmatprep.mubr.bf16.mxu0 %v1100
      %2314 = vmatmul.mubr.bf16.gmra.mxu0 %v1099
      %v2315 = vpop.f32.mrf.mxu0
      %v2316 = vadd.f32 %v2155, %v2315
      %v2317 = vpop.f32.mrf.mxu0
      %v2318 = vpop.f32.mrf.mxu0
      %v2319 = vadd.f32 %v2158, %v2318
      %v2320 = vpop.f32.mrf.mxu0
      %2321 = vdwg.mxu0
      %2322 = vmatprep.subr.bf16.mxu0 0
      %2323 = vmatpush1.bf16.msra.mxu0 %v1605
      %2324 = vmatprep.subr.bf16.mxu0 0
      %2325 = vmatpush1.bf16.msra.mxu0 %v1604
      %2326 = vmatprep.subr.bf16.mxu0 0
      %2327 = vmatpush1.bf16.msra.mxu0 %v1603
      %2328 = vmatprep.subr.bf16.mxu0 0
      %2329 = vmatpush1.bf16.msra.mxu0 %v1602
      %2330 = vmatprep.subr.bf16.mxu0 0
      %2331 = vmatpush1.bf16.msra.mxu0 %v1601
      %2332 = vmatprep.subr.bf16.mxu0 0
      %2333 = vmatpush1.bf16.msra.mxu0 %v1600
      %2334 = vmatprep.subr.bf16.mxu0 0
      %2335 = vmatpush1.bf16.msra.mxu0 %v1599
      %2336 = vmatprep.subr.bf16.mxu0 0
      %2337 = vmatpush1.bf16.msra.mxu0 %v1598
      %2338 = vmatprep.subr.bf16.mxu0 0
      %2339 = vmatpush2.bf16.msra.mxu0 0
      %2340 = vmatprep.subr.bf16.mxu0 0
      %2341 = vmatpush2.bf16.msra.mxu0 0
      %2342 = vmatprep.subr.bf16.mxu0 0
      %2343 = vmatpush2.bf16.msra.mxu0 0
      %2344 = vmatprep.subr.bf16.mxu0 0
      %2345 = vmatpush2.bf16.msra.mxu0 0
      %2346 = vmatprep.subr.bf16.mxu0 0
      %2347 = vmatpush2.bf16.msra.mxu0 0
      %2348 = vmatprep.subr.bf16.mxu0 0
      %2349 = vmatpush2.bf16.msra.mxu0 0
      %2350 = vmatprep.subr.bf16.mxu0 0
      %2351 = vmatpush2.bf16.msra.mxu0 0
      %2352 = vmatprep.subr.bf16.mxu0 0
      %2353 = vmatpush2.bf16.msra.mxu0 0
      %2354 = vmatprep.mubr.bf16.mxu0 0
      %2355 = vmatmul.mubr.bf16.gmra.mxu0 %v966
      %v2356 = vpop.f32.mrf.mxu0
      %v2357 = vadd.f32 %v2196, %v2356
      %v2358 = vpop.f32.mrf.mxu0
      %v2359 = vpop.f32.mrf.mxu0
      %v2360 = vadd.f32 %v2199, %v2359
      %v2361 = vpop.f32.mrf.mxu0
      %2362 = vmatprep.mubr.bf16.mxu0 0
      %2363 = vmatmul.mubr.bf16.gmra.mxu0 %v975
      %v2364 = vpop.f32.mrf.mxu0
      %v2365 = vadd.f32 %v2204, %v2364
      %v2366 = vpop.f32.mrf.mxu0
      %v2367 = vpop.f32.mrf.mxu0
      %v2368 = vadd.f32 %v2207, %v2367
      %v2369 = vpop.f32.mrf.mxu0
      %2370 = vmatprep.mubr.bf16.mxu0 0
      %2371 = vmatmul.mubr.bf16.gmra.mxu0 %v984
      %v2372 = vpop.f32.mrf.mxu0
      %v2373 = vadd.f32 %v2212, %v2372
      %v2374 = vpop.f32.mrf.mxu0
      %v2375 = vpop.f32.mrf.mxu0
      %v2376 = vadd.f32 %v2215, %v2375
      %v2377 = vpop.f32.mrf.mxu0
      %2378 = vmatprep.mubr.bf16.mxu0 0
      %2379 = vmatmul.mubr.bf16.gmra.mxu0 %v993
      %v2380 = vpop.f32.mrf.mxu0
      %v2381 = vadd.f32 %v2220, %v2380
      %v2382 = vpop.f32.mrf.mxu0
      %v2383 = vpop.f32.mrf.mxu0
      %v2384 = vadd.f32 %v2223, %v2383
      %v2385 = vpop.f32.mrf.mxu0
      %2386 = vmatprep.mubr.bf16.mxu0 0
      %2387 = vmatmul.mubr.bf16.gmra.mxu0 %v1002
      %v2388 = vpop.f32.mrf.mxu0
      %v2389 = vadd.f32 %v2228, %v2388
      %v2390 = vpop.f32.mrf.mxu0
      %v2391 = vpop.f32.mrf.mxu0
      %v2392 = vadd.f32 %v2231, %v2391
      %v2393 = vpop.f32.mrf.mxu0
      %2394 = vmatprep.mubr.bf16.mxu0 0
      %2395 = vmatmul.mubr.bf16.gmra.mxu0 %v1011
      %v2396 = vpop.f32.mrf.mxu0
      %v2397 = vadd.f32 %v2236, %v2396
      %v2398 = vpop.f32.mrf.mxu0
      %v2399 = vpop.f32.mrf.mxu0
      %v2400 = vadd.f32 %v2239, %v2399
      %v2401 = vpop.f32.mrf.mxu0
      %2402 = vmatprep.mubr.bf16.mxu0 0
      %2403 = vmatmul.mubr.bf16.gmra.mxu0 %v1020
      %v2404 = vpop.f32.mrf.mxu0
      %v2405 = vadd.f32 %v2244, %v2404
      %v2406 = vpop.f32.mrf.mxu0
      %v2407 = vpop.f32.mrf.mxu0
      %v2408 = vadd.f32 %v2247, %v2407
      %v2409 = vpop.f32.mrf.mxu0
      %2410 = vmatprep.mubr.bf16.mxu0 0
      %2411 = vmatmul.mubr.bf16.gmra.mxu0 %v1029
      %v2412 = vpop.f32.mrf.mxu0
      %v2413 = vadd.f32 %v2252, %v2412
      %v2414 = vpop.f32.mrf.mxu0
      %v2415 = vpop.f32.mrf.mxu0
      %v2416 = vadd.f32 %v2255, %v2415
      %v2417 = vpop.f32.mrf.mxu0
      %2418 = vmatprep.mubr.bf16.mxu0 0
      %2419 = vmatmul.mubr.bf16.gmra.mxu0 %v1038
      %v2420 = vpop.f32.mrf.mxu0
      %v2421 = vadd.f32 %v2260, %v2420
      %v2422 = vpop.f32.mrf.mxu0
      %v2423 = vpop.f32.mrf.mxu0
      %v2424 = vadd.f32 %v2263, %v2423
      %v2425 = vpop.f32.mrf.mxu0
      %2426 = vmatprep.mubr.bf16.mxu0 0
      %2427 = vmatmul.mubr.bf16.gmra.mxu0 %v1047
      %v2428 = vpop.f32.mrf.mxu0
      %v2429 = vadd.f32 %v2268, %v2428
      %v2430 = vpop.f32.mrf.mxu0
      %v2431 = vpop.f32.mrf.mxu0
      %v2432 = vadd.f32 %v2271, %v2431
      %v2433 = vpop.f32.mrf.mxu0
      %2434 = vmatprep.mubr.bf16.mxu0 0
      %2435 = vmatmul.mubr.bf16.gmra.mxu0 %v1056
      %v2436 = vpop.f32.mrf.mxu0
      %v2437 = vadd.f32 %v2276, %v2436
      %v2438 = vpop.f32.mrf.mxu0
      %v2439 = vpop.f32.mrf.mxu0
      %v2440 = vadd.f32 %v2279, %v2439
      %v2441 = vpop.f32.mrf.mxu0
      %2442 = vmatprep.mubr.bf16.mxu0 0
      %2443 = vmatmul.mubr.bf16.gmra.mxu0 %v1065
      %v2444 = vpop.f32.mrf.mxu0
      %v2445 = vadd.f32 %v2284, %v2444
      %v2446 = vpop.f32.mrf.mxu0
      %v2447 = vpop.f32.mrf.mxu0
      %v2448 = vadd.f32 %v2287, %v2447
      %v2449 = vpop.f32.mrf.mxu0
      %2450 = vmatprep.mubr.bf16.mxu0 0
      %2451 = vmatmul.mubr.bf16.gmra.mxu0 %v1074
      %v2452 = vpop.f32.mrf.mxu0
      %v2453 = vadd.f32 %v2292, %v2452
      %v2454 = vpop.f32.mrf.mxu0
      %v2455 = vpop.f32.mrf.mxu0
      %v2456 = vadd.f32 %v2295, %v2455
      %v2457 = vpop.f32.mrf.mxu0
      %2458 = vmatprep.mubr.bf16.mxu0 0
      %2459 = vmatmul.mubr.bf16.gmra.mxu0 %v1083
      %v2460 = vpop.f32.mrf.mxu0
      %v2461 = vadd.f32 %v2300, %v2460
      %v2462 = vpop.f32.mrf.mxu0
      %v2463 = vpop.f32.mrf.mxu0
      %v2464 = vadd.f32 %v2303, %v2463
      %v2465 = vpop.f32.mrf.mxu0
      %2466 = vmatprep.mubr.bf16.mxu0 0
      %2467 = vmatmul.mubr.bf16.gmra.mxu0 %v1092
      %v2468 = vpop.f32.mrf.mxu0
      %v2469 = vadd.f32 %v2308, %v2468
      %v2470 = vpop.f32.mrf.mxu0
      %v2471 = vpop.f32.mrf.mxu0
      %v2472 = vadd.f32 %v2311, %v2471
      %v2473 = vpop.f32.mrf.mxu0
      %2474 = vmatprep.mubr.bf16.mxu0 0
      %2475 = vmatmul.mubr.bf16.gmra.mxu0 %v1101
      %v2476 = vpop.f32.mrf.mxu0
      %v2477 = vadd.f32 %v2316, %v2476
      %v2478 = vpop.f32.mrf.mxu0
      %v2479 = vpop.f32.mrf.mxu0
      %v2480 = vadd.f32 %v2319, %v2479
      %v2481 = vpop.f32.mrf.mxu0
      %2482 = vdwg.mxu0
      %v2483 = vpack.c.bf16 %v2360, %v2357
      %v2484 = vpack.c.bf16 %v2368, %v2365
      %v2485 = vpack.c.bf16 %v2376, %v2373
      %v2486 = vpack.c.bf16 %v2384, %v2381
      %v2487 = vpack.c.bf16 %v2392, %v2389
      %v2488 = vpack.c.bf16 %v2400, %v2397
      %v2489 = vpack.c.bf16 %v2408, %v2405
      %v2490 = vpack.c.bf16 %v2416, %v2413
      %v2491 = vpack.c.bf16 %v2424, %v2421
      %v2492 = vpack.c.bf16 %v2432, %v2429
      %v2493 = vpack.c.bf16 %v2440, %v2437
      %v2494 = vpack.c.bf16 %v2448, %v2445
      %v2495 = vpack.c.bf16 %v2456, %v2453
      %v2496 = vpack.c.bf16 %v2464, %v2461
      %v2497 = vpack.c.bf16 %v2472, %v2469
      %v2498 = vpack.c.bf16 %v2480, %v2477
      %v2515 = vunpack.c.l.b16 %v2483
      %v2516 = vunpack.c.h.b16 %v2483
      %v2517 = vunpack.c.l.b16 %v2484
      %v2518 = vunpack.c.h.b16 %v2484
      %v2519 = vunpack.c.l.b16 %v2485
      %v2520 = vunpack.c.h.b16 %v2485
      %v2521 = vunpack.c.l.b16 %v2486
      %v2522 = vunpack.c.h.b16 %v2486
      %v2523 = vunpack.c.l.b16 %v2487
      %v2524 = vunpack.c.h.b16 %v2487
      %v2525 = vunpack.c.l.b16 %v2488
      %v2526 = vunpack.c.h.b16 %v2488
      %v2527 = vunpack.c.l.b16 %v2489
      %v2528 = vunpack.c.h.b16 %v2489
      %v2529 = vunpack.c.l.b16 %v2490
      %v2530 = vunpack.c.h.b16 %v2490
      %v2531 = vunpack.c.l.b16 %v2491
      %v2532 = vunpack.c.h.b16 %v2491
      %v2533 = vunpack.c.l.b16 %v2492
      %v2534 = vunpack.c.h.b16 %v2492
      %v2535 = vunpack.c.l.b16 %v2493
      %v2536 = vunpack.c.h.b16 %v2493
      %v2537 = vunpack.c.l.b16 %v2494
      %v2538 = vunpack.c.h.b16 %v2494
      %v2539 = vunpack.c.l.b16 %v2495
      %v2540 = vunpack.c.h.b16 %v2495
      %v2541 = vunpack.c.l.b16 %v2496
      %v2542 = vunpack.c.h.b16 %v2496
      %v2543 = vunpack.c.l.b16 %v2497
      %v2544 = vunpack.c.h.b16 %v2497
      %v2545 = vunpack.c.l.b16 %v2498
      %v2546 = vunpack.c.h.b16 %v2498
      %v2547 = vpack.c.b16 %v2515, %v2515
      %v2548 = vpack.c.b16 %v2516, %v2516
      %v2549 = vpack.c.b16 %v2517, %v2517
      %v2550 = vpack.c.b16 %v2518, %v2518
      %v2551 = vpack.c.b16 %v2519, %v2519
      %v2552 = vpack.c.b16 %v2520, %v2520
      %v2553 = vpack.c.b16 %v2521, %v2521
      %v2554 = vpack.c.b16 %v2522, %v2522
      %v2555 = vpack.c.b16 %v2523, %v2523
      %v2556 = vpack.c.b16 %v2524, %v2524
      %v2557 = vpack.c.b16 %v2525, %v2525
      %v2558 = vpack.c.b16 %v2526, %v2526
      %v2559 = vpack.c.b16 %v2527, %v2527
      %v2560 = vpack.c.b16 %v2528, %v2528
      %v2561 = vpack.c.b16 %v2529, %v2529
      %v2562 = vpack.c.b16 %v2530, %v2530
      %v2563 = vpack.c.b16 %v2531, %v2531
      %v2564 = vpack.c.b16 %v2532, %v2532
      %v2565 = vpack.c.b16 %v2533, %v2533
      %v2566 = vpack.c.b16 %v2534, %v2534
      %v2567 = vpack.c.b16 %v2535, %v2535
      %v2568 = vpack.c.b16 %v2536, %v2536
      %v2569 = vpack.c.b16 %v2537, %v2537
      %v2570 = vpack.c.b16 %v2538, %v2538
      %v2571 = vpack.c.b16 %v2539, %v2539
      %v2572 = vpack.c.b16 %v2540, %v2540
      %v2573 = vpack.c.b16 %v2541, %v2541
      %v2574 = vpack.c.b16 %v2542, %v2542
      %v2575 = vpack.c.b16 %v2543, %v2543
      %v2576 = vpack.c.b16 %v2544, %v2544
      %v2577 = vpack.c.b16 %v2545, %v2545
      %v2578 = vpack.c.b16 %v2546, %v2546
      %2611 = vst [vmem:[%s197] sm:$0xf] %v2547
      %2612 = vst [vmem:[%s197 + $0x4] sm:$0xf] %v2548
      %2613 = vst [vmem:[%s197 + $0x8] sm:$0xf] %v2549
      %2614 = vst [vmem:[%s197 + $0xc] sm:$0xf] %v2550
      %2615 = vst [vmem:[%s197 + $0x10] sm:$0xf] %v2551
      %2616 = vst [vmem:[%s197 + $0x14] sm:$0xf] %v2552
      %2617 = vst [vmem:[%s197 + $0x18] sm:$0xf] %v2553
      %2618 = vst [vmem:[%s197 + $0x1c] sm:$0xf] %v2554
      %2619 = vst [vmem:[%s197 + $0x20] sm:$0xf] %v2555
      %2620 = vst [vmem:[%s197 + $0x24] sm:$0xf] %v2556
      %2621 = vst [vmem:[%s197 + $0x28] sm:$0xf] %v2557
      %2622 = vst [vmem:[%s197 + $0x2c] sm:$0xf] %v2558
      %2623 = vst [vmem:[%s197 + $0x30] sm:$0xf] %v2559
      %2624 = vst [vmem:[%s197 + $0x34] sm:$0xf] %v2560
      %2625 = vst [vmem:[%s197 + $0x38] sm:$0xf] %v2561
      %2626 = vst [vmem:[%s197 + $0x3c] sm:$0xf] %v2562
      %2627 = vst [vmem:[%s197 + $0x40] sm:$0xf] %v2563
      %2628 = vst [vmem:[%s197 + $0x44] sm:$0xf] %v2564
      %2629 = vst [vmem:[%s197 + $0x48] sm:$0xf] %v2565
      %2630 = vst [vmem:[%s197 + $0x4c] sm:$0xf] %v2566
      %2631 = vst [vmem:[%s197 + $0x50] sm:$0xf] %v2567
      %2632 = vst [vmem:[%s197 + $0x54] sm:$0xf] %v2568
      %2633 = vst [vmem:[%s197 + $0x58] sm:$0xf] %v2569
      %2634 = vst [vmem:[%s197 + $0x5c] sm:$0xf] %v2570
      %2635 = vst [vmem:[%s197 + $0x60] sm:$0xf] %v2571
      %2636 = vst [vmem:[%s197 + $0x64] sm:$0xf] %v2572
      %2637 = vst [vmem:[%s197 + $0x68] sm:$0xf] %v2573
      %2638 = vst [vmem:[%s197 + $0x6c] sm:$0xf] %v2574
      %2639 = vst [vmem:[%s197 + $0x70] sm:$0xf] %v2575
      %2640 = vst [vmem:[%s197 + $0x74] sm:$0xf] %v2576
      %2641 = vst [vmem:[%s197 + $0x78] sm:$0xf] %v2577
      %2642 = vst [vmem:[%s197 + $0x7c] sm:$0xf] %v2578
      %v2643 = vld [vmem:[%s3] sm:$0x1]
      %v2644 = vadd.f32 %v2357, %v2360
      %v2645 = vadd.f32 %v2644, %v2365
      %v2646 = vadd.f32 %v2645, %v2368
      %v2647 = vadd.f32 %v2646, %v2373
      %v2648 = vadd.f32 %v2647, %v2376
      %v2649 = vadd.f32 %v2648, %v2381
      %v2650 = vadd.f32 %v2649, %v2384
      %v2651 = vadd.f32 %v2650, %v2389
      %v2652 = vadd.f32 %v2651, %v2392
      %v2653 = vadd.f32 %v2652, %v2397
      %v2654 = vadd.f32 %v2653, %v2400
      %v2655 = vadd.f32 %v2654, %v2405
      %v2656 = vadd.f32 %v2655, %v2408
      %v2657 = vadd.f32 %v2656, %v2413
      %v2658 = vadd.f32 %v2657, %v2416
      %v2659 = vadd.f32 %v2658, %v2421
      %v2660 = vadd.f32 %v2659, %v2424
      %v2661 = vadd.f32 %v2660, %v2429
      %v2662 = vadd.f32 %v2661, %v2432
      %v2663 = vadd.f32 %v2662, %v2437
      %v2664 = vadd.f32 %v2663, %v2440
      %v2665 = vadd.f32 %v2664, %v2445
      %v2666 = vadd.f32 %v2665, %v2448
      %v2667 = vadd.f32 %v2666, %v2453
      %v2668 = vadd.f32 %v2667, %v2456
      %v2669 = vadd.f32 %v2668, %v2461
      %v2670 = vadd.f32 %v2669, %v2464
      %v2671 = vadd.f32 %v2670, %v2469
      %v2672 = vadd.f32 %v2671, %v2472
      %v2673 = vadd.f32 %v2672, %v2477
      %v2674 = vadd.f32 %v2673, %v2480
      %v2675 = vrot.slane %v2674, 4
      %v2676 = vadd.f32 %v2674, %v2675
      %v2677 = vrot.slane %v2676, 2
      %v2678 = vadd.f32 %v2676, %v2677
      %v2679 = vrot.slane %v2678, 1
      %v2680 = vadd.f32 %v2678, %v2679
      %v2681 = vadd.f32 %v2643, %v2680
      %2682 = vst [vmem:[%s3] sm:$0x1] %v2681
      %v2683 = vld [vmem:[%s4] sm:$0x1]
      %v2684 = vmul.f32 %v2357, %v2357
      %v2685 = vmul.f32 %v2360, %v2360
      %v2686 = vmul.f32 %v2365, %v2365
      %v2687 = vmul.f32 %v2368, %v2368
      %v2688 = vmul.f32 %v2373, %v2373
      %v2689 = vmul.f32 %v2376, %v2376
      %v2690 = vmul.f32 %v2381, %v2381
      %v2691 = vmul.f32 %v2384, %v2384
      %v2692 = vmul.f32 %v2389, %v2389
      %v2693 = vmul.f32 %v2392, %v2392
      %v2694 = vmul.f32 %v2397, %v2397
      %v2695 = vmul.f32 %v2400, %v2400
      %v2696 = vmul.f32 %v2405, %v2405
      %v2697 = vmul.f32 %v2408, %v2408
      %v2698 = vmul.f32 %v2413, %v2413
      %v2699 = vmul.f32 %v2416, %v2416
      %v2700 = vmul.f32 %v2421, %v2421
      %v2701 = vmul.f32 %v2424, %v2424
      %v2702 = vmul.f32 %v2429, %v2429
      %v2703 = vmul.f32 %v2432, %v2432
      %v2704 = vmul.f32 %v2437, %v2437
      %v2705 = vmul.f32 %v2440, %v2440
      %v2706 = vmul.f32 %v2445, %v2445
      %v2707 = vmul.f32 %v2448, %v2448
      %v2708 = vmul.f32 %v2453, %v2453
      %v2709 = vmul.f32 %v2456, %v2456
      %v2710 = vmul.f32 %v2461, %v2461
      %v2711 = vmul.f32 %v2464, %v2464
      %v2712 = vmul.f32 %v2469, %v2469
      %v2713 = vmul.f32 %v2472, %v2472
      %v2714 = vmul.f32 %v2477, %v2477
      %v2715 = vmul.f32 %v2480, %v2480
      %v2716 = vadd.f32 %v2684, %v2685
      %v2717 = vadd.f32 %v2716, %v2686
      %v2718 = vadd.f32 %v2717, %v2687
      %v2719 = vadd.f32 %v2718, %v2688
      %v2720 = vadd.f32 %v2719, %v2689
      %v2721 = vadd.f32 %v2720, %v2690
      %v2722 = vadd.f32 %v2721, %v2691
      %v2723 = vadd.f32 %v2722, %v2692
      %v2724 = vadd.f32 %v2723, %v2693
      %v2725 = vadd.f32 %v2724, %v2694
      %v2726 = vadd.f32 %v2725, %v2695
      %v2727 = vadd.f32 %v2726, %v2696
      %v2728 = vadd.f32 %v2727, %v2697
      %v2729 = vadd.f32 %v2728, %v2698
      %v2730 = vadd.f32 %v2729, %v2699
      %v2731 = vadd.f32 %v2730, %v2700
      %v2732 = vadd.f32 %v2731, %v2701
      %v2733 = vadd.f32 %v2732, %v2702
      %v2734 = vadd.f32 %v2733, %v2703
      %v2735 = vadd.f32 %v2734, %v2704
      %v2736 = vadd.f32 %v2735, %v2705
      %v2737 = vadd.f32 %v2736, %v2706
      %v2738 = vadd.f32 %v2737, %v2707
      %v2739 = vadd.f32 %v2738, %v2708
      %v2740 = vadd.f32 %v2739, %v2709
      %v2741 = vadd.f32 %v2740, %v2710
      %v2742 = vadd.f32 %v2741, %v2711
      %v2743 = vadd.f32 %v2742, %v2712
      %v2744 = vadd.f32 %v2743, %v2713
      %v2745 = vadd.f32 %v2744, %v2714
      %v2746 = vadd.f32 %v2745, %v2715
      %v2747 = vrot.slane %v2746, 4
      %v2748 = vadd.f32 %v2746, %v2747
      %v2749 = vrot.slane %v2748, 2
      %v2750 = vadd.f32 %v2748, %v2749
      %v2751 = vrot.slane %v2750, 1
      %v2752 = vadd.f32 %v2750, %v2751
      %v2753 = vadd.f32 %v2683, %v2752
      %2754 = vst [vmem:[%s4] sm:$0x1] %v2753
      %s2755 = smul.u32 32, %s16
      %p2756 = scmp.lt.s32.totalorder %s2755, 63
      %s2757 = scalar_select %p2756, %s2755, 63
      %s2758 = smul.addr %s2757, 4
      %s2759 = scalar_lea.vmem %s2, %s2758
      // Predicated region
      $region33: #{basic_block_forward.6} parent=27 // pred_check
        %p2760 = pneg %p81
      $region34: #{basic_block_forward.6} parent=27 // pred_check_branch
        %2762 = sbr.rel (%p2760) target = $region36
      $region35: #{basic_block_forward.6} parent=27 // pred_region
        %s2763 = smul.u32 32, %s16
      $region36: #{basic_block_forward.6} parent=27 // pred_fallthru
        _
      // Predicated region
      $region37: #{basic_block_forward.6} parent=27 // pred_check
        %p2764 = pneg %p102
      $region38: #{basic_block_forward.6} parent=27 // pred_check_branch
        %2766 = sbr.rel (%p2764) target = $region40
      $region39: #{basic_block_forward.6} parent=27 // pred_region
        _
      $region40: #{basic_block_forward.6} parent=27 // pred_fallthru
        _
      // Predicated region
      $region41: #{basic_block_forward.6} parent=27 // pred_check
        %p2767 = pneg %p123
      $region42: #{basic_block_forward.6} parent=27 // pred_check_branch
        %2769 = sbr.rel (%p2767) target = $region44
      $region43: #{basic_block_forward.6} parent=27 // pred_region
        _
      $region44: #{basic_block_forward.6} parent=27 // pred_fallthru
        _
      // Predicated region
      $region45: #{basic_block_forward.6} parent=27 // pred_check
        %p2770 = pneg %p102
      $region46: #{basic_block_forward.6} parent=27 // pred_check_branch
        %2772 = sbr.rel (%p2770) target = $region48
      $region47: #{basic_block_forward.6} parent=27 // pred_region
        _
      $region48: #{basic_block_forward.6} parent=27 // pred_fallthru
        _
      // Predicated region
      $region49: #{basic_block_forward.6} parent=27 // pred_check
        %p2773 = pneg %p123
      $region50: #{basic_block_forward.6} parent=27 // pred_check_branch
        %2775 = sbr.rel (%p2773) target = $region52
      $region51: #{basic_block_forward.6} parent=27 // pred_region
        _
      $region52: #{basic_block_forward.6} parent=27 // pred_fallthru
        _
    $region28: #{basic_block_forward.6} parent=5 // pred_fallthru
      _
    %p2776 = scmp.le.s32.totalorder 2, %s11
    // Predicated region
    $region53: #{basic_block_forward.6} parent=5 // pred_check
      %p2777 = pneg %p2776
    $region54: #{basic_block_forward.6} parent=5 // pred_check_branch
      %2779 = sbr.rel (%p2777) target = $region56
    $region55: #{basic_block_forward.6} parent=5 // pred_region
      %s2780 = ssub.s32 %s11, 2
      // Predicated region
      $region57: #{basic_block_forward.6} parent=55 // pred_check
        %p2781 = pneg %p87
      $region58: #{basic_block_forward.6} parent=55 // pred_check_branch
        %2783 = sbr.rel (%p2781) target = $region60
      $region59: #{basic_block_forward.6} parent=55 // pred_region
        %s2784 = smul.u32 32, %s17
        %p2785 = scmp.lt.s32.totalorder %s2784, 63
        %s2786 = scalar_select %p2785, %s2784, 63
        %s2787 = smul.addr %s2786, 4
        %s2788 = scalar_lea.vmem %s2, %s2787
      $region60: #{basic_block_forward.6} parent=55 // pred_fallthru
        _
    $region56: #{basic_block_forward.6} parent=5 // pred_fallthru
      _
  $region6: #{basic_block_forward.6} parent=0 // loop_footer
    %s15 = sadd.s32 1, %s11
  $region7: #{basic_block_forward.6} parent=0 // loop_footer_branch
    %10 = sbr.rel target = $region3
  $region8: #{basic_block_forward.6} parent=0 // loop_exit
    _

</llo_original>
